<compile_context>
chip_gen: v7x
topology: tpu7x:2x2x1
jax: 0.10.0
libtpu: 0.0.40
codegen_flags: <defaults>
</compile_context>

<pallas_src>
import numpy as np
import jax
import jax.numpy as jnp
from jax.experimental import pallas as pl
from jax.experimental.pallas import tpu as pltpu

BN_EPS = 1e-5
HEAD_TK = 512  # K-tile of the fused head's 3136-long reduction axis


# ----------------------------------------------------------------------------
# Pallas kernels
# ----------------------------------------------------------------------------
def _conv_bn_relu_kernel(p_ref, w_ref, scale_ref, shift_ref, o_ref):
    """o = relu((W @ patches) * scale + shift).

    p_ref:     (K, tile_m)    bf16 im2col patches (lane axis = output pixels)
    w_ref:     (Cout, K)      bf16 flattened OIHW conv weight (pre-packed)
    scale_ref: (Cout, 1)      f32  folded BN scale (incl. optional input scale)
    shift_ref: (Cout, 1)      f32  folded BN shift (incl. conv bias)
    o_ref:     (Cout, tile_m) bf16 lane-dense output
    """
    acc = jnp.dot(w_ref[...], p_ref[...], preferred_element_type=jnp.float32)
    acc = acc * scale_ref[...] + shift_ref[...]
    o_ref[...] = jnp.maximum(acc, 0.0).astype(o_ref.dtype)


def conv_bn_relu_matmul(patches, wmat, scale, shift, *, tile_m=512):
    K, M = patches.shape
    cout = wmat.shape[0]
    # conv1 (M=800) -> tile 512, grid=(2,) "parallel" (megacore-shardable on
    # v7x).  conv2/conv3 (M=162/98) stay single-block: per-step overhead
    # (~0.35 us) would exceed their compute.  For larger batches, raise tile_m
    # (1 MB/buffer per 256x2048 bf16 block; add vmem_limit_bytes if you do).
    tile = tile_m if M > tile_m else M
    grid = (pl.cdiv(M, tile),)
    return pl.pallas_call(
        _conv_bn_relu_kernel,
        out_shape=jax.ShapeDtypeStruct((cout, M), jnp.bfloat16),
        grid=grid,
        in_specs=[
            pl.BlockSpec((K, tile), lambda m: (0, m)),
            pl.BlockSpec((cout, K), lambda m: (0, 0)),
            pl.BlockSpec((cout, 1), lambda m: (0, 0)),
            pl.BlockSpec((cout, 1), lambda m: (0, 0)),
        ],
        out_specs=pl.BlockSpec((cout, tile), lambda m: (0, m)),
        compiler_params=pltpu.CompilerParams(
            dimension_semantics=("parallel",)),
    )(patches, wmat, scale, shift)


def _dueling_head_kernel(f_ref, w1_ref, b1_ref, w2_ref, b2_ref, q_ref, h_acc):
    """Fused value/advantage streams + dueling combine, K-tiled over fc1's
    reduction axis.

    f_ref:  (B, TK)          bf16 block of flattened conv features (zero-padded)
    w1_ref: (TK, 1024)       bf16 block of [value_fc1 | advantage_fc1] (zero-padded rows)
    b1_ref: (1, 1024)        f32
    w2_ref: (1024, 1+n_out)  bf16 block-diagonal [vw2 0 ; 0 aw2]
    b2_ref: (1, 1+n_out)     f32
    q_ref:  (B, n_out)       f32  Q = V + (A - A.mean())
    h_acc:  (B, 1024)        f32  VMEM accumulator, persists across grid steps
    """
    k = pl.program_id(0)

    @pl.when(k == 0)
    def _():
        h_acc[...] = jnp.zeros_like(h_acc)

    h_acc[...] += jnp.dot(f_ref[...], w1_ref[...],
                          preferred_element_type=jnp.float32)

    @pl.when(k == pl.num_programs(0) - 1)
    def _():
        h = jnp.maximum(h_acc[...] + b1_ref[...], 0.0)
        out = jnp.dot(h.astype(jnp.bfloat16), w2_ref[...],
                      preferred_element_type=jnp.float32) + b2_ref[...]
        v = out[:, :1]          # column 0   -> V
        a = out[:, 1:]          # columns 1.. -> A
        # torch: Q = V + (A - A.mean())  -- GLOBAL mean over all elements of A.
        q_ref[...] = v + (a - jnp.mean(a))


def dueling_head(f, w1, b1, w2, b2, *, tile_k=HEAD_TK):
    B, K1p = f.shape            # K1p = 3584 (3136 padded to a multiple of 512)
    H = w1.shape[1]             # 1024
    n_out = w2.shape[1] - 1
    grid = (K1p // tile_k,)     # exact: padding guarantees divisibility
    return pl.pallas_call(
        _dueling_head_kernel,
        out_shape=jax.ShapeDtypeStruct((B, n_out), jnp.float32),
        grid=grid,
        in_specs=[
            pl.BlockSpec((B, tile_k), lambda k: (0, k)),
            pl.BlockSpec((tile_k, H), lambda k: (k, 0)),
            pl.BlockSpec((1, H), lambda k: (0, 0)),
            pl.BlockSpec((H, 1 + n_out), lambda k: (0, 0)),
            pl.BlockSpec((1, 1 + n_out), lambda k: (0, 0)),
        ],
        out_specs=pl.BlockSpec((B, n_out), lambda k: (0, 0)),
        scratch_shapes=[pltpu.VMEM((B, H), jnp.float32)],
        compiler_params=pltpu.CompilerParams(
            dimension_semantics=("arbitrary",),   # reduction axis
            # Resident blocks: 2x(1 MB w1 + small f/b1/w2/b2) + 8 KB scratch
            # ~ 2.2 MB.  8 MiB gives >3x headroom while staying far below the
            # old 32 MiB reservation (important on v7x's 64 MiB VMEM).
            vmem_limit_bytes=8 * 1024 * 1024),
    )(f, w1, b1, w2, b2)


# ----------------------------------------------------------------------------
# JAX glue: channel-major im2col, layer wrappers
# ----------------------------------------------------------------------------
def im2col_cm(x_cbhw, k, s):
    """(C,B,H,W) -> patches (C*k*k, B*oh*ow); K ordered (C, kh, kw). No transposes."""
    C, B, H, W = x_cbhw.shape
    oh = (H - k) // s + 1
    ow = (W - k) // s + 1
    cols = []
    for i in range(k):
        for j in range(k):
            cols.append(x_cbhw[:, :, i:i + s * oh:s, j:j + s * ow:s])  # (C,B,oh,ow)
    p = jnp.stack(cols, axis=1)                    # (C, k*k, B, oh, ow)
    return p.reshape(C * k * k, B * oh * ow), oh, ow


def conv_bn_relu(x_cbhw, wmat, scale, shift, *, k, stride):
    """Conv2d (VALID) + BatchNorm(eval) + ReLU with pre-packed weights."""
    B = x_cbhw.shape[1]
    patches, oh, ow = im2col_cm(x_cbhw, k, stride)
    cout = wmat.shape[0]
    y = conv_bn_relu_matmul(patches, wmat, scale, shift)
    return y.reshape(cout, B, oh, ow)              # stay channel-major


# ----------------------------------------------------------------------------
# One-time weight packing (OUTSIDE the jitted forward)
# ----------------------------------------------------------------------------
def prepare_params(p):
    """Fold BN, reshape/cast conv weights, concat fc1, block-diag fc2. Run once."""
    def fold_conv(w, b, g, be, rm, rv, in_scale=1.0):
        cout, cin, kk, _ = w.shape
        wmat = w.reshape(cout, cin * kk * kk).astype(jnp.bfloat16)
        bn_scale = g / jnp.sqrt(rv + BN_EPS)
        # ((x*s)@W + b - rm)*bn + beta == (x@W)*(bn*s) + (b-rm)*bn + beta
        scale = (bn_scale * in_scale).reshape(cout, 1).astype(jnp.float32)
        shift = ((b - rm) * bn_scale + be).reshape(cout, 1).astype(jnp.float32)
        return wmat, scale, shift

    pk = {}
    pk["c1_w"], pk["c1_scale"], pk["c1_shift"] = fold_conv(
        p["cw1"], p["cb1"], p["g1"], p["be1"], p["rm1"], p["rv1"], 1.0 / 255.0)
    pk["c2_w"], pk["c2_scale"], pk["c2_shift"] = fold_conv(
        p["cw2"], p["cb2"], p["g2"], p["be2"], p["rm2"], p["rv2"])
    pk["c3_w"], pk["c3_scale"], pk["c3_shift"] = fold_conv(
        p["cw3"], p["cb3"], p["g3"], p["be3"], p["rm3"], p["rv3"])

    hdim, K1 = p["vw1"].shape                                  # 512, 3136
    n_out = p["aw2"].shape[0]
    K1p = ((K1 + HEAD_TK - 1) // HEAD_TK) * HEAD_TK            # 3584
    w1 = jnp.concatenate([p["vw1"], p["aw1"]], axis=0).T       # (3136, 1024)
    w1 = jnp.pad(w1, ((0, K1p - K1), (0, 0)))                  # zero rows: safe K-pad
    pk["fc_w1"] = w1.astype(jnp.bfloat16)
    pk["fc_b1"] = jnp.concatenate([p["vb1"], p["ab1"]]).reshape(1, -1).astype(jnp.float32)
    w2 = jnp.zeros((2 * hdim, 1 + n_out), jnp.float32)
    w2 = w2.at[:hdim, 0].set(p["vw2"][0])
    w2 = w2.at[hdim:, 1:].set(p["aw2"].T)
    pk["fc_w2"] = w2.astype(jnp.bfloat16)
    pk["fc_b2"] = jnp.concatenate([p["vb2"], p["ab2"]]).reshape(1, -1).astype(jnp.float32)
    return pk


# ----------------------------------------------------------------------------
# Forward pass (jitted): activations only, no weight repacking
# ----------------------------------------------------------------------------
def model_forward(x_nchw, pk):
    # Single tiny transpose to channel-major; x/255 is folded into conv1 scale.
    x = jnp.transpose(x_nchw, (1, 0, 2, 3)).astype(jnp.bfloat16)   # (4,B,84,84)
    h = conv_bn_relu(x, pk["c1_w"], pk["c1_scale"], pk["c1_shift"], k=8, stride=4)
    h = conv_bn_relu(h, pk["c2_w"], pk["c2_scale"], pk["c2_shift"], k=4, stride=2)
    h = conv_bn_relu(h, pk["c3_w"], pk["c3_scale"], pk["c3_shift"], k=3, stride=1)

    C, B, H, W = h.shape
    # PyTorch NCHW flatten order -> one tiny (64,B,7,7) transpose, then zero-pad
    # the 3136 feature axis to the head's padded K (3584); zero cols x zero w1
    # rows contribute nothing.
    f = jnp.transpose(h, (1, 0, 2, 3)).reshape(B, C * H * W)        # (B, 3136) bf16
    K1p = pk["fc_w1"].shape[0]
    f = jnp.pad(f, ((0, 0), (0, K1p - f.shape[1])))                 # (B, 3584)
    return dueling_head(f, pk["fc_w1"], pk["fc_b1"], pk["fc_w2"], pk["fc_b2"])


# ----------------------------------------------------------------------------
# Pure-JAX f32 reference (for correctness check)
# ----------------------------------------------------------------------------
def ref_forward(x, p):
    def conv_bn_relu_ref(h, w, b, g, be, rm, rv, s):
        h = jax.lax.conv_general_dilated(h, w, (s, s), "VALID",
                                         dimension_numbers=("NCHW", "OIHW", "NCHW"))
        h = h + b[None, :, None, None]
        scale = g / jnp.sqrt(rv + BN_EPS)
        h = (h - rm[None, :, None, None]) * scale[None, :, None, None] + be[None, :, None, None]
        return jnp.maximum(h, 0.0)

    h = x.astype(jnp.float32) / 255.0
    h = conv_bn_relu_ref(h, p["cw1"], p["cb1"], p["g1"], p["be1"], p["rm1"], p["rv1"], 4)
    h = conv_bn_relu_ref(h, p["cw2"], p["cb2"], p["g2"], p["be2"], p["rm2"], p["rv2"], 2)
    h = conv_bn_relu_ref(h, p["cw3"], p["cb3"], p["g3"], p["be3"], p["rm3"], p["rv3"], 1)
    f = h.reshape(h.shape[0], -1)
    v = jnp.maximum(f @ p["vw1"].T + p["vb1"], 0.0) @ p["vw2"].T + p["vb2"]
    a = jnp.maximum(f @ p["aw1"].T + p["ab1"], 0.0) @ p["aw2"].T + p["ab2"]
    return v + (a - jnp.mean(a))


# ----------------------------------------------------------------------------
# Deterministic parameter initialization (shapes from Model3Layer.__init__)
# ----------------------------------------------------------------------------
def init_params(key, n_out):
    ks = iter(jax.random.split(key, 32))

    def w(shape, s=0.05):
        return s * jax.random.normal(next(ks), shape, jnp.float32)

    def bn(c):
        return (1.0 + 0.1 * jax.random.normal(next(ks), (c,), jnp.float32),          # gamma
                0.1 * jax.random.normal(next(ks), (c,), jnp.float32),                 # beta
                0.1 * jax.random.normal(next(ks), (c,), jnp.float32),                 # running_mean
                1.0 + 0.1 * jnp.abs(jax.random.normal(next(ks), (c,), jnp.float32)))  # running_var

    p = {}
    p["cw1"], p["cb1"] = w((32, 4, 8, 8)), w((32,))
    p["g1"], p["be1"], p["rm1"], p["rv1"] = bn(32)
    p["cw2"], p["cb2"] = w((64, 32, 4, 4)), w((64,))
    p["g2"], p["be2"], p["rm2"], p["rv2"] = bn(64)
    p["cw3"], p["cb3"] = w((64, 64, 3, 3)), w((64,))
    p["g3"], p["be3"], p["rm3"], p["rv3"] = bn(64)
    p["vw1"], p["vb1"] = w((512, 3136), 0.02), w((512,))
    p["vw2"], p["vb2"] = w((1, 512), 0.02), w((1,))
    p["aw1"], p["ab1"] = w((512, 3136), 0.02), w((512,))
    p["aw2"], p["ab2"] = w((n_out, 512), 0.02), w((n_out,))
    return p


if __name__ == "__main__":
    B, FRAMES, n_out = 2, 4, 6  # spatial must be 84x84 to produce the 3136-dim flatten
    key = jax.random.PRNGKey(0)
    kx, kp = jax.random.split(key)
    x = jax.random.randint(kx, (B, FRAMES, 84, 84), 0, 256, jnp.int32).astype(jnp.float32)
    params = init_params(kp, n_out)

    packed = prepare_params(params)        # one-time weight packing, outside the jitted forward
    packed = jax.tree_util.tree_map(jax.block_until_ready, packed)

    fwd = jax.jit(model_forward)
    q = fwd(x, packed)
    q = jax.block_until_ready(q)

    q_ref = ref_forward(x, params)
    assert q.shape == (B, n_out), q.shape
    # bf16 MXU operands with f32 accumulation vs f32 reference.
    np.testing.assert_allclose(np.asarray(q), np.asarray(q_ref), rtol=1e-2, atol=1e-2)
    print("KERNEL_OK")
</pallas_src>

<mosaic_0001>
module attributes {stable_mosaic.version = 11 : i64} {
  func.func @_conv_bn_relu_kernel(%arg0: i32, %arg1: memref<256x512xbf16, #tpu.memory_space<vmem>>, %arg2: memref<32x256xbf16, #tpu.memory_space<vmem>>, %arg3: memref<32x1xf32, #tpu.memory_space<vmem>>, %arg4: memref<32x1xf32, #tpu.memory_space<vmem>>, %arg5: memref<32x512xbf16, #tpu.memory_space<vmem>>) attributes {dimension_semantics = [#tpu.dimension_semantics<parallel>], iteration_bounds = array<i64: 2>, scalar_prefetch = 0 : i64, scratch_operands = 0 : i64, tpu.core_type = #tpu.core_type<tc>, window_params = [{transform_indices = @transform_0, window_bounds = array<i64: 256, 512>}, {pipeline_mode = #tpu.pipeline_mode<synchronous>, transform_indices = @transform_1, window_bounds = array<i64: 32, 256>}, {pipeline_mode = #tpu.pipeline_mode<synchronous>, transform_indices = @transform_2, window_bounds = array<i64: 32, 1>}, {pipeline_mode = #tpu.pipeline_mode<synchronous>, transform_indices = @transform_3, window_bounds = array<i64: 32, 1>}, {transform_indices = @transform_4, window_bounds = array<i64: 32, 512>}]} {
    %c0 = arith.constant 0 : index
    %c0_0 = arith.constant 0 : index
    %0 = vector.load %arg2[%c0, %c0_0] : memref<32x256xbf16, #tpu.memory_space<vmem>>, vector<32x256xbf16>
    %c0_1 = arith.constant 0 : index
    %c0_2 = arith.constant 0 : index
    %1 = vector.load %arg1[%c0_1, %c0_2] : memref<256x512xbf16, #tpu.memory_space<vmem>>, vector<256x512xbf16>
    %cst = arith.constant dense<0.000000e+00> : vector<32x512xf32>
    %2 = tpu.matmul %0, %1, %cst {dimension_numbers = #tpu.dot_dimension_numbers<[1], [0], [0], [1], [0, 0, 1, 1], [], []>} : vector<32x256xbf16>, vector<256x512xbf16>, vector<32x512xf32> -> vector<32x512xf32>
    %c0_3 = arith.constant 0 : index
    %c0_4 = arith.constant 0 : index
    %3 = vector.load %arg3[%c0_3, %c0_4] : memref<32x1xf32, #tpu.memory_space<vmem>>, vector<32x1xf32>
    %4 = vector.broadcast %3 : vector<32x1xf32> to vector<32x512xf32>
    %5 = arith.mulf %2, %4 : vector<32x512xf32>
    %c0_5 = arith.constant 0 : index
    %c0_6 = arith.constant 0 : index
    %6 = vector.load %arg4[%c0_5, %c0_6] : memref<32x1xf32, #tpu.memory_space<vmem>>, vector<32x1xf32>
    %7 = vector.broadcast %6 : vector<32x1xf32> to vector<32x512xf32>
    %8 = arith.addf %5, %7 : vector<32x512xf32>
    %cst_7 = arith.constant 0.000000e+00 : f32
    %9 = vector.broadcast %cst_7 : f32 to vector<32x512xf32>
    %10 = arith.maximumf %8, %9 : vector<32x512xf32>
    %11 = arith.truncf %10 : vector<32x512xf32> to vector<32x512xbf16>
    %c0_8 = arith.constant 0 : index
    %c0_9 = arith.constant 0 : index
    %12 = vector.load %arg5[%c0_8, %c0_9] : memref<32x512xbf16, #tpu.memory_space<vmem>>, vector<32x512xbf16>
    tpu.vector_store %arg5[%c0_8, %c0_9], %11 {strides = array<i32>} : memref<32x512xbf16, #tpu.memory_space<vmem>>, vector<32x512xbf16>,
    return
  }
  func.func @transform_0(%arg0: i32) -> (i32, i32) {
    %c0_i32 = arith.constant 0 : i32
    %c0_i32_0 = arith.constant 0 : i32
    return %c0_i32, %arg0 : i32, i32
  }
  func.func @transform_1(%arg0: i32) -> (i32, i32) {
    %c0_i32 = arith.constant 0 : i32
    %c0_i32_0 = arith.constant 0 : i32
    %c0_i32_1 = arith.constant 0 : i32
    return %c0_i32, %c0_i32_0 : i32, i32
  }
  func.func @transform_2(%arg0: i32) -> (i32, i32) {
    %c0_i32 = arith.constant 0 : i32
    %c0_i32_0 = arith.constant 0 : i32
    %c0_i32_1 = arith.constant 0 : i32
    return %c0_i32, %c0_i32_0 : i32, i32
  }
  func.func @transform_3(%arg0: i32) -> (i32, i32) {
    %c0_i32 = arith.constant 0 : i32
    %c0_i32_0 = arith.constant 0 : i32
    %c0_i32_1 = arith.constant 0 : i32
    return %c0_i32, %c0_i32_0 : i32, i32
  }
  func.func @transform_4(%arg0: i32) -> (i32, i32) {
    %c0_i32 = arith.constant 0 : i32
    %c0_i32_0 = arith.constant 0 : i32
    return %c0_i32, %arg0 : i32, i32
  }
}

module attributes {stable_mosaic.version = 11 : i64} {
  func.func @_conv_bn_relu_kernel(%arg0: i32, %arg1: memref<512x162xbf16, #tpu.memory_space<vmem>>, %arg2: memref<64x512xbf16, #tpu.memory_space<vmem>>, %arg3: memref<64x1xf32, #tpu.memory_space<vmem>>, %arg4: memref<64x1xf32, #tpu.memory_space<vmem>>, %arg5: memref<64x162xbf16, #tpu.memory_space<vmem>>) attributes {dimension_semantics = [#tpu.dimension_semantics<parallel>], iteration_bounds = array<i64: 1>, scalar_prefetch = 0 : i64, scratch_operands = 0 : i64, tpu.core_type = #tpu.core_type<tc>, window_params = [{transform_indices = @transform_0, window_bounds = array<i64: 512, 162>}, {pipeline_mode = #tpu.pipeline_mode<synchronous>, transform_indices = @transform_1, window_bounds = array<i64: 64, 512>}, {pipeline_mode = #tpu.pipeline_mode<synchronous>, transform_indices = @transform_2, window_bounds = array<i64: 64, 1>}, {pipeline_mode = #tpu.pipeline_mode<synchronous>, transform_indices = @transform_3, window_bounds = array<i64: 64, 1>}, {transform_indices = @transform_4, window_bounds = array<i64: 64, 162>}]} {
    %c0 = arith.constant 0 : index
    %c0_0 = arith.constant 0 : index
    %0 = vector.load %arg2[%c0, %c0_0] : memref<64x512xbf16, #tpu.memory_space<vmem>>, vector<64x512xbf16>
    %c0_1 = arith.constant 0 : index
    %c0_2 = arith.constant 0 : index
    %1 = vector.load %arg1[%c0_1, %c0_2] : memref<512x162xbf16, #tpu.memory_space<vmem>>, vector<512x162xbf16>
    %cst = arith.constant dense<0.000000e+00> : vector<64x162xf32>
    %2 = tpu.matmul %0, %1, %cst {dimension_numbers = #tpu.dot_dimension_numbers<[1], [0], [0], [1], [0, 0, 1, 1], [], []>} : vector<64x512xbf16>, vector<512x162xbf16>, vector<64x162xf32> -> vector<64x162xf32>
    %c0_3 = arith.constant 0 : index
    %c0_4 = arith.constant 0 : index
    %3 = vector.load %arg3[%c0_3, %c0_4] : memref<64x1xf32, #tpu.memory_space<vmem>>, vector<64x1xf32>
    %4 = vector.broadcast %3 : vector<64x1xf32> to vector<64x162xf32>
    %5 = arith.mulf %2, %4 : vector<64x162xf32>
    %c0_5 = arith.constant 0 : index
    %c0_6 = arith.constant 0 : index
    %6 = vector.load %arg4[%c0_5, %c0_6] : memref<64x1xf32, #tpu.memory_space<vmem>>, vector<64x1xf32>
    %7 = vector.broadcast %6 : vector<64x1xf32> to vector<64x162xf32>
    %8 = arith.addf %5, %7 : vector<64x162xf32>
    %cst_7 = arith.constant 0.000000e+00 : f32
    %9 = vector.broadcast %cst_7 : f32 to vector<64x162xf32>
    %10 = arith.maximumf %8, %9 : vector<64x162xf32>
    %11 = arith.truncf %10 : vector<64x162xf32> to vector<64x162xbf16>
    %c0_8 = arith.constant 0 : index
    %c0_9 = arith.constant 0 : index
    %12 = vector.load %arg5[%c0_8, %c0_9] : memref<64x162xbf16, #tpu.memory_space<vmem>>, vector<64x162xbf16>
    tpu.vector_store %arg5[%c0_8, %c0_9], %11 {strides = array<i32>} : memref<64x162xbf16, #tpu.memory_space<vmem>>, vector<64x162xbf16>,
    return
  }
  func.func @transform_0(%arg0: i32) -> (i32, i32) {
    %c0_i32 = arith.constant 0 : i32
    %c0_i32_0 = arith.constant 0 : i32
    return %c0_i32, %arg0 : i32, i32
  }
  func.func @transform_1(%arg0: i32) -> (i32, i32) {
    %c0_i32 = arith.constant 0 : i32
    %c0_i32_0 = arith.constant 0 : i32
    %c0_i32_1 = arith.constant 0 : i32
    return %c0_i32, %c0_i32_0 : i32, i32
  }
  func.func @transform_2(%arg0: i32) -> (i32, i32) {
    %c0_i32 = arith.constant 0 : i32
    %c0_i32_0 = arith.constant 0 : i32
    %c0_i32_1 = arith.constant 0 : i32
    return %c0_i32, %c0_i32_0 : i32, i32
  }
  func.func @transform_3(%arg0: i32) -> (i32, i32) {
    %c0_i32 = arith.constant 0 : i32
    %c0_i32_0 = arith.constant 0 : i32
    %c0_i32_1 = arith.constant 0 : i32
    return %c0_i32, %c0_i32_0 : i32, i32
  }
  func.func @transform_4(%arg0: i32) -> (i32, i32) {
    %c0_i32 = arith.constant 0 : i32
    %c0_i32_0 = arith.constant 0 : i32
    return %c0_i32, %arg0 : i32, i32
  }
}

module attributes {stable_mosaic.version = 11 : i64} {
  func.func @_conv_bn_relu_kernel(%arg0: i32, %arg1: memref<576x98xbf16, #tpu.memory_space<vmem>>, %arg2: memref<64x576xbf16, #tpu.memory_space<vmem>>, %arg3: memref<64x1xf32, #tpu.memory_space<vmem>>, %arg4: memref<64x1xf32, #tpu.memory_space<vmem>>, %arg5: memref<64x98xbf16, #tpu.memory_space<vmem>>) attributes {dimension_semantics = [#tpu.dimension_semantics<parallel>], iteration_bounds = array<i64: 1>, scalar_prefetch = 0 : i64, scratch_operands = 0 : i64, tpu.core_type = #tpu.core_type<tc>, window_params = [{transform_indices = @transform_0, window_bounds = array<i64: 576, 98>}, {pipeline_mode = #tpu.pipeline_mode<synchronous>, transform_indices = @transform_1, window_bounds = array<i64: 64, 576>}, {pipeline_mode = #tpu.pipeline_mode<synchronous>, transform_indices = @transform_2, window_bounds = array<i64: 64, 1>}, {pipeline_mode = #tpu.pipeline_mode<synchronous>, transform_indices = @transform_3, window_bounds = array<i64: 64, 1>}, {transform_indices = @transform_4, window_bounds = array<i64: 64, 98>}]} {
    %c0 = arith.constant 0 : index
    %c0_0 = arith.constant 0 : index
    %0 = vector.load %arg2[%c0, %c0_0] : memref<64x576xbf16, #tpu.memory_space<vmem>>, vector<64x576xbf16>
    %c0_1 = arith.constant 0 : index
    %c0_2 = arith.constant 0 : index
    %1 = vector.load %arg1[%c0_1, %c0_2] : memref<576x98xbf16, #tpu.memory_space<vmem>>, vector<576x98xbf16>
    %cst = arith.constant dense<0.000000e+00> : vector<64x98xf32>
    %2 = tpu.matmul %0, %1, %cst {dimension_numbers = #tpu.dot_dimension_numbers<[1], [0], [0], [1], [0, 0, 1, 1], [], []>} : vector<64x576xbf16>, vector<576x98xbf16>, vector<64x98xf32> -> vector<64x98xf32>
    %c0_3 = arith.constant 0 : index
    %c0_4 = arith.constant 0 : index
    %3 = vector.load %arg3[%c0_3, %c0_4] : memref<64x1xf32, #tpu.memory_space<vmem>>, vector<64x1xf32>
    %4 = vector.broadcast %3 : vector<64x1xf32> to vector<64x98xf32>
    %5 = arith.mulf %2, %4 : vector<64x98xf32>
    %c0_5 = arith.constant 0 : index
    %c0_6 = arith.constant 0 : index
    %6 = vector.load %arg4[%c0_5, %c0_6] : memref<64x1xf32, #tpu.memory_space<vmem>>, vector<64x1xf32>
    %7 = vector.broadcast %6 : vector<64x1xf32> to vector<64x98xf32>
    %8 = arith.addf %5, %7 : vector<64x98xf32>
    %cst_7 = arith.constant 0.000000e+00 : f32
    %9 = vector.broadcast %cst_7 : f32 to vector<64x98xf32>
    %10 = arith.maximumf %8, %9 : vector<64x98xf32>
    %11 = arith.truncf %10 : vector<64x98xf32> to vector<64x98xbf16>
    %c0_8 = arith.constant 0 : index
    %c0_9 = arith.constant 0 : index
    %12 = vector.load %arg5[%c0_8, %c0_9] : memref<64x98xbf16, #tpu.memory_space<vmem>>, vector<64x98xbf16>
    tpu.vector_store %arg5[%c0_8, %c0_9], %11 {strides = array<i32>} : memref<64x98xbf16, #tpu.memory_space<vmem>>, vector<64x98xbf16>,
    return
  }
  func.func @transform_0(%arg0: i32) -> (i32, i32) {
    %c0_i32 = arith.constant 0 : i32
    %c0_i32_0 = arith.constant 0 : i32
    return %c0_i32, %arg0 : i32, i32
  }
  func.func @transform_1(%arg0: i32) -> (i32, i32) {
    %c0_i32 = arith.constant 0 : i32
    %c0_i32_0 = arith.constant 0 : i32
    %c0_i32_1 = arith.constant 0 : i32
    return %c0_i32, %c0_i32_0 : i32, i32
  }
  func.func @transform_2(%arg0: i32) -> (i32, i32) {
    %c0_i32 = arith.constant 0 : i32
    %c0_i32_0 = arith.constant 0 : i32
    %c0_i32_1 = arith.constant 0 : i32
    return %c0_i32, %c0_i32_0 : i32, i32
  }
  func.func @transform_3(%arg0: i32) -> (i32, i32) {
    %c0_i32 = arith.constant 0 : i32
    %c0_i32_0 = arith.constant 0 : i32
    %c0_i32_1 = arith.constant 0 : i32
    return %c0_i32, %c0_i32_0 : i32, i32
  }
  func.func @transform_4(%arg0: i32) -> (i32, i32) {
    %c0_i32 = arith.constant 0 : i32
    %c0_i32_0 = arith.constant 0 : i32
    return %c0_i32, %arg0 : i32, i32
  }
}

module attributes {stable_mosaic.version = 11 : i64} {
  func.func @_dueling_head_kernel(%arg0: i32, %arg1: memref<2x512xbf16, #tpu.memory_space<vmem>>, %arg2: memref<512x1024xbf16, #tpu.memory_space<vmem>>, %arg3: memref<1x1024xf32, #tpu.memory_space<vmem>>, %arg4: memref<1024x7xbf16, #tpu.memory_space<vmem>>, %arg5: memref<1x7xf32, #tpu.memory_space<vmem>>, %arg6: memref<2x6xf32, #tpu.memory_space<vmem>>, %arg7: memref<2x1024xf32, #tpu.memory_space<vmem>>) attributes {dimension_semantics = [#tpu.dimension_semantics<arbitrary>], iteration_bounds = array<i64: 7>, scalar_prefetch = 0 : i64, scratch_operands = 1 : i64, tpu.core_type = #tpu.core_type<tc>, window_params = [{transform_indices = @transform_0, window_bounds = array<i64: 2, 512>}, {transform_indices = @transform_1, window_bounds = array<i64: 512, 1024>}, {pipeline_mode = #tpu.pipeline_mode<synchronous>, transform_indices = @transform_2, window_bounds = array<i64: 1, 1024>}, {pipeline_mode = #tpu.pipeline_mode<synchronous>, transform_indices = @transform_3, window_bounds = array<i64: 1024, 7>}, {pipeline_mode = #tpu.pipeline_mode<synchronous>, transform_indices = @transform_4, window_bounds = array<i64: 1, 7>}, {pipeline_mode = #tpu.pipeline_mode<synchronous>, transform_indices = @transform_5, window_bounds = array<i64: 2, 6>}]} {
    %c0_i32 = arith.constant 0 : i32
    %0 = arith.cmpi eq, %arg0, %c0_i32 : i32
    %1 = arith.extui %0 : i1 to i32
    %c0_i32_0 = arith.constant 0 : i32
    %2 = arith.cmpi ne, %1, %c0_i32_0 : i32
    scf.if %2 {
      %cst_9 = arith.constant 0.000000e+00 : f32
      %12 = vector.broadcast %cst_9 : f32 to vector<2x1024xf32>
      %c0_10 = arith.constant 0 : index
      %c0_11 = arith.constant 0 : index
      %13 = vector.load %arg7[%c0_10, %c0_11] : memref<2x1024xf32, #tpu.memory_space<vmem>>, vector<2x1024xf32>
      tpu.vector_store %arg7[%c0_10, %c0_11], %12 {strides = array<i32>} : memref<2x1024xf32, #tpu.memory_space<vmem>>, vector<2x1024xf32>,
    } else {
    }
    %c0 = arith.constant 0 : index
    %c0_1 = arith.constant 0 : index
    %3 = vector.load %arg7[%c0, %c0_1] : memref<2x1024xf32, #tpu.memory_space<vmem>>, vector<2x1024xf32>
    %c0_2 = arith.constant 0 : index
    %c0_3 = arith.constant 0 : index
    %4 = vector.load %arg1[%c0_2, %c0_3] : memref<2x512xbf16, #tpu.memory_space<vmem>>, vector<2x512xbf16>
    %c0_4 = arith.constant 0 : index
    %c0_5 = arith.constant 0 : index
    %5 = vector.load %arg2[%c0_4, %c0_5] : memref<512x1024xbf16, #tpu.memory_space<vmem>>, vector<512x1024xbf16>
    %cst = arith.constant dense<0.000000e+00> : vector<2x1024xf32>
    %6 = tpu.matmul %4, %5, %cst {dimension_numbers = #tpu.dot_dimension_numbers<[1], [0], [0], [1], [0, 0, 1, 1], [], []>} : vector<2x512xbf16>, vector<512x1024xbf16>, vector<2x1024xf32> -> vector<2x1024xf32>
    %7 = arith.addf %3, %6 : vector<2x1024xf32>
    %c0_6 = arith.constant 0 : index
    %c0_7 = arith.constant 0 : index
    %8 = vector.load %arg7[%c0_6, %c0_7] : memref<2x1024xf32, #tpu.memory_space<vmem>>, vector<2x1024xf32>
    tpu.vector_store %arg7[%c0_6, %c0_7], %7 {strides = array<i32>} : memref<2x1024xf32, #tpu.memory_space<vmem>>, vector<2x1024xf32>,
    %c6_i32 = arith.constant 6 : i32
    %9 = arith.cmpi eq, %arg0, %c6_i32 : i32
    %10 = arith.extui %9 : i1 to i32
    %c0_i32_8 = arith.constant 0 : i32
    %11 = arith.cmpi ne, %10, %c0_i32_8 : i32
    scf.if %11 {
      %c0_9 = arith.constant 0 : index
      %c0_10 = arith.constant 0 : index
      %12 = vector.load %arg7[%c0_9, %c0_10] : memref<2x1024xf32, #tpu.memory_space<vmem>>, vector<2x1024xf32>
      %c0_11 = arith.constant 0 : index
      %c0_12 = arith.constant 0 : index
      %13 = vector.load %arg3[%c0_11, %c0_12] : memref<1x1024xf32, #tpu.memory_space<vmem>>, vector<1x1024xf32>
      %14 = vector.broadcast %13 : vector<1x1024xf32> to vector<2x1024xf32>
      %15 = arith.addf %12, %14 : vector<2x1024xf32>
      %cst_13 = arith.constant 0.000000e+00 : f32
      %16 = vector.broadcast %cst_13 : f32 to vector<2x1024xf32>
      %17 = arith.maximumf %15, %16 : vector<2x1024xf32>
      %18 = arith.truncf %17 : vector<2x1024xf32> to vector<2x1024xbf16>
      %c0_14 = arith.constant 0 : index
      %c0_15 = arith.constant 0 : index
      %19 = vector.load %arg4[%c0_14, %c0_15] : memref<1024x7xbf16, #tpu.memory_space<vmem>>, vector<1024x7xbf16>
      %cst_16 = arith.constant dense<0.000000e+00> : vector<2x7xf32>
      %20 = tpu.matmul %18, %19, %cst_16 {dimension_numbers = #tpu.dot_dimension_numbers<[1], [0], [0], [1], [0, 0, 1, 1], [], []>} : vector<2x1024xbf16>, vector<1024x7xbf16>, vector<2x7xf32> -> vector<2x7xf32>
      %c0_17 = arith.constant 0 : index
      %c0_18 = arith.constant 0 : index
      %21 = vector.load %arg5[%c0_17, %c0_18] : memref<1x7xf32, #tpu.memory_space<vmem>>, vector<1x7xf32>
      %22 = vector.broadcast %21 : vector<1x7xf32> to vector<2x7xf32>
      %23 = arith.addf %20, %22 : vector<2x7xf32>
      %24 = vector.extract_strided_slice %23 {offsets = [0, 0], sizes = [2, 1], strides = [1, 1]} : vector<2x7xf32> to vector<2x1xf32>
      %25 = vector.extract_strided_slice %23 {offsets = [0, 1], sizes = [2, 6], strides = [1, 1]} : vector<2x7xf32> to vector<2x6xf32>
      %26 = vector.shape_cast %25 : vector<2x6xf32> to vector<1x2x6xf32>
      %cst_19 = arith.constant dense<0.000000e+00> : vector<1xf32>
      %27 = vector.multi_reduction <add>, %26, %cst_19 [1, 2] : vector<1x2x6xf32> to vector<1xf32>
      %28 = vector.shape_cast %27 : vector<1xf32> to vector<1x1x1xf32>
      %29 = vector.extract %28[0, 0, 0] : f32 from vector<1x1x1xf32>
      %cst_20 = arith.constant 1.200000e+01 : f32
      %30 = arith.divf %29, %cst_20 : f32
      %31 = vector.broadcast %30 : f32 to vector<2x6xf32>
      %32 = arith.subf %25, %31 : vector<2x6xf32>
      %33 = vector.broadcast %24 : vector<2x1xf32> to vector<2x6xf32>
      %34 = arith.addf %33, %32 : vector<2x6xf32>
      %c0_21 = arith.constant 0 : index
      %c0_22 = arith.constant 0 : index
      %35 = vector.load %arg6[%c0_21, %c0_22] : memref<2x6xf32, #tpu.memory_space<vmem>>, vector<2x6xf32>
      tpu.vector_store %arg6[%c0_21, %c0_22], %34 {strides = array<i32>} : memref<2x6xf32, #tpu.memory_space<vmem>>, vector<2x6xf32>,
    } else {
    }
    return
  }
  func.func @transform_0(%arg0: i32) -> (i32, i32) {
    %c0_i32 = arith.constant 0 : i32
    %c0_i32_0 = arith.constant 0 : i32
    return %c0_i32, %arg0 : i32, i32
  }
  func.func @transform_1(%arg0: i32) -> (i32, i32) {
    %c0_i32 = arith.constant 0 : i32
    %c0_i32_0 = arith.constant 0 : i32
    return %arg0, %c0_i32 : i32, i32
  }
  func.func @transform_2(%arg0: i32) -> (i32, i32) {
    %c0_i32 = arith.constant 0 : i32
    %c0_i32_0 = arith.constant 0 : i32
    %c0_i32_1 = arith.constant 0 : i32
    return %c0_i32, %c0_i32_0 : i32, i32
  }
  func.func @transform_3(%arg0: i32) -> (i32, i32) {
    %c0_i32 = arith.constant 0 : i32
    %c0_i32_0 = arith.constant 0 : i32
    %c0_i32_1 = arith.constant 0 : i32
    return %c0_i32, %c0_i32_0 : i32, i32
  }
  func.func @transform_4(%arg0: i32) -> (i32, i32) {
    %c0_i32 = arith.constant 0 : i32
    %c0_i32_0 = arith.constant 0 : i32
    %c0_i32_1 = arith.constant 0 : i32
    return %c0_i32, %c0_i32_0 : i32, i32
  }
  func.func @transform_5(%arg0: i32) -> (i32, i32) {
    %c0_i32 = arith.constant 0 : i32
    %c0_i32_0 = arith.constant 0 : i32
    %c0_i32_1 = arith.constant 0 : i32
    return %c0_i32, %c0_i32_0 : i32, i32
  }
}

</mosaic_0001>

<llo_original>
// kernel: model_forward.4
$region0: #{model_forward.4}
  #allocation0 [shape = 'u32[]', space=smem, size = 0x4, offset = 0x4, fixed_abs, tag = 'smem constant byte address 0x4 - core index']
  #allocation1 [shape = 'u32[144,128]{1,0:T(1,128)}', space=vmem, size = 0x12000, scoped, tag = 'internal scratch']
  %s0 = inlined_call_operand.vmem [shape: bf16[256,800], index: 0, kind: input, shape index: {}]
  %s1 = inlined_call_operand.vmem [shape: bf16[32,256], index: 1, kind: input, shape index: {}]
  %s2 = inlined_call_operand.vmem [shape: f32[32,1], index: 2, kind: input, shape index: {}]
  %s3 = inlined_call_operand.vmem [shape: f32[32,1], index: 3, kind: input, shape index: {}]
  %s4 = inlined_call_operand.vmem [shape: bf16[32,800], index: 4, kind: output, shape index: {}]
  %s5 = sld [smem:[#allocation0]]
  $region177: #{model_forward.4} parent=0
    _
  %s7 = ssub.s32 1, %s5
  %s8 = scalar_select 0, %s7, %s5
  $region1: #{model_forward.4} parent=0
    #allocation2 [shape = 'u8[524288]{0}', space=vmem, size = 0x80000, scoped, tag = 'input window, operand 0']
    #allocation3 [shape = 'u8[65536]{0}', space=vmem, size = 0x10000, scoped, tag = 'output window, operand 0']
    loop: start=0, step=1, limit=4
    $region2: #{model_forward.4} parent=1 // loop_pre_header
      _
    $region3: #{model_forward.4} parent=1 // loop_header
      %s10 = sphi 0, %s14
      %p11 = scmp.ge.s32.totalorder %s10, 4
      %s20 = sphi 0, %s22
      %s23 = sphi 0, %s20
      %s24 = sphi 0, %s23
      %s40 = sphi 0, %s24
      %s44 = sphi 0, %s44
      %s46 = sphi 0, %s44
      %s47 = sphi 0, %s46
      %s61 = sphi 0, %s47
      %s65 = sphi 0, %s65
      %s67 = sphi 0, %s65
      %s68 = sphi 0, %s67
      %s82 = sphi 0, %s68
      %s86 = sphi 0, %s86
      %s88 = sphi 0, %s86
      %s89 = sphi 0, %s88
      %s103 = sphi 0, %s89
      %s109 = sphi 0, %s111
      %s112 = sphi 0, %s109
      %s113 = sphi 0, %s112
      %s129 = sphi 0, %s113
    $region4: #{model_forward.4} parent=1 // loop_header_branch
      %13 = sbr.rel (%p11) target = $region8
    $region5: #{model_forward.4} parent=1 // loop_body
      %s15 = ssub.s32 %s10, 1
      %s16 = ssub.s32 %s10, 2
      %s17 = sadd.s32 %s10, 1
      %s18 = ssub.s32 %s10, %s17
      %p19 = scmp.eq.s32.totalorder %s18, 0
      %s21 = sadd.s32 %s20, 1
      %s22 = scalar_select %p19, %s20, %s21
      %p25 = pneg %p19
      %p26 = scmp.eq.s32.totalorder %s10, 1
      %p27 = por %p25, %p26
      %p28 = scmp.ne.s32.totalorder %s20, %s23
      %p29 = scmp.eq.s32.totalorder %s10, 0
      %p30 = por %p28, %p29
      %p31 = scmp.ne.s32.totalorder %s20, %s23
      %p32 = scmp.eq.s32.totalorder %s15, 1
      %p33 = por %p31, %p32
      %p34 = scmp.ne.s32.totalorder %s23, %s24
      %p35 = scmp.eq.s32.totalorder %s15, 0
      %p36 = por %p34, %p35
      %p37 = scmp.ne.s32.totalorder %s23, %s24
      %p38 = scmp.eq.s32.totalorder %s16, 1
      %p39 = por %p37, %p38
      %p41 = scmp.ne.s32.totalorder %s24, %s40
      %p42 = scmp.eq.s32.totalorder %s16, 0
      %p43 = por %p41, %p42
      %s45 = sadd.s32 %s44, 1
      %p48 = scmp.eq.s32.totalorder %s10, 1
      %p49 = scmp.ne.s32.totalorder %s44, %s46
      %p50 = scmp.eq.s32.totalorder %s10, 0
      %p51 = por %p49, %p50
      %p52 = scmp.ne.s32.totalorder %s44, %s46
      %p53 = scmp.eq.s32.totalorder %s15, 1
      %p54 = por %p52, %p53
      %p55 = scmp.ne.s32.totalorder %s46, %s47
      %p56 = scmp.eq.s32.totalorder %s15, 0
      %p57 = por %p55, %p56
      %p58 = scmp.ne.s32.totalorder %s46, %s47
      %p59 = scmp.eq.s32.totalorder %s16, 1
      %p60 = por %p58, %p59
      %p62 = scmp.ne.s32.totalorder %s47, %s61
      %p63 = scmp.eq.s32.totalorder %s16, 0
      %p64 = por %p62, %p63
      %s66 = sadd.s32 %s65, 1
      %p69 = scmp.eq.s32.totalorder %s10, 1
      %p70 = scmp.ne.s32.totalorder %s65, %s67
      %p71 = scmp.eq.s32.totalorder %s10, 0
      %p72 = por %p70, %p71
      %p73 = scmp.ne.s32.totalorder %s65, %s67
      %p74 = scmp.eq.s32.totalorder %s15, 1
      %p75 = por %p73, %p74
      %p76 = scmp.ne.s32.totalorder %s67, %s68
      %p77 = scmp.eq.s32.totalorder %s15, 0
      %p78 = por %p76, %p77
      %p79 = scmp.ne.s32.totalorder %s67, %s68
      %p80 = scmp.eq.s32.totalorder %s16, 1
      %p81 = por %p79, %p80
      %p83 = scmp.ne.s32.totalorder %s68, %s82
      %p84 = scmp.eq.s32.totalorder %s16, 0
      %p85 = por %p83, %p84
      %s87 = sadd.s32 %s86, 1
      %p90 = scmp.eq.s32.totalorder %s10, 1
      %p91 = scmp.ne.s32.totalorder %s86, %s88
      %p92 = scmp.eq.s32.totalorder %s10, 0
      %p93 = por %p91, %p92
      %p94 = scmp.ne.s32.totalorder %s86, %s88
      %p95 = scmp.eq.s32.totalorder %s15, 1
      %p96 = por %p94, %p95
      %p97 = scmp.ne.s32.totalorder %s88, %s89
      %p98 = scmp.eq.s32.totalorder %s15, 0
      %p99 = por %p97, %p98
      %p100 = scmp.ne.s32.totalorder %s88, %s89
      %p101 = scmp.eq.s32.totalorder %s16, 1
      %p102 = por %p100, %p101
      %p104 = scmp.ne.s32.totalorder %s89, %s103
      %p105 = scmp.eq.s32.totalorder %s16, 0
      %p106 = por %p104, %p105
      %s107 = ssub.s32 %s10, %s17
      %p108 = scmp.eq.s32.totalorder %s107, 0
      %s110 = sadd.s32 %s109, 1
      %s111 = scalar_select %p108, %s109, %s110
      %p114 = pneg %p108
      %p115 = scmp.eq.s32.totalorder %s10, 1
      %p116 = por %p114, %p115
      %p117 = scmp.ne.s32.totalorder %s109, %s112
      %p118 = scmp.eq.s32.totalorder %s10, 0
      %p119 = por %p117, %p118
      %p120 = scmp.ne.s32.totalorder %s109, %s112
      %p121 = scmp.eq.s32.totalorder %s15, 1
      %p122 = por %p120, %p121
      %p123 = scmp.ne.s32.totalorder %s112, %s113
      %p124 = scmp.eq.s32.totalorder %s15, 0
      %p125 = por %p123, %p124
      %p126 = scmp.ne.s32.totalorder %s112, %s113
      %p127 = scmp.eq.s32.totalorder %s16, 1
      %p128 = por %p126, %p127
      %p130 = scmp.ne.s32.totalorder %s113, %s129
      %p131 = scmp.eq.s32.totalorder %s16, 0
      %p132 = por %p130, %p131
      %p133 = scmp.le.s32.totalorder 1, %s10
      %p134 = scmp.lt.s32.totalorder %s10, 3
      %p135 = pnand %p133, %p134
      %p136 = pneg %p135
      // Predicated region
      $region9: #{model_forward.4} parent=5 // pred_check
        _
      $region10: #{model_forward.4} parent=5 // pred_check_branch
        %138 = sbr.rel (%p135) target = $region12
      $region11: #{model_forward.4} parent=5 // pred_region
        %s139 = ssub.s32 %s10, 1
        // Predicated region
        $region13: #{model_forward.4} parent=11 // pred_check
          %p140 = pneg %p57
        $region14: #{model_forward.4} parent=11 // pred_check_branch
          %142 = sbr.rel (%p140) target = $region16
        $region15: #{model_forward.4} parent=11 // pred_region
          _
        $region16: #{model_forward.4} parent=11 // pred_fallthru
          _
        // Predicated region
        $region17: #{model_forward.4} parent=11 // pred_check
          %p143 = pneg %p78
        $region18: #{model_forward.4} parent=11 // pred_check_branch
          %145 = sbr.rel (%p143) target = $region20
        $region19: #{model_forward.4} parent=11 // pred_region
          _
        $region20: #{model_forward.4} parent=11 // pred_fallthru
          _
        // Predicated region
        $region21: #{model_forward.4} parent=11 // pred_check
          %p146 = pneg %p99
        $region22: #{model_forward.4} parent=11 // pred_check_branch
          %148 = sbr.rel (%p146) target = $region24
        $region23: #{model_forward.4} parent=11 // pred_region
          _
        $region24: #{model_forward.4} parent=11 // pred_fallthru
          _
      $region12: #{model_forward.4} parent=5 // pred_fallthru
        _
      %p149 = scmp.lt.s32.totalorder %s10, 2
      // Predicated region
      $region25: #{model_forward.4} parent=5 // pred_check
        %p150 = pneg %p149
      $region26: #{model_forward.4} parent=5 // pred_check_branch
        %152 = sbr.rel (%p150) target = $region28
      $region27: #{model_forward.4} parent=5 // pred_region
        // Predicated region
        $region29: #{model_forward.4} parent=27 // pred_check
          %p153 = pneg %p30
        $region30: #{model_forward.4} parent=27 // pred_check_branch
          %155 = sbr.rel (%p153) target = $region32
        $region31: #{model_forward.4} parent=27 // pred_region
          %s156 = sand.u32 %s20, 1
          %s157 = sand.u32 %s20, 1
          %s158 = smul.addr %s157, 512
          %s159 = scalar_lea.vmem [#allocation2], %s158
          %s160 = smul.u32 4, %s10
          %s161 = ssub.s32 7, %s160
          %p162 = scmp.lt.s32.totalorder %s161, 4
          %s163 = scalar_select %p162, %s161, 4
          %s164 = smul.u32 2048, %s163
          %p165 = scmp.ne.s32.totalorder 0, %s164
          %s166 = smul.addr %s160, 4
          %s167 = scalar_lea.vmem %s0, %s166
          %s168 = smul.u32 %s163, 4
          // Predicated region
          $region33: #{model_forward.4} parent=31 // pred_check
            %p169 = pneg %p165
          $region34: #{model_forward.4} parent=31 // pred_check_branch
            %171 = sbr.rel (%p169) target = $region36
          $region35: #{model_forward.4} parent=31 // pred_region
            %p172 = scmp.lt.u32.totalorder %s168, 8
            %p173 = pneg %p172
            // Predicated region
            $region37: #{model_forward.4} parent=35 // pred_check
              _
            $region38: #{model_forward.4} parent=35 // pred_check_branch
              %175 = sbr.rel (%p172) target = $region40
            $region39: #{model_forward.4} parent=35 // pred_region
              %s252 = sand.u32 %s168, 7
              %p253 = scmp.eq.s32.totalorder %s252, 0
              // Predicated region
              $region52: #{model_forward.4} parent=39 // pred_check
                %p254 = pneg %p253
              $region53: #{model_forward.4} parent=39 // pred_check_branch
                %256 = sbr.rel (%p254) target = $region55
              $region54: #{model_forward.4} parent=39 // pred_region
                %s257 = sshrl.u32 %s168, 3
                %s258 = sshrl.u32 %s257, 1
                // While loop
                $region56: #{model_forward.4} parent=54 // loop_pre_header
                  _
                $region57: #{model_forward.4} parent=54 // loop_header
                  %s262 = sphi 0, %s264
                  %p263 = scmp.ge.s32.totalorder %s262, %s258
                  %s267 = sphi 0, %s400
                  %s268 = sphi %s167, %s403
                  %s269 = sphi %s159, %s404
                $region58: #{model_forward.4} parent=54 // loop_header_branch
                  %266 = sbr.rel (%p263) target = $region62
                $region59: #{model_forward.4} parent=54 // loop_body
                  %v270 = vld [vmem:[%s268] sm:$0xff]
                  %271 = vst [vmem:[%s269] sm:$0xff] %v270
                  %v272 = vld [vmem:[%s268 + $0x8] sm:$0xff]
                  %273 = vst [vmem:[%s269 + $0x8] sm:$0xff] %v272
                  %v274 = vld [vmem:[%s268 + $0x1c] sm:$0xff]
                  %275 = vst [vmem:[%s269 + $0x10] sm:$0xff] %v274
                  %v276 = vld [vmem:[%s268 + $0x24] sm:$0xff]
                  %277 = vst [vmem:[%s269 + $0x18] sm:$0xff] %v276
                  %v278 = vld [vmem:[%s268 + $0x38] sm:$0xff]
                  %279 = vst [vmem:[%s269 + $0x20] sm:$0xff] %v278
                  %v280 = vld [vmem:[%s268 + $0x40] sm:$0xff]
                  %281 = vst [vmem:[%s269 + $0x28] sm:$0xff] %v280
                  %v282 = vld [vmem:[%s268 + $0x54] sm:$0xff]
                  %283 = vst [vmem:[%s269 + $0x30] sm:$0xff] %v282
                  %v284 = vld [vmem:[%s268 + $0x5c] sm:$0xff]
                  %285 = vst [vmem:[%s269 + $0x38] sm:$0xff] %v284
                  %v286 = vld [vmem:[%s268 + $0x70] sm:$0xff]
                  %287 = vst [vmem:[%s269 + $0x40] sm:$0xff] %v286
                  %v288 = vld [vmem:[%s268 + $0x78] sm:$0xff]
                  %289 = vst [vmem:[%s269 + $0x48] sm:$0xff] %v288
                  %v290 = vld [vmem:[%s268 + $0x8c] sm:$0xff]
                  %291 = vst [vmem:[%s269 + $0x50] sm:$0xff] %v290
                  %v292 = vld [vmem:[%s268 + $0x94] sm:$0xff]
                  %293 = vst [vmem:[%s269 + $0x58] sm:$0xff] %v292
                  %v294 = vld [vmem:[%s268 + $0xa8] sm:$0xff]
                  %295 = vst [vmem:[%s269 + $0x60] sm:$0xff] %v294
                  %v296 = vld [vmem:[%s268 + $0xb0] sm:$0xff]
                  %297 = vst [vmem:[%s269 + $0x68] sm:$0xff] %v296
                  %v298 = vld [vmem:[%s268 + $0xc4] sm:$0xff]
                  %299 = vst [vmem:[%s269 + $0x70] sm:$0xff] %v298
                  %v300 = vld [vmem:[%s268 + $0xcc] sm:$0xff]
                  %301 = vst [vmem:[%s269 + $0x78] sm:$0xff] %v300
                  %v302 = vld [vmem:[%s268 + $0xe0] sm:$0xff]
                  %303 = vst [vmem:[%s269 + $0x80] sm:$0xff] %v302
                  %v304 = vld [vmem:[%s268 + $0xe8] sm:$0xff]
                  %305 = vst [vmem:[%s269 + $0x88] sm:$0xff] %v304
                  %v306 = vld [vmem:[%s268 + $0xfc] sm:$0xff]
                  %307 = vst [vmem:[%s269 + $0x90] sm:$0xff] %v306
                  %v308 = vld [vmem:[%s268 + $0x104] sm:$0xff]
                  %309 = vst [vmem:[%s269 + $0x98] sm:$0xff] %v308
                  %v310 = vld [vmem:[%s268 + $0x118] sm:$0xff]
                  %311 = vst [vmem:[%s269 + $0xa0] sm:$0xff] %v310
                  %v312 = vld [vmem:[%s268 + $0x120] sm:$0xff]
                  %313 = vst [vmem:[%s269 + $0xa8] sm:$0xff] %v312
                  %v314 = vld [vmem:[%s268 + $0x134] sm:$0xff]
                  %315 = vst [vmem:[%s269 + $0xb0] sm:$0xff] %v314
                  %v316 = vld [vmem:[%s268 + $0x13c] sm:$0xff]
                  %317 = vst [vmem:[%s269 + $0xb8] sm:$0xff] %v316
                  %v318 = vld [vmem:[%s268 + $0x150] sm:$0xff]
                  %319 = vst [vmem:[%s269 + $0xc0] sm:$0xff] %v318
                  %v320 = vld [vmem:[%s268 + $0x158] sm:$0xff]
                  %321 = vst [vmem:[%s269 + $0xc8] sm:$0xff] %v320
                  %v322 = vld [vmem:[%s268 + $0x16c] sm:$0xff]
                  %323 = vst [vmem:[%s269 + $0xd0] sm:$0xff] %v322
                  %v324 = vld [vmem:[%s268 + $0x174] sm:$0xff]
                  %325 = vst [vmem:[%s269 + $0xd8] sm:$0xff] %v324
                  %v326 = vld [vmem:[%s268 + $0x188] sm:$0xff]
                  %327 = vst [vmem:[%s269 + $0xe0] sm:$0xff] %v326
                  %v328 = vld [vmem:[%s268 + $0x190] sm:$0xff]
                  %329 = vst [vmem:[%s269 + $0xe8] sm:$0xff] %v328
                  %v330 = vld [vmem:[%s268 + $0x1a4] sm:$0xff]
                  %331 = vst [vmem:[%s269 + $0xf0] sm:$0xff] %v330
                  %v332 = vld [vmem:[%s268 + $0x1ac] sm:$0xff]
                  %333 = vst [vmem:[%s269 + $0xf8] sm:$0xff] %v332
                  %v334 = vld [vmem:[%s268 + $0x1c0] sm:$0xff]
                  %335 = vst [vmem:[%s269 + $0x100] sm:$0xff] %v334
                  %v336 = vld [vmem:[%s268 + $0x1c8] sm:$0xff]
                  %337 = vst [vmem:[%s269 + $0x108] sm:$0xff] %v336
                  %v338 = vld [vmem:[%s268 + $0x1dc] sm:$0xff]
                  %339 = vst [vmem:[%s269 + $0x110] sm:$0xff] %v338
                  %v340 = vld [vmem:[%s268 + $0x1e4] sm:$0xff]
                  %341 = vst [vmem:[%s269 + $0x118] sm:$0xff] %v340
                  %v342 = vld [vmem:[%s268 + $0x1f8] sm:$0xff]
                  %343 = vst [vmem:[%s269 + $0x120] sm:$0xff] %v342
                  %v344 = vld [vmem:[%s268 + $0x200] sm:$0xff]
                  %345 = vst [vmem:[%s269 + $0x128] sm:$0xff] %v344
                  %v346 = vld [vmem:[%s268 + $0x214] sm:$0xff]
                  %347 = vst [vmem:[%s269 + $0x130] sm:$0xff] %v346
                  %v348 = vld [vmem:[%s268 + $0x21c] sm:$0xff]
                  %349 = vst [vmem:[%s269 + $0x138] sm:$0xff] %v348
                  %v350 = vld [vmem:[%s268 + $0x230] sm:$0xff]
                  %351 = vst [vmem:[%s269 + $0x140] sm:$0xff] %v350
                  %v352 = vld [vmem:[%s268 + $0x238] sm:$0xff]
                  %353 = vst [vmem:[%s269 + $0x148] sm:$0xff] %v352
                  %v354 = vld [vmem:[%s268 + $0x24c] sm:$0xff]
                  %355 = vst [vmem:[%s269 + $0x150] sm:$0xff] %v354
                  %v356 = vld [vmem:[%s268 + $0x254] sm:$0xff]
                  %357 = vst [vmem:[%s269 + $0x158] sm:$0xff] %v356
                  %v358 = vld [vmem:[%s268 + $0x268] sm:$0xff]
                  %359 = vst [vmem:[%s269 + $0x160] sm:$0xff] %v358
                  %v360 = vld [vmem:[%s268 + $0x270] sm:$0xff]
                  %361 = vst [vmem:[%s269 + $0x168] sm:$0xff] %v360
                  %v362 = vld [vmem:[%s268 + $0x284] sm:$0xff]
                  %363 = vst [vmem:[%s269 + $0x170] sm:$0xff] %v362
                  %v364 = vld [vmem:[%s268 + $0x28c] sm:$0xff]
                  %365 = vst [vmem:[%s269 + $0x178] sm:$0xff] %v364
                  %v366 = vld [vmem:[%s268 + $0x2a0] sm:$0xff]
                  %367 = vst [vmem:[%s269 + $0x180] sm:$0xff] %v366
                  %v368 = vld [vmem:[%s268 + $0x2a8] sm:$0xff]
                  %369 = vst [vmem:[%s269 + $0x188] sm:$0xff] %v368
                  %v370 = vld [vmem:[%s268 + $0x2bc] sm:$0xff]
                  %371 = vst [vmem:[%s269 + $0x190] sm:$0xff] %v370
                  %v372 = vld [vmem:[%s268 + $0x2c4] sm:$0xff]
                  %373 = vst [vmem:[%s269 + $0x198] sm:$0xff] %v372
                  %v374 = vld [vmem:[%s268 + $0x2d8] sm:$0xff]
                  %375 = vst [vmem:[%s269 + $0x1a0] sm:$0xff] %v374
                  %v376 = vld [vmem:[%s268 + $0x2e0] sm:$0xff]
                  %377 = vst [vmem:[%s269 + $0x1a8] sm:$0xff] %v376
                  %v378 = vld [vmem:[%s268 + $0x2f4] sm:$0xff]
                  %379 = vst [vmem:[%s269 + $0x1b0] sm:$0xff] %v378
                  %v380 = vld [vmem:[%s268 + $0x2fc] sm:$0xff]
                  %381 = vst [vmem:[%s269 + $0x1b8] sm:$0xff] %v380
                  %v382 = vld [vmem:[%s268 + $0x310] sm:$0xff]
                  %383 = vst [vmem:[%s269 + $0x1c0] sm:$0xff] %v382
                  %v384 = vld [vmem:[%s268 + $0x318] sm:$0xff]
                  %385 = vst [vmem:[%s269 + $0x1c8] sm:$0xff] %v384
                  %v386 = vld [vmem:[%s268 + $0x32c] sm:$0xff]
                  %387 = vst [vmem:[%s269 + $0x1d0] sm:$0xff] %v386
                  %v388 = vld [vmem:[%s268 + $0x334] sm:$0xff]
                  %389 = vst [vmem:[%s269 + $0x1d8] sm:$0xff] %v388
                  %v390 = vld [vmem:[%s268 + $0x348] sm:$0xff]
                  %391 = vst [vmem:[%s269 + $0x1e0] sm:$0xff] %v390
                  %v392 = vld [vmem:[%s268 + $0x350] sm:$0xff]
                  %393 = vst [vmem:[%s269 + $0x1e8] sm:$0xff] %v392
                  %v394 = vld [vmem:[%s268 + $0x364] sm:$0xff]
                  %395 = vst [vmem:[%s269 + $0x1f0] sm:$0xff] %v394
                  %v396 = vld [vmem:[%s268 + $0x36c] sm:$0xff]
                  %397 = vst [vmem:[%s269 + $0x1f8] sm:$0xff] %v396
                  %s398 = sadd.s32 1, %s267
                  %p399 = scmp.ge.s32.totalorder %s398, %s258
                  %s400 = scalar_select %p399, 0, %s398
                  %s401 = smul.u32 %s400, 16
                  %s402 = smul.u32 %s400, 16
                  %s403 = scalar_lea.vmem %s167, %s401
                  %s404 = scalar_lea.vmem %s159, %s402 [#allocation2]
                $region60: #{model_forward.4} parent=54 // loop_footer
                  %s264 = sadd.s32 %s262, 1
                $region61: #{model_forward.4} parent=54 // loop_footer_branch
                  %261 = sbr.rel target = $region57
                $region62: #{model_forward.4} parent=54 // loop_exit
                  _
                %s405 = sshrl.u32 %s257, 1
                %s406 = sand.u32 %s257, 1
                %s407 = smul.u32 %s405, 2
                %s408 = smul.u32 128, %s407
                %s409 = sshra.s32 %s408, 4
                %s410 = scalar_lea.vmem %s167, %s409
                %s411 = smul.u32 128, %s407
                %s412 = sshra.s32 %s411, 4
                %s413 = scalar_lea.vmem %s159, %s412 [#allocation2]
                // While loop
                $region63: #{model_forward.4} parent=54 // loop_pre_header
                  _
                $region64: #{model_forward.4} parent=54 // loop_header
                  %s417 = sphi 0, %s419
                  %p418 = scmp.ge.s32.totalorder %s417, %s406
                  %s422 = sphi 0, %s491
                  %s423 = sphi %s410, %s494
                  %s424 = sphi %s413, %s495
                $region65: #{model_forward.4} parent=54 // loop_header_branch
                  %421 = sbr.rel (%p418) target = $region69
                $region66: #{model_forward.4} parent=54 // loop_body
                  %v425 = vld [vmem:[%s423] sm:$0xff]
                  %426 = vst [vmem:[%s424] sm:$0xff] %v425
                  %v427 = vld [vmem:[%s423 + $0x1c] sm:$0xff]
                  %428 = vst [vmem:[%s424 + $0x10] sm:$0xff] %v427
                  %v429 = vld [vmem:[%s423 + $0x38] sm:$0xff]
                  %430 = vst [vmem:[%s424 + $0x20] sm:$0xff] %v429
                  %v431 = vld [vmem:[%s423 + $0x54] sm:$0xff]
                  %432 = vst [vmem:[%s424 + $0x30] sm:$0xff] %v431
                  %v433 = vld [vmem:[%s423 + $0x70] sm:$0xff]
                  %434 = vst [vmem:[%s424 + $0x40] sm:$0xff] %v433
                  %v435 = vld [vmem:[%s423 + $0x8c] sm:$0xff]
                  %436 = vst [vmem:[%s424 + $0x50] sm:$0xff] %v435
                  %v437 = vld [vmem:[%s423 + $0xa8] sm:$0xff]
                  %438 = vst [vmem:[%s424 + $0x60] sm:$0xff] %v437
                  %v439 = vld [vmem:[%s423 + $0xc4] sm:$0xff]
                  %440 = vst [vmem:[%s424 + $0x70] sm:$0xff] %v439
                  %v441 = vld [vmem:[%s423 + $0xe0] sm:$0xff]
                  %442 = vst [vmem:[%s424 + $0x80] sm:$0xff] %v441
                  %v443 = vld [vmem:[%s423 + $0xfc] sm:$0xff]
                  %444 = vst [vmem:[%s424 + $0x90] sm:$0xff] %v443
                  %v445 = vld [vmem:[%s423 + $0x118] sm:$0xff]
                  %446 = vst [vmem:[%s424 + $0xa0] sm:$0xff] %v445
                  %v447 = vld [vmem:[%s423 + $0x134] sm:$0xff]
                  %448 = vst [vmem:[%s424 + $0xb0] sm:$0xff] %v447
                  %v449 = vld [vmem:[%s423 + $0x150] sm:$0xff]
                  %450 = vst [vmem:[%s424 + $0xc0] sm:$0xff] %v449
                  %v451 = vld [vmem:[%s423 + $0x16c] sm:$0xff]
                  %452 = vst [vmem:[%s424 + $0xd0] sm:$0xff] %v451
                  %v453 = vld [vmem:[%s423 + $0x188] sm:$0xff]
                  %454 = vst [vmem:[%s424 + $0xe0] sm:$0xff] %v453
                  %v455 = vld [vmem:[%s423 + $0x1a4] sm:$0xff]
                  %456 = vst [vmem:[%s424 + $0xf0] sm:$0xff] %v455
                  %v457 = vld [vmem:[%s423 + $0x1c0] sm:$0xff]
                  %458 = vst [vmem:[%s424 + $0x100] sm:$0xff] %v457
                  %v459 = vld [vmem:[%s423 + $0x1dc] sm:$0xff]
                  %460 = vst [vmem:[%s424 + $0x110] sm:$0xff] %v459
                  %v461 = vld [vmem:[%s423 + $0x1f8] sm:$0xff]
                  %462 = vst [vmem:[%s424 + $0x120] sm:$0xff] %v461
                  %v463 = vld [vmem:[%s423 + $0x214] sm:$0xff]
                  %464 = vst [vmem:[%s424 + $0x130] sm:$0xff] %v463
                  %v465 = vld [vmem:[%s423 + $0x230] sm:$0xff]
                  %466 = vst [vmem:[%s424 + $0x140] sm:$0xff] %v465
                  %v467 = vld [vmem:[%s423 + $0x24c] sm:$0xff]
                  %468 = vst [vmem:[%s424 + $0x150] sm:$0xff] %v467
                  %v469 = vld [vmem:[%s423 + $0x268] sm:$0xff]
                  %470 = vst [vmem:[%s424 + $0x160] sm:$0xff] %v469
                  %v471 = vld [vmem:[%s423 + $0x284] sm:$0xff]
                  %472 = vst [vmem:[%s424 + $0x170] sm:$0xff] %v471
                  %v473 = vld [vmem:[%s423 + $0x2a0] sm:$0xff]
                  %474 = vst [vmem:[%s424 + $0x180] sm:$0xff] %v473
                  %v475 = vld [vmem:[%s423 + $0x2bc] sm:$0xff]
                  %476 = vst [vmem:[%s424 + $0x190] sm:$0xff] %v475
                  %v477 = vld [vmem:[%s423 + $0x2d8] sm:$0xff]
                  %478 = vst [vmem:[%s424 + $0x1a0] sm:$0xff] %v477
                  %v479 = vld [vmem:[%s423 + $0x2f4] sm:$0xff]
                  %480 = vst [vmem:[%s424 + $0x1b0] sm:$0xff] %v479
                  %v481 = vld [vmem:[%s423 + $0x310] sm:$0xff]
                  %482 = vst [vmem:[%s424 + $0x1c0] sm:$0xff] %v481
                  %v483 = vld [vmem:[%s423 + $0x32c] sm:$0xff]
                  %484 = vst [vmem:[%s424 + $0x1d0] sm:$0xff] %v483
                  %v485 = vld [vmem:[%s423 + $0x348] sm:$0xff]
                  %486 = vst [vmem:[%s424 + $0x1e0] sm:$0xff] %v485
                  %v487 = vld [vmem:[%s423 + $0x364] sm:$0xff]
                  %488 = vst [vmem:[%s424 + $0x1f0] sm:$0xff] %v487
                  %s489 = sadd.s32 1, %s422
                  %p490 = scmp.ge.s32.totalorder %s489, %s406
                  %s491 = scalar_select %p490, 0, %s489
                  %s492 = smul.u32 %s491, 8
                  %s493 = smul.u32 %s491, 8
                  %s494 = scalar_lea.vmem %s410, %s492
                  %s495 = scalar_lea.vmem %s413, %s493 [#allocation2]
                $region67: #{model_forward.4} parent=54 // loop_footer
                  %s419 = sadd.s32 %s417, 1
                $region68: #{model_forward.4} parent=54 // loop_footer_branch
                  %416 = sbr.rel target = $region64
                $region69: #{model_forward.4} parent=54 // loop_exit
                  _
              $region55: #{model_forward.4} parent=39 // pred_fallthru
                _
              %p496 = pneg %p253
              // Predicated region
              $region70: #{model_forward.4} parent=39 // pred_check
                _
              $region71: #{model_forward.4} parent=39 // pred_check_branch
                %498 = sbr.rel (%p253) target = $region73
              $region72: #{model_forward.4} parent=39 // pred_region
                %s499 = sand.u32 %s168, 7
                %s500 = ssub.s32 %s168, %s499
                %s501 = scalar_lea.vmem %s167, %s500
                %s502 = ssub.s32 %s168, %s499
                %s503 = scalar_lea.vmem %s159, %s502 [#allocation2]
                %s504 = sshrl.u32 %s168, 3
                %s505 = sshrl.u32 %s504, 1
                // While loop
                $region74: #{model_forward.4} parent=72 // loop_pre_header
                  _
                $region75: #{model_forward.4} parent=72 // loop_header
                  %s509 = sphi 0, %s511
                  %p510 = scmp.ge.s32.totalorder %s509, %s505
                  %s514 = sphi 0, %s647
                  %s515 = sphi %s167, %s650
                  %s516 = sphi %s159, %s651
                $region76: #{model_forward.4} parent=72 // loop_header_branch
                  %513 = sbr.rel (%p510) target = $region80
                $region77: #{model_forward.4} parent=72 // loop_body
                  %v517 = vld [vmem:[%s515] sm:$0xff]
                  %518 = vst [vmem:[%s516] sm:$0xff] %v517
                  %v519 = vld [vmem:[%s515 + $0x8] sm:$0xff]
                  %520 = vst [vmem:[%s516 + $0x8] sm:$0xff] %v519
                  %v521 = vld [vmem:[%s515 + $0x1c] sm:$0xff]
                  %522 = vst [vmem:[%s516 + $0x10] sm:$0xff] %v521
                  %v523 = vld [vmem:[%s515 + $0x24] sm:$0xff]
                  %524 = vst [vmem:[%s516 + $0x18] sm:$0xff] %v523
                  %v525 = vld [vmem:[%s515 + $0x38] sm:$0xff]
                  %526 = vst [vmem:[%s516 + $0x20] sm:$0xff] %v525
                  %v527 = vld [vmem:[%s515 + $0x40] sm:$0xff]
                  %528 = vst [vmem:[%s516 + $0x28] sm:$0xff] %v527
                  %v529 = vld [vmem:[%s515 + $0x54] sm:$0xff]
                  %530 = vst [vmem:[%s516 + $0x30] sm:$0xff] %v529
                  %v531 = vld [vmem:[%s515 + $0x5c] sm:$0xff]
                  %532 = vst [vmem:[%s516 + $0x38] sm:$0xff] %v531
                  %v533 = vld [vmem:[%s515 + $0x70] sm:$0xff]
                  %534 = vst [vmem:[%s516 + $0x40] sm:$0xff] %v533
                  %v535 = vld [vmem:[%s515 + $0x78] sm:$0xff]
                  %536 = vst [vmem:[%s516 + $0x48] sm:$0xff] %v535
                  %v537 = vld [vmem:[%s515 + $0x8c] sm:$0xff]
                  %538 = vst [vmem:[%s516 + $0x50] sm:$0xff] %v537
                  %v539 = vld [vmem:[%s515 + $0x94] sm:$0xff]
                  %540 = vst [vmem:[%s516 + $0x58] sm:$0xff] %v539
                  %v541 = vld [vmem:[%s515 + $0xa8] sm:$0xff]
                  %542 = vst [vmem:[%s516 + $0x60] sm:$0xff] %v541
                  %v543 = vld [vmem:[%s515 + $0xb0] sm:$0xff]
                  %544 = vst [vmem:[%s516 + $0x68] sm:$0xff] %v543
                  %v545 = vld [vmem:[%s515 + $0xc4] sm:$0xff]
                  %546 = vst [vmem:[%s516 + $0x70] sm:$0xff] %v545
                  %v547 = vld [vmem:[%s515 + $0xcc] sm:$0xff]
                  %548 = vst [vmem:[%s516 + $0x78] sm:$0xff] %v547
                  %v549 = vld [vmem:[%s515 + $0xe0] sm:$0xff]
                  %550 = vst [vmem:[%s516 + $0x80] sm:$0xff] %v549
                  %v551 = vld [vmem:[%s515 + $0xe8] sm:$0xff]
                  %552 = vst [vmem:[%s516 + $0x88] sm:$0xff] %v551
                  %v553 = vld [vmem:[%s515 + $0xfc] sm:$0xff]
                  %554 = vst [vmem:[%s516 + $0x90] sm:$0xff] %v553
                  %v555 = vld [vmem:[%s515 + $0x104] sm:$0xff]
                  %556 = vst [vmem:[%s516 + $0x98] sm:$0xff] %v555
                  %v557 = vld [vmem:[%s515 + $0x118] sm:$0xff]
                  %558 = vst [vmem:[%s516 + $0xa0] sm:$0xff] %v557
                  %v559 = vld [vmem:[%s515 + $0x120] sm:$0xff]
                  %560 = vst [vmem:[%s516 + $0xa8] sm:$0xff] %v559
                  %v561 = vld [vmem:[%s515 + $0x134] sm:$0xff]
                  %562 = vst [vmem:[%s516 + $0xb0] sm:$0xff] %v561
                  %v563 = vld [vmem:[%s515 + $0x13c] sm:$0xff]
                  %564 = vst [vmem:[%s516 + $0xb8] sm:$0xff] %v563
                  %v565 = vld [vmem:[%s515 + $0x150] sm:$0xff]
                  %566 = vst [vmem:[%s516 + $0xc0] sm:$0xff] %v565
                  %v567 = vld [vmem:[%s515 + $0x158] sm:$0xff]
                  %568 = vst [vmem:[%s516 + $0xc8] sm:$0xff] %v567
                  %v569 = vld [vmem:[%s515 + $0x16c] sm:$0xff]
                  %570 = vst [vmem:[%s516 + $0xd0] sm:$0xff] %v569
                  %v571 = vld [vmem:[%s515 + $0x174] sm:$0xff]
                  %572 = vst [vmem:[%s516 + $0xd8] sm:$0xff] %v571
                  %v573 = vld [vmem:[%s515 + $0x188] sm:$0xff]
                  %574 = vst [vmem:[%s516 + $0xe0] sm:$0xff] %v573
                  %v575 = vld [vmem:[%s515 + $0x190] sm:$0xff]
                  %576 = vst [vmem:[%s516 + $0xe8] sm:$0xff] %v575
                  %v577 = vld [vmem:[%s515 + $0x1a4] sm:$0xff]
                  %578 = vst [vmem:[%s516 + $0xf0] sm:$0xff] %v577
                  %v579 = vld [vmem:[%s515 + $0x1ac] sm:$0xff]
                  %580 = vst [vmem:[%s516 + $0xf8] sm:$0xff] %v579
                  %v581 = vld [vmem:[%s515 + $0x1c0] sm:$0xff]
                  %582 = vst [vmem:[%s516 + $0x100] sm:$0xff] %v581
                  %v583 = vld [vmem:[%s515 + $0x1c8] sm:$0xff]
                  %584 = vst [vmem:[%s516 + $0x108] sm:$0xff] %v583
                  %v585 = vld [vmem:[%s515 + $0x1dc] sm:$0xff]
                  %586 = vst [vmem:[%s516 + $0x110] sm:$0xff] %v585
                  %v587 = vld [vmem:[%s515 + $0x1e4] sm:$0xff]
                  %588 = vst [vmem:[%s516 + $0x118] sm:$0xff] %v587
                  %v589 = vld [vmem:[%s515 + $0x1f8] sm:$0xff]
                  %590 = vst [vmem:[%s516 + $0x120] sm:$0xff] %v589
                  %v591 = vld [vmem:[%s515 + $0x200] sm:$0xff]
                  %592 = vst [vmem:[%s516 + $0x128] sm:$0xff] %v591
                  %v593 = vld [vmem:[%s515 + $0x214] sm:$0xff]
                  %594 = vst [vmem:[%s516 + $0x130] sm:$0xff] %v593
                  %v595 = vld [vmem:[%s515 + $0x21c] sm:$0xff]
                  %596 = vst [vmem:[%s516 + $0x138] sm:$0xff] %v595
                  %v597 = vld [vmem:[%s515 + $0x230] sm:$0xff]
                  %598 = vst [vmem:[%s516 + $0x140] sm:$0xff] %v597
                  %v599 = vld [vmem:[%s515 + $0x238] sm:$0xff]
                  %600 = vst [vmem:[%s516 + $0x148] sm:$0xff] %v599
                  %v601 = vld [vmem:[%s515 + $0x24c] sm:$0xff]
                  %602 = vst [vmem:[%s516 + $0x150] sm:$0xff] %v601
                  %v603 = vld [vmem:[%s515 + $0x254] sm:$0xff]
                  %604 = vst [vmem:[%s516 + $0x158] sm:$0xff] %v603
                  %v605 = vld [vmem:[%s515 + $0x268] sm:$0xff]
                  %606 = vst [vmem:[%s516 + $0x160] sm:$0xff] %v605
                  %v607 = vld [vmem:[%s515 + $0x270] sm:$0xff]
                  %608 = vst [vmem:[%s516 + $0x168] sm:$0xff] %v607
                  %v609 = vld [vmem:[%s515 + $0x284] sm:$0xff]
                  %610 = vst [vmem:[%s516 + $0x170] sm:$0xff] %v609
                  %v611 = vld [vmem:[%s515 + $0x28c] sm:$0xff]
                  %612 = vst [vmem:[%s516 + $0x178] sm:$0xff] %v611
                  %v613 = vld [vmem:[%s515 + $0x2a0] sm:$0xff]
                  %614 = vst [vmem:[%s516 + $0x180] sm:$0xff] %v613
                  %v615 = vld [vmem:[%s515 + $0x2a8] sm:$0xff]
                  %616 = vst [vmem:[%s516 + $0x188] sm:$0xff] %v615
                  %v617 = vld [vmem:[%s515 + $0x2bc] sm:$0xff]
                  %618 = vst [vmem:[%s516 + $0x190] sm:$0xff] %v617
                  %v619 = vld [vmem:[%s515 + $0x2c4] sm:$0xff]
                  %620 = vst [vmem:[%s516 + $0x198] sm:$0xff] %v619
                  %v621 = vld [vmem:[%s515 + $0x2d8] sm:$0xff]
                  %622 = vst [vmem:[%s516 + $0x1a0] sm:$0xff] %v621
                  %v623 = vld [vmem:[%s515 + $0x2e0] sm:$0xff]
                  %624 = vst [vmem:[%s516 + $0x1a8] sm:$0xff] %v623
                  %v625 = vld [vmem:[%s515 + $0x2f4] sm:$0xff]
                  %626 = vst [vmem:[%s516 + $0x1b0] sm:$0xff] %v625
                  %v627 = vld [vmem:[%s515 + $0x2fc] sm:$0xff]
                  %628 = vst [vmem:[%s516 + $0x1b8] sm:$0xff] %v627
                  %v629 = vld [vmem:[%s515 + $0x310] sm:$0xff]
                  %630 = vst [vmem:[%s516 + $0x1c0] sm:$0xff] %v629
                  %v631 = vld [vmem:[%s515 + $0x318] sm:$0xff]
                  %632 = vst [vmem:[%s516 + $0x1c8] sm:$0xff] %v631
                  %v633 = vld [vmem:[%s515 + $0x32c] sm:$0xff]
                  %634 = vst [vmem:[%s516 + $0x1d0] sm:$0xff] %v633
                  %v635 = vld [vmem:[%s515 + $0x334] sm:$0xff]
                  %636 = vst [vmem:[%s516 + $0x1d8] sm:$0xff] %v635
                  %v637 = vld [vmem:[%s515 + $0x348] sm:$0xff]
                  %638 = vst [vmem:[%s516 + $0x1e0] sm:$0xff] %v637
                  %v639 = vld [vmem:[%s515 + $0x350] sm:$0xff]
                  %640 = vst [vmem:[%s516 + $0x1e8] sm:$0xff] %v639
                  %v641 = vld [vmem:[%s515 + $0x364] sm:$0xff]
                  %642 = vst [vmem:[%s516 + $0x1f0] sm:$0xff] %v641
                  %v643 = vld [vmem:[%s515 + $0x36c] sm:$0xff]
                  %644 = vst [vmem:[%s516 + $0x1f8] sm:$0xff] %v643
                  %s645 = sadd.s32 1, %s514
                  %p646 = scmp.ge.s32.totalorder %s645, %s505
                  %s647 = scalar_select %p646, 0, %s645
                  %s648 = smul.u32 %s647, 16
                  %s649 = smul.u32 %s647, 16
                  %s650 = scalar_lea.vmem %s167, %s648
                  %s651 = scalar_lea.vmem %s159, %s649 [#allocation2]
                $region78: #{model_forward.4} parent=72 // loop_footer
                  %s511 = sadd.s32 %s509, 1
                $region79: #{model_forward.4} parent=72 // loop_footer_branch
                  %508 = sbr.rel target = $region75
                $region80: #{model_forward.4} parent=72 // loop_exit
                  _
                %s652 = sshrl.u32 %s504, 1
                %s653 = sand.u32 %s504, 1
                %s654 = smul.u32 %s652, 2
                %s655 = smul.u32 128, %s654
                %s656 = sshra.s32 %s655, 4
                %s657 = scalar_lea.vmem %s167, %s656
                %s658 = smul.u32 128, %s654
                %s659 = sshra.s32 %s658, 4
                %s660 = scalar_lea.vmem %s159, %s659 [#allocation2]
                // While loop
                $region81: #{model_forward.4} parent=72 // loop_pre_header
                  _
                $region82: #{model_forward.4} parent=72 // loop_header
                  %s664 = sphi 0, %s666
                  %p665 = scmp.ge.s32.totalorder %s664, %s653
                  %s669 = sphi 0, %s738
                  %s670 = sphi %s657, %s741
                  %s671 = sphi %s660, %s742
                $region83: #{model_forward.4} parent=72 // loop_header_branch
                  %668 = sbr.rel (%p665) target = $region87
                $region84: #{model_forward.4} parent=72 // loop_body
                  %v672 = vld [vmem:[%s670] sm:$0xff]
                  %673 = vst [vmem:[%s671] sm:$0xff] %v672
                  %v674 = vld [vmem:[%s670 + $0x1c] sm:$0xff]
                  %675 = vst [vmem:[%s671 + $0x10] sm:$0xff] %v674
                  %v676 = vld [vmem:[%s670 + $0x38] sm:$0xff]
                  %677 = vst [vmem:[%s671 + $0x20] sm:$0xff] %v676
                  %v678 = vld [vmem:[%s670 + $0x54] sm:$0xff]
                  %679 = vst [vmem:[%s671 + $0x30] sm:$0xff] %v678
                  %v680 = vld [vmem:[%s670 + $0x70] sm:$0xff]
                  %681 = vst [vmem:[%s671 + $0x40] sm:$0xff] %v680
                  %v682 = vld [vmem:[%s670 + $0x8c] sm:$0xff]
                  %683 = vst [vmem:[%s671 + $0x50] sm:$0xff] %v682
                  %v684 = vld [vmem:[%s670 + $0xa8] sm:$0xff]
                  %685 = vst [vmem:[%s671 + $0x60] sm:$0xff] %v684
                  %v686 = vld [vmem:[%s670 + $0xc4] sm:$0xff]
                  %687 = vst [vmem:[%s671 + $0x70] sm:$0xff] %v686
                  %v688 = vld [vmem:[%s670 + $0xe0] sm:$0xff]
                  %689 = vst [vmem:[%s671 + $0x80] sm:$0xff] %v688
                  %v690 = vld [vmem:[%s670 + $0xfc] sm:$0xff]
                  %691 = vst [vmem:[%s671 + $0x90] sm:$0xff] %v690
                  %v692 = vld [vmem:[%s670 + $0x118] sm:$0xff]
                  %693 = vst [vmem:[%s671 + $0xa0] sm:$0xff] %v692
                  %v694 = vld [vmem:[%s670 + $0x134] sm:$0xff]
                  %695 = vst [vmem:[%s671 + $0xb0] sm:$0xff] %v694
                  %v696 = vld [vmem:[%s670 + $0x150] sm:$0xff]
                  %697 = vst [vmem:[%s671 + $0xc0] sm:$0xff] %v696
                  %v698 = vld [vmem:[%s670 + $0x16c] sm:$0xff]
                  %699 = vst [vmem:[%s671 + $0xd0] sm:$0xff] %v698
                  %v700 = vld [vmem:[%s670 + $0x188] sm:$0xff]
                  %701 = vst [vmem:[%s671 + $0xe0] sm:$0xff] %v700
                  %v702 = vld [vmem:[%s670 + $0x1a4] sm:$0xff]
                  %703 = vst [vmem:[%s671 + $0xf0] sm:$0xff] %v702
                  %v704 = vld [vmem:[%s670 + $0x1c0] sm:$0xff]
                  %705 = vst [vmem:[%s671 + $0x100] sm:$0xff] %v704
                  %v706 = vld [vmem:[%s670 + $0x1dc] sm:$0xff]
                  %707 = vst [vmem:[%s671 + $0x110] sm:$0xff] %v706
                  %v708 = vld [vmem:[%s670 + $0x1f8] sm:$0xff]
                  %709 = vst [vmem:[%s671 + $0x120] sm:$0xff] %v708
                  %v710 = vld [vmem:[%s670 + $0x214] sm:$0xff]
                  %711 = vst [vmem:[%s671 + $0x130] sm:$0xff] %v710
                  %v712 = vld [vmem:[%s670 + $0x230] sm:$0xff]
                  %713 = vst [vmem:[%s671 + $0x140] sm:$0xff] %v712
                  %v714 = vld [vmem:[%s670 + $0x24c] sm:$0xff]
                  %715 = vst [vmem:[%s671 + $0x150] sm:$0xff] %v714
                  %v716 = vld [vmem:[%s670 + $0x268] sm:$0xff]
                  %717 = vst [vmem:[%s671 + $0x160] sm:$0xff] %v716
                  %v718 = vld [vmem:[%s670 + $0x284] sm:$0xff]
                  %719 = vst [vmem:[%s671 + $0x170] sm:$0xff] %v718
                  %v720 = vld [vmem:[%s670 + $0x2a0] sm:$0xff]
                  %721 = vst [vmem:[%s671 + $0x180] sm:$0xff] %v720
                  %v722 = vld [vmem:[%s670 + $0x2bc] sm:$0xff]
                  %723 = vst [vmem:[%s671 + $0x190] sm:$0xff] %v722
                  %v724 = vld [vmem:[%s670 + $0x2d8] sm:$0xff]
                  %725 = vst [vmem:[%s671 + $0x1a0] sm:$0xff] %v724
                  %v726 = vld [vmem:[%s670 + $0x2f4] sm:$0xff]
                  %727 = vst [vmem:[%s671 + $0x1b0] sm:$0xff] %v726
                  %v728 = vld [vmem:[%s670 + $0x310] sm:$0xff]
                  %729 = vst [vmem:[%s671 + $0x1c0] sm:$0xff] %v728
                  %v730 = vld [vmem:[%s670 + $0x32c] sm:$0xff]
                  %731 = vst [vmem:[%s671 + $0x1d0] sm:$0xff] %v730
                  %v732 = vld [vmem:[%s670 + $0x348] sm:$0xff]
                  %733 = vst [vmem:[%s671 + $0x1e0] sm:$0xff] %v732
                  %v734 = vld [vmem:[%s670 + $0x364] sm:$0xff]
                  %735 = vst [vmem:[%s671 + $0x1f0] sm:$0xff] %v734
                  %s736 = sadd.s32 1, %s669
                  %p737 = scmp.ge.s32.totalorder %s736, %s653
                  %s738 = scalar_select %p737, 0, %s736
                  %s739 = smul.u32 %s738, 8
                  %s740 = smul.u32 %s738, 8
                  %s741 = scalar_lea.vmem %s657, %s739
                  %s742 = scalar_lea.vmem %s660, %s740 [#allocation2]
                $region85: #{model_forward.4} parent=72 // loop_footer
                  %s666 = sadd.s32 %s664, 1
                $region86: #{model_forward.4} parent=72 // loop_footer_branch
                  %663 = sbr.rel target = $region82
                $region87: #{model_forward.4} parent=72 // loop_exit
                  _
                %s743 = sshllo.u32 0, %s499
                loop: start=0, step=1, limit=1
                $region88: #{model_forward.4} parent=72 // loop_pre_header
                  _
                $region89: #{model_forward.4} parent=72 // loop_header
                  %s745 = sphi 0, %s749
                  %p746 = scmp.ge.s32.totalorder %s745, 1
                  %s750 = sphi %s501, %s501
                  %s751 = sphi %s503, %s503
                $region90: #{model_forward.4} parent=72 // loop_header_branch
                  %748 = sbr.rel (%p746) target = $region94
                $region91: #{model_forward.4} parent=72 // loop_body
                  %v752 = vld [vmem:[%s750] sm:%s743]
                  %753 = vst [vmem:[%s751] sm:%s743] %v752
                  %v754 = vld [vmem:[%s750 + $0x1c] sm:%s743]
                  %755 = vst [vmem:[%s751 + $0x10] sm:%s743] %v754
                  %v756 = vld [vmem:[%s750 + $0x38] sm:%s743]
                  %757 = vst [vmem:[%s751 + $0x20] sm:%s743] %v756
                  %v758 = vld [vmem:[%s750 + $0x54] sm:%s743]
                  %759 = vst [vmem:[%s751 + $0x30] sm:%s743] %v758
                  %v760 = vld [vmem:[%s750 + $0x70] sm:%s743]
                  %761 = vst [vmem:[%s751 + $0x40] sm:%s743] %v760
                  %v762 = vld [vmem:[%s750 + $0x8c] sm:%s743]
                  %763 = vst [vmem:[%s751 + $0x50] sm:%s743] %v762
                  %v764 = vld [vmem:[%s750 + $0xa8] sm:%s743]
                  %765 = vst [vmem:[%s751 + $0x60] sm:%s743] %v764
                  %v766 = vld [vmem:[%s750 + $0xc4] sm:%s743]
                  %767 = vst [vmem:[%s751 + $0x70] sm:%s743] %v766
                  %v768 = vld [vmem:[%s750 + $0xe0] sm:%s743]
                  %769 = vst [vmem:[%s751 + $0x80] sm:%s743] %v768
                  %v770 = vld [vmem:[%s750 + $0xfc] sm:%s743]
                  %771 = vst [vmem:[%s751 + $0x90] sm:%s743] %v770
                  %v772 = vld [vmem:[%s750 + $0x118] sm:%s743]
                  %773 = vst [vmem:[%s751 + $0xa0] sm:%s743] %v772
                  %v774 = vld [vmem:[%s750 + $0x134] sm:%s743]
                  %775 = vst [vmem:[%s751 + $0xb0] sm:%s743] %v774
                  %v776 = vld [vmem:[%s750 + $0x150] sm:%s743]
                  %777 = vst [vmem:[%s751 + $0xc0] sm:%s743] %v776
                  %v778 = vld [vmem:[%s750 + $0x16c] sm:%s743]
                  %779 = vst [vmem:[%s751 + $0xd0] sm:%s743] %v778
                  %v780 = vld [vmem:[%s750 + $0x188] sm:%s743]
                  %781 = vst [vmem:[%s751 + $0xe0] sm:%s743] %v780
                  %v782 = vld [vmem:[%s750 + $0x1a4] sm:%s743]
                  %783 = vst [vmem:[%s751 + $0xf0] sm:%s743] %v782
                  %v784 = vld [vmem:[%s750 + $0x1c0] sm:%s743]
                  %785 = vst [vmem:[%s751 + $0x100] sm:%s743] %v784
                  %v786 = vld [vmem:[%s750 + $0x1dc] sm:%s743]
                  %787 = vst [vmem:[%s751 + $0x110] sm:%s743] %v786
                  %v788 = vld [vmem:[%s750 + $0x1f8] sm:%s743]
                  %789 = vst [vmem:[%s751 + $0x120] sm:%s743] %v788
                  %v790 = vld [vmem:[%s750 + $0x214] sm:%s743]
                  %791 = vst [vmem:[%s751 + $0x130] sm:%s743] %v790
                  %v792 = vld [vmem:[%s750 + $0x230] sm:%s743]
                  %793 = vst [vmem:[%s751 + $0x140] sm:%s743] %v792
                  %v794 = vld [vmem:[%s750 + $0x24c] sm:%s743]
                  %795 = vst [vmem:[%s751 + $0x150] sm:%s743] %v794
                  %v796 = vld [vmem:[%s750 + $0x268] sm:%s743]
                  %797 = vst [vmem:[%s751 + $0x160] sm:%s743] %v796
                  %v798 = vld [vmem:[%s750 + $0x284] sm:%s743]
                  %799 = vst [vmem:[%s751 + $0x170] sm:%s743] %v798
                  %v800 = vld [vmem:[%s750 + $0x2a0] sm:%s743]
                  %801 = vst [vmem:[%s751 + $0x180] sm:%s743] %v800
                  %v802 = vld [vmem:[%s750 + $0x2bc] sm:%s743]
                  %803 = vst [vmem:[%s751 + $0x190] sm:%s743] %v802
                  %v804 = vld [vmem:[%s750 + $0x2d8] sm:%s743]
                  %805 = vst [vmem:[%s751 + $0x1a0] sm:%s743] %v804
                  %v806 = vld [vmem:[%s750 + $0x2f4] sm:%s743]
                  %807 = vst [vmem:[%s751 + $0x1b0] sm:%s743] %v806
                  %v808 = vld [vmem:[%s750 + $0x310] sm:%s743]
                  %809 = vst [vmem:[%s751 + $0x1c0] sm:%s743] %v808
                  %v810 = vld [vmem:[%s750 + $0x32c] sm:%s743]
                  %811 = vst [vmem:[%s751 + $0x1d0] sm:%s743] %v810
                  %v812 = vld [vmem:[%s750 + $0x348] sm:%s743]
                  %813 = vst [vmem:[%s751 + $0x1e0] sm:%s743] %v812
                  %v814 = vld [vmem:[%s750 + $0x364] sm:%s743]
                  %815 = vst [vmem:[%s751 + $0x1f0] sm:%s743] %v814
                $region92: #{model_forward.4} parent=72 // loop_footer
                  %s749 = sadd.s32 1, %s745
                $region93: #{model_forward.4} parent=72 // loop_footer_branch
                  %744 = sbr.rel target = $region89
                $region94: #{model_forward.4} parent=72 // loop_exit
                  _
              $region73: #{model_forward.4} parent=39 // pred_fallthru
                _
            $region40: #{model_forward.4} parent=35 // pred_fallthru
              _
            // Predicated region
            $region41: #{model_forward.4} parent=35 // pred_check
              %p176 = pneg %p172
            $region42: #{model_forward.4} parent=35 // pred_check_branch
              %178 = sbr.rel (%p176) target = $region44
            $region43: #{model_forward.4} parent=35 // pred_region
              %s179 = sshllo.u32 0, %s168
              loop: start=0, step=1, limit=1
              $region45: #{model_forward.4} parent=43 // loop_pre_header
                _
              $region46: #{model_forward.4} parent=43 // loop_header
                %s181 = sphi 0, %s185
                %p182 = scmp.ge.s32.totalorder %s181, 1
                %s186 = sphi %s167, %s167
                %s187 = sphi %s159, %s159
              $region47: #{model_forward.4} parent=43 // loop_header_branch
                %184 = sbr.rel (%p182) target = $region51
              $region48: #{model_forward.4} parent=43 // loop_body
                %v188 = vld [vmem:[%s186] sm:%s179]
                %189 = vst [vmem:[%s187] sm:%s179] %v188
                %v190 = vld [vmem:[%s186 + $0x1c] sm:%s179]
                %191 = vst [vmem:[%s187 + $0x10] sm:%s179] %v190
                %v192 = vld [vmem:[%s186 + $0x38] sm:%s179]
                %193 = vst [vmem:[%s187 + $0x20] sm:%s179] %v192
                %v194 = vld [vmem:[%s186 + $0x54] sm:%s179]
                %195 = vst [vmem:[%s187 + $0x30] sm:%s179] %v194
                %v196 = vld [vmem:[%s186 + $0x70] sm:%s179]
                %197 = vst [vmem:[%s187 + $0x40] sm:%s179] %v196
                %v198 = vld [vmem:[%s186 + $0x8c] sm:%s179]
                %199 = vst [vmem:[%s187 + $0x50] sm:%s179] %v198
                %v200 = vld [vmem:[%s186 + $0xa8] sm:%s179]
                %201 = vst [vmem:[%s187 + $0x60] sm:%s179] %v200
                %v202 = vld [vmem:[%s186 + $0xc4] sm:%s179]
                %203 = vst [vmem:[%s187 + $0x70] sm:%s179] %v202
                %v204 = vld [vmem:[%s186 + $0xe0] sm:%s179]
                %205 = vst [vmem:[%s187 + $0x80] sm:%s179] %v204
                %v206 = vld [vmem:[%s186 + $0xfc] sm:%s179]
                %207 = vst [vmem:[%s187 + $0x90] sm:%s179] %v206
                %v208 = vld [vmem:[%s186 + $0x118] sm:%s179]
                %209 = vst [vmem:[%s187 + $0xa0] sm:%s179] %v208
                %v210 = vld [vmem:[%s186 + $0x134] sm:%s179]
                %211 = vst [vmem:[%s187 + $0xb0] sm:%s179] %v210
                %v212 = vld [vmem:[%s186 + $0x150] sm:%s179]
                %213 = vst [vmem:[%s187 + $0xc0] sm:%s179] %v212
                %v214 = vld [vmem:[%s186 + $0x16c] sm:%s179]
                %215 = vst [vmem:[%s187 + $0xd0] sm:%s179] %v214
                %v216 = vld [vmem:[%s186 + $0x188] sm:%s179]
                %217 = vst [vmem:[%s187 + $0xe0] sm:%s179] %v216
                %v218 = vld [vmem:[%s186 + $0x1a4] sm:%s179]
                %219 = vst [vmem:[%s187 + $0xf0] sm:%s179] %v218
                %v220 = vld [vmem:[%s186 + $0x1c0] sm:%s179]
                %221 = vst [vmem:[%s187 + $0x100] sm:%s179] %v220
                %v222 = vld [vmem:[%s186 + $0x1dc] sm:%s179]
                %223 = vst [vmem:[%s187 + $0x110] sm:%s179] %v222
                %v224 = vld [vmem:[%s186 + $0x1f8] sm:%s179]
                %225 = vst [vmem:[%s187 + $0x120] sm:%s179] %v224
                %v226 = vld [vmem:[%s186 + $0x214] sm:%s179]
                %227 = vst [vmem:[%s187 + $0x130] sm:%s179] %v226
                %v228 = vld [vmem:[%s186 + $0x230] sm:%s179]
                %229 = vst [vmem:[%s187 + $0x140] sm:%s179] %v228
                %v230 = vld [vmem:[%s186 + $0x24c] sm:%s179]
                %231 = vst [vmem:[%s187 + $0x150] sm:%s179] %v230
                %v232 = vld [vmem:[%s186 + $0x268] sm:%s179]
                %233 = vst [vmem:[%s187 + $0x160] sm:%s179] %v232
                %v234 = vld [vmem:[%s186 + $0x284] sm:%s179]
                %235 = vst [vmem:[%s187 + $0x170] sm:%s179] %v234
                %v236 = vld [vmem:[%s186 + $0x2a0] sm:%s179]
                %237 = vst [vmem:[%s187 + $0x180] sm:%s179] %v236
                %v238 = vld [vmem:[%s186 + $0x2bc] sm:%s179]
                %239 = vst [vmem:[%s187 + $0x190] sm:%s179] %v238
                %v240 = vld [vmem:[%s186 + $0x2d8] sm:%s179]
                %241 = vst [vmem:[%s187 + $0x1a0] sm:%s179] %v240
                %v242 = vld [vmem:[%s186 + $0x2f4] sm:%s179]
                %243 = vst [vmem:[%s187 + $0x1b0] sm:%s179] %v242
                %v244 = vld [vmem:[%s186 + $0x310] sm:%s179]
                %245 = vst [vmem:[%s187 + $0x1c0] sm:%s179] %v244
                %v246 = vld [vmem:[%s186 + $0x32c] sm:%s179]
                %247 = vst [vmem:[%s187 + $0x1d0] sm:%s179] %v246
                %v248 = vld [vmem:[%s186 + $0x348] sm:%s179]
                %249 = vst [vmem:[%s187 + $0x1e0] sm:%s179] %v248
                %v250 = vld [vmem:[%s186 + $0x364] sm:%s179]
                %251 = vst [vmem:[%s187 + $0x1f0] sm:%s179] %v250
              $region49: #{model_forward.4} parent=43 // loop_footer
                %s185 = sadd.s32 1, %s181
              $region50: #{model_forward.4} parent=43 // loop_footer_branch
                %180 = sbr.rel target = $region46
              $region51: #{model_forward.4} parent=43 // loop_exit
                _
            $region44: #{model_forward.4} parent=35 // pred_fallthru
              _
          $region36: #{model_forward.4} parent=31 // pred_fallthru
            _
          %816 = vnop
        $region32: #{model_forward.4} parent=27 // pred_fallthru
          _
      $region28: #{model_forward.4} parent=5 // pred_fallthru
        _
      %p817 = scmp.le.s32.totalorder 1, %s10
      %p818 = scmp.lt.s32.totalorder %s10, 3
      %p819 = pnand %p817, %p818
      %p820 = pneg %p819
      // Predicated region
      $region95: #{model_forward.4} parent=5 // pred_check
        _
      $region96: #{model_forward.4} parent=5 // pred_check_branch
        %822 = sbr.rel (%p819) target = $region98
      $region97: #{model_forward.4} parent=5 // pred_region
        %s823 = ssub.s32 %s10, 1
        %s824 = sand.u32 %s23, 1
        %s825 = sand.u32 %s23, 1
        %s826 = smul.addr %s825, 512
        %s827 = scalar_lea.vmem [#allocation2], %s826
        // Predicated region
        $region99: #{model_forward.4} parent=97 // pred_check
          %p828 = pneg %p36
        $region100: #{model_forward.4} parent=97 // pred_check_branch
          %830 = sbr.rel (%p828) target = $region102
        $region101: #{model_forward.4} parent=97 // pred_region
          _
        $region102: #{model_forward.4} parent=97 // pred_fallthru
          _
        %s831 = sand.u32 %s23, 1
        %s832 = sand.u32 %s23, 1
        %s833 = smul.addr %s832, 512
        %s834 = scalar_lea.vmem [#allocation2], %s833
        %p835 = pneg %p36
        %p836 = pneg %p33
        %p837 = pneg %p57
        %p838 = pneg %p54
        %p839 = pneg %p78
        %p840 = pneg %p75
        %p841 = pneg %p99
        %p842 = pneg %p96
        %p843 = pneg %p125
        %p844 = pneg %p122
        %s845 = sand.u32 %s112, 1
        %s846 = sand.u32 %s112, 1
        %s847 = smul.addr %s846, 64
        %s848 = scalar_lea.vmem [#allocation3], %s847
        %s849 = smul.u32 4, %s15
        %s850 = ssub.s32 7, %s849
        %p851 = scmp.lt.s32.totalorder %s850, 4
        %s852 = scalar_select %p851, %s850, 4
        %s853 = smul.u32 2048, %s852
        %s854 = smul.u32 4, %s15
        %s855 = ssub.s32 7, %s854
        %p856 = scmp.lt.s32.totalorder %s855, 4
        %s857 = scalar_select %p856, %s855, 4
        %s858 = smul.u32 256, %s857
        %v859 = vld [vmem:[%s1] sm:$0xff]
        %v860 = vld [vmem:[%s1 + $0x8] sm:$0xff]
        %v861 = vld [vmem:[%s1 + $0x10] sm:$0xff]
        %v862 = vld [vmem:[%s1 + $0x18] sm:$0xff]
        %v863 = vld [vmem:[%s827] sm:$0xff]
        %v864 = vld [vmem:[%s827 + $0x8] sm:$0xff]
        %v865 = vld [vmem:[%s827 + $0x10] sm:$0xff]
        %v866 = vld [vmem:[%s827 + $0x18] sm:$0xff]
        %v867 = vld [vmem:[%s827 + $0x20] sm:$0xff]
        %v868 = vld [vmem:[%s827 + $0x28] sm:$0xff]
        %v869 = vld [vmem:[%s827 + $0x30] sm:$0xff]
        %v870 = vld [vmem:[%s827 + $0x38] sm:$0xff]
        %v871 = vld [vmem:[%s827 + $0x40] sm:$0xff]
        %v872 = vld [vmem:[%s827 + $0x48] sm:$0xff]
        %v873 = vld [vmem:[%s827 + $0x50] sm:$0xff]
        %v874 = vld [vmem:[%s827 + $0x58] sm:$0xff]
        %v875 = vld [vmem:[%s827 + $0x60] sm:$0xff]
        %v876 = vld [vmem:[%s827 + $0x68] sm:$0xff]
        %v877 = vld [vmem:[%s827 + $0x70] sm:$0xff]
        %v878 = vld [vmem:[%s827 + $0x78] sm:$0xff]
        %v879 = vld [vmem:[%s827 + $0x80] sm:$0xff]
        %v880 = vld [vmem:[%s827 + $0x88] sm:$0xff]
        %v881 = vld [vmem:[%s827 + $0x90] sm:$0xff]
        %v882 = vld [vmem:[%s827 + $0x98] sm:$0xff]
        %v883 = vld [vmem:[%s827 + $0xa0] sm:$0xff]
        %v884 = vld [vmem:[%s827 + $0xa8] sm:$0xff]
        %v885 = vld [vmem:[%s827 + $0xb0] sm:$0xff]
        %v886 = vld [vmem:[%s827 + $0xb8] sm:$0xff]
        %v887 = vld [vmem:[%s827 + $0xc0] sm:$0xff]
        %v888 = vld [vmem:[%s827 + $0xc8] sm:$0xff]
        %v889 = vld [vmem:[%s827 + $0xd0] sm:$0xff]
        %v890 = vld [vmem:[%s827 + $0xd8] sm:$0xff]
        %v891 = vld [vmem:[%s827 + $0xe0] sm:$0xff]
        %v892 = vld [vmem:[%s827 + $0xe8] sm:$0xff]
        %v893 = vld [vmem:[%s827 + $0xf0] sm:$0xff]
        %v894 = vld [vmem:[%s827 + $0xf8] sm:$0xff]
        %v895 = vld [vmem:[%s827 + $0x100] sm:$0xff]
        %v896 = vld [vmem:[%s827 + $0x108] sm:$0xff]
        %v897 = vld [vmem:[%s827 + $0x110] sm:$0xff]
        %v898 = vld [vmem:[%s827 + $0x118] sm:$0xff]
        %v899 = vld [vmem:[%s827 + $0x120] sm:$0xff]
        %v900 = vld [vmem:[%s827 + $0x128] sm:$0xff]
        %v901 = vld [vmem:[%s827 + $0x130] sm:$0xff]
        %v902 = vld [vmem:[%s827 + $0x138] sm:$0xff]
        %v903 = vld [vmem:[%s827 + $0x140] sm:$0xff]
        %v904 = vld [vmem:[%s827 + $0x148] sm:$0xff]
        %v905 = vld [vmem:[%s827 + $0x150] sm:$0xff]
        %v906 = vld [vmem:[%s827 + $0x158] sm:$0xff]
        %v907 = vld [vmem:[%s827 + $0x160] sm:$0xff]
        %v908 = vld [vmem:[%s827 + $0x168] sm:$0xff]
        %v909 = vld [vmem:[%s827 + $0x170] sm:$0xff]
        %v910 = vld [vmem:[%s827 + $0x178] sm:$0xff]
        %v911 = vld [vmem:[%s827 + $0x180] sm:$0xff]
        %v912 = vld [vmem:[%s827 + $0x188] sm:$0xff]
        %v913 = vld [vmem:[%s827 + $0x190] sm:$0xff]
        %v914 = vld [vmem:[%s827 + $0x198] sm:$0xff]
        %v915 = vld [vmem:[%s827 + $0x1a0] sm:$0xff]
        %v916 = vld [vmem:[%s827 + $0x1a8] sm:$0xff]
        %v917 = vld [vmem:[%s827 + $0x1b0] sm:$0xff]
        %v918 = vld [vmem:[%s827 + $0x1b8] sm:$0xff]
        %v919 = vld [vmem:[%s827 + $0x1c0] sm:$0xff]
        %v920 = vld [vmem:[%s827 + $0x1c8] sm:$0xff]
        %v921 = vld [vmem:[%s827 + $0x1d0] sm:$0xff]
        %v922 = vld [vmem:[%s827 + $0x1d8] sm:$0xff]
        %v923 = vld [vmem:[%s827 + $0x1e0] sm:$0xff]
        %v924 = vld [vmem:[%s827 + $0x1e8] sm:$0xff]
        %v925 = vld [vmem:[%s827 + $0x1f0] sm:$0xff]
        %v926 = vld [vmem:[%s827 + $0x1f8] sm:$0xff]
        %v931 = vunpack.c.l.b16 %v859
        %v932 = vunpack.c.h.b16 %v859
        %v933 = vunpack.c.l.b16 %v860
        %v934 = vunpack.c.h.b16 %v860
        %v935 = vunpack.c.l.b16 %v861
        %v936 = vunpack.c.h.b16 %v861
        %v937 = vunpack.c.l.b16 %v862
        %v938 = vunpack.c.h.b16 %v862
        %v939 = vpack.c.b16 %v933, %v931
        %v940 = vpack.c.b16 %v934, %v932
        %v941 = vpack.c.b16 %v937, %v935
        %v942 = vpack.c.b16 %v938, %v936
        %v1011 = vunpack.c.l.b16 %v863
        %v1012 = vunpack.c.h.b16 %v863
        %v1013 = vunpack.c.l.b16 %v864
        %v1014 = vunpack.c.h.b16 %v864
        %v1015 = vunpack.c.l.b16 %v865
        %v1016 = vunpack.c.h.b16 %v865
        %v1017 = vunpack.c.l.b16 %v866
        %v1018 = vunpack.c.h.b16 %v866
        %v1019 = vunpack.c.l.b16 %v867
        %v1020 = vunpack.c.h.b16 %v867
        %v1021 = vunpack.c.l.b16 %v868
        %v1022 = vunpack.c.h.b16 %v868
        %v1023 = vunpack.c.l.b16 %v869
        %v1024 = vunpack.c.h.b16 %v869
        %v1025 = vunpack.c.l.b16 %v870
        %v1026 = vunpack.c.h.b16 %v870
        %v1027 = vunpack.c.l.b16 %v871
        %v1028 = vunpack.c.h.b16 %v871
        %v1029 = vunpack.c.l.b16 %v872
        %v1030 = vunpack.c.h.b16 %v872
        %v1031 = vunpack.c.l.b16 %v873
        %v1032 = vunpack.c.h.b16 %v873
        %v1033 = vunpack.c.l.b16 %v874
        %v1034 = vunpack.c.h.b16 %v874
        %v1035 = vunpack.c.l.b16 %v875
        %v1036 = vunpack.c.h.b16 %v875
        %v1037 = vunpack.c.l.b16 %v876
        %v1038 = vunpack.c.h.b16 %v876
        %v1039 = vunpack.c.l.b16 %v877
        %v1040 = vunpack.c.h.b16 %v877
        %v1041 = vunpack.c.l.b16 %v878
        %v1042 = vunpack.c.h.b16 %v878
        %v1043 = vunpack.c.l.b16 %v879
        %v1044 = vunpack.c.h.b16 %v879
        %v1045 = vunpack.c.l.b16 %v880
        %v1046 = vunpack.c.h.b16 %v880
        %v1047 = vunpack.c.l.b16 %v881
        %v1048 = vunpack.c.h.b16 %v881
        %v1049 = vunpack.c.l.b16 %v882
        %v1050 = vunpack.c.h.b16 %v882
        %v1051 = vunpack.c.l.b16 %v883
        %v1052 = vunpack.c.h.b16 %v883
        %v1053 = vunpack.c.l.b16 %v884
        %v1054 = vunpack.c.h.b16 %v884
        %v1055 = vunpack.c.l.b16 %v885
        %v1056 = vunpack.c.h.b16 %v885
        %v1057 = vunpack.c.l.b16 %v886
        %v1058 = vunpack.c.h.b16 %v886
        %v1059 = vunpack.c.l.b16 %v887
        %v1060 = vunpack.c.h.b16 %v887
        %v1061 = vunpack.c.l.b16 %v888
        %v1062 = vunpack.c.h.b16 %v888
        %v1063 = vunpack.c.l.b16 %v889
        %v1064 = vunpack.c.h.b16 %v889
        %v1065 = vunpack.c.l.b16 %v890
        %v1066 = vunpack.c.h.b16 %v890
        %v1067 = vunpack.c.l.b16 %v891
        %v1068 = vunpack.c.h.b16 %v891
        %v1069 = vunpack.c.l.b16 %v892
        %v1070 = vunpack.c.h.b16 %v892
        %v1071 = vunpack.c.l.b16 %v893
        %v1072 = vunpack.c.h.b16 %v893
        %v1073 = vunpack.c.l.b16 %v894
        %v1074 = vunpack.c.h.b16 %v894
        %v1075 = vunpack.c.l.b16 %v895
        %v1076 = vunpack.c.h.b16 %v895
        %v1077 = vunpack.c.l.b16 %v896
        %v1078 = vunpack.c.h.b16 %v896
        %v1079 = vunpack.c.l.b16 %v897
        %v1080 = vunpack.c.h.b16 %v897
        %v1081 = vunpack.c.l.b16 %v898
        %v1082 = vunpack.c.h.b16 %v898
        %v1083 = vunpack.c.l.b16 %v899
        %v1084 = vunpack.c.h.b16 %v899
        %v1085 = vunpack.c.l.b16 %v900
        %v1086 = vunpack.c.h.b16 %v900
        %v1087 = vunpack.c.l.b16 %v901
        %v1088 = vunpack.c.h.b16 %v901
        %v1089 = vunpack.c.l.b16 %v902
        %v1090 = vunpack.c.h.b16 %v902
        %v1091 = vunpack.c.l.b16 %v903
        %v1092 = vunpack.c.h.b16 %v903
        %v1093 = vunpack.c.l.b16 %v904
        %v1094 = vunpack.c.h.b16 %v904
        %v1095 = vunpack.c.l.b16 %v905
        %v1096 = vunpack.c.h.b16 %v905
        %v1097 = vunpack.c.l.b16 %v906
        %v1098 = vunpack.c.h.b16 %v906
        %v1099 = vunpack.c.l.b16 %v907
        %v1100 = vunpack.c.h.b16 %v907
        %v1101 = vunpack.c.l.b16 %v908
        %v1102 = vunpack.c.h.b16 %v908
        %v1103 = vunpack.c.l.b16 %v909
        %v1104 = vunpack.c.h.b16 %v909
        %v1105 = vunpack.c.l.b16 %v910
        %v1106 = vunpack.c.h.b16 %v910
        %v1107 = vunpack.c.l.b16 %v911
        %v1108 = vunpack.c.h.b16 %v911
        %v1109 = vunpack.c.l.b16 %v912
        %v1110 = vunpack.c.h.b16 %v912
        %v1111 = vunpack.c.l.b16 %v913
        %v1112 = vunpack.c.h.b16 %v913
        %v1113 = vunpack.c.l.b16 %v914
        %v1114 = vunpack.c.h.b16 %v914
        %v1115 = vunpack.c.l.b16 %v915
        %v1116 = vunpack.c.h.b16 %v915
        %v1117 = vunpack.c.l.b16 %v916
        %v1118 = vunpack.c.h.b16 %v916
        %v1119 = vunpack.c.l.b16 %v917
        %v1120 = vunpack.c.h.b16 %v917
        %v1121 = vunpack.c.l.b16 %v918
        %v1122 = vunpack.c.h.b16 %v918
        %v1123 = vunpack.c.l.b16 %v919
        %v1124 = vunpack.c.h.b16 %v919
        %v1125 = vunpack.c.l.b16 %v920
        %v1126 = vunpack.c.h.b16 %v920
        %v1127 = vunpack.c.l.b16 %v921
        %v1128 = vunpack.c.h.b16 %v921
        %v1129 = vunpack.c.l.b16 %v922
        %v1130 = vunpack.c.h.b16 %v922
        %v1131 = vunpack.c.l.b16 %v923
        %v1132 = vunpack.c.h.b16 %v923
        %v1133 = vunpack.c.l.b16 %v924
        %v1134 = vunpack.c.h.b16 %v924
        %v1135 = vunpack.c.l.b16 %v925
        %v1136 = vunpack.c.h.b16 %v925
        %v1137 = vunpack.c.l.b16 %v926
        %v1138 = vunpack.c.h.b16 %v926
        %v1139 = vpack.c.b16 %v1015, %v1011
        %v1140 = vpack.c.b16 %v1016, %v1012
        %v1141 = vpack.c.b16 %v1017, %v1013
        %v1142 = vpack.c.b16 %v1018, %v1014
        %v1143 = vpack.c.b16 %v1023, %v1019
        %v1144 = vpack.c.b16 %v1024, %v1020
        %v1145 = vpack.c.b16 %v1025, %v1021
        %v1146 = vpack.c.b16 %v1026, %v1022
        %v1147 = vpack.c.b16 %v1031, %v1027
        %v1148 = vpack.c.b16 %v1032, %v1028
        %v1149 = vpack.c.b16 %v1033, %v1029
        %v1150 = vpack.c.b16 %v1034, %v1030
        %v1151 = vpack.c.b16 %v1039, %v1035
        %v1152 = vpack.c.b16 %v1040, %v1036
        %v1153 = vpack.c.b16 %v1041, %v1037
        %v1154 = vpack.c.b16 %v1042, %v1038
        %v1155 = vpack.c.b16 %v1047, %v1043
        %v1156 = vpack.c.b16 %v1048, %v1044
        %v1157 = vpack.c.b16 %v1049, %v1045
        %v1158 = vpack.c.b16 %v1050, %v1046
        %v1159 = vpack.c.b16 %v1055, %v1051
        %v1160 = vpack.c.b16 %v1056, %v1052
        %v1161 = vpack.c.b16 %v1057, %v1053
        %v1162 = vpack.c.b16 %v1058, %v1054
        %v1163 = vpack.c.b16 %v1063, %v1059
        %v1164 = vpack.c.b16 %v1064, %v1060
        %v1165 = vpack.c.b16 %v1065, %v1061
        %v1166 = vpack.c.b16 %v1066, %v1062
        %v1167 = vpack.c.b16 %v1071, %v1067
        %v1168 = vpack.c.b16 %v1072, %v1068
        %v1169 = vpack.c.b16 %v1073, %v1069
        %v1170 = vpack.c.b16 %v1074, %v1070
        %v1171 = vpack.c.b16 %v1079, %v1075
        %v1172 = vpack.c.b16 %v1080, %v1076
        %v1173 = vpack.c.b16 %v1081, %v1077
        %v1174 = vpack.c.b16 %v1082, %v1078
        %v1175 = vpack.c.b16 %v1087, %v1083
        %v1176 = vpack.c.b16 %v1088, %v1084
        %v1177 = vpack.c.b16 %v1089, %v1085
        %v1178 = vpack.c.b16 %v1090, %v1086
        %v1179 = vpack.c.b16 %v1095, %v1091
        %v1180 = vpack.c.b16 %v1096, %v1092
        %v1181 = vpack.c.b16 %v1097, %v1093
        %v1182 = vpack.c.b16 %v1098, %v1094
        %v1183 = vpack.c.b16 %v1103, %v1099
        %v1184 = vpack.c.b16 %v1104, %v1100
        %v1185 = vpack.c.b16 %v1105, %v1101
        %v1186 = vpack.c.b16 %v1106, %v1102
        %v1187 = vpack.c.b16 %v1111, %v1107
        %v1188 = vpack.c.b16 %v1112, %v1108
        %v1189 = vpack.c.b16 %v1113, %v1109
        %v1190 = vpack.c.b16 %v1114, %v1110
        %v1191 = vpack.c.b16 %v1119, %v1115
        %v1192 = vpack.c.b16 %v1120, %v1116
        %v1193 = vpack.c.b16 %v1121, %v1117
        %v1194 = vpack.c.b16 %v1122, %v1118
        %v1195 = vpack.c.b16 %v1127, %v1123
        %v1196 = vpack.c.b16 %v1128, %v1124
        %v1197 = vpack.c.b16 %v1129, %v1125
        %v1198 = vpack.c.b16 %v1130, %v1126
        %v1199 = vpack.c.b16 %v1135, %v1131
        %v1200 = vpack.c.b16 %v1136, %v1132
        %v1201 = vpack.c.b16 %v1137, %v1133
        %v1202 = vpack.c.b16 %v1138, %v1134
        %1267 = vmatprep.subr.bf16.mxu0 %v1140
        %1268 = vmatpush1.bf16.msra.mxu0 %v1139
        %1269 = vmatprep.subr.bf16.mxu0 %v1144
        %1270 = vmatpush1.bf16.msra.mxu0 %v1143
        %1271 = vmatprep.subr.bf16.mxu0 %v1148
        %1272 = vmatpush1.bf16.msra.mxu0 %v1147
        %1273 = vmatprep.subr.bf16.mxu0 %v1152
        %1274 = vmatpush1.bf16.msra.mxu0 %v1151
        %1275 = vmatprep.subr.bf16.mxu0 %v1156
        %1276 = vmatpush1.bf16.msra.mxu0 %v1155
        %1277 = vmatprep.subr.bf16.mxu0 %v1160
        %1278 = vmatpush1.bf16.msra.mxu0 %v1159
        %1279 = vmatprep.subr.bf16.mxu0 %v1164
        %1280 = vmatpush1.bf16.msra.mxu0 %v1163
        %1281 = vmatprep.subr.bf16.mxu0 %v1168
        %1282 = vmatpush1.bf16.msra.mxu0 %v1167
        %1283 = vmatprep.subr.bf16.mxu0 %v1172
        %1284 = vmatpush1.bf16.msra.mxu0 %v1171
        %1285 = vmatprep.subr.bf16.mxu0 %v1176
        %1286 = vmatpush1.bf16.msra.mxu0 %v1175
        %1287 = vmatprep.subr.bf16.mxu0 %v1180
        %1288 = vmatpush1.bf16.msra.mxu0 %v1179
        %1289 = vmatprep.subr.bf16.mxu0 %v1184
        %1290 = vmatpush1.bf16.msra.mxu0 %v1183
        %1291 = vmatprep.subr.bf16.mxu0 %v1188
        %1292 = vmatpush1.bf16.msra.mxu0 %v1187
        %1293 = vmatprep.subr.bf16.mxu0 %v1192
        %1294 = vmatpush1.bf16.msra.mxu0 %v1191
        %1295 = vmatprep.subr.bf16.mxu0 %v1196
        %1296 = vmatpush1.bf16.msra.mxu0 %v1195
        %1297 = vmatprep.subr.bf16.mxu0 %v1200
        %1298 = vmatpush1.bf16.msra.mxu0 %v1199
        %1299 = vmatprep.mubr.bf16.mxu0 %v940
        %1300 = vmatmul.mubr.bf16.gmra.mrb[0].mxu0 %v939
        %v1301 = vpop.f32.mrb[0].mxu0
        %v1302 = vadd.f32 0.0, %v1301
        %v1303 = vpop.f32.mrb[0].mxu0
        %v1304 = vadd.f32 0.0, %v1303
        %v1305 = vpop.f32.mrb[0].mxu0
        %v1306 = vadd.f32 0.0, %v1305
        %v1307 = vpop.f32.mrb[0].mxu0
        %v1308 = vadd.f32 0.0, %v1307
        %1309 = vmatprep.mubr.bf16.mxu0 %v942
        %1310 = vmatmul.mubr.bf16.gmra.mrb[0].mxu0 %v941
        %v1311 = vpop.f32.mrb[0].mxu0
        %v1312 = vadd.f32 0.0, %v1311
        %v1313 = vpop.f32.mrb[0].mxu0
        %v1314 = vadd.f32 0.0, %v1313
        %v1315 = vpop.f32.mrb[0].mxu0
        %v1316 = vadd.f32 0.0, %v1315
        %v1317 = vpop.f32.mrb[0].mxu0
        %v1318 = vadd.f32 0.0, %v1317
        %1319 = vdwg.mxu0
        %1320 = vmatprep.subr.bf16.mxu0 %v1142
        %1321 = vmatpush1.bf16.msra.mxu0 %v1141
        %1322 = vmatprep.subr.bf16.mxu0 %v1146
        %1323 = vmatpush1.bf16.msra.mxu0 %v1145
        %1324 = vmatprep.subr.bf16.mxu0 %v1150
        %1325 = vmatpush1.bf16.msra.mxu0 %v1149
        %1326 = vmatprep.subr.bf16.mxu0 %v1154
        %1327 = vmatpush1.bf16.msra.mxu0 %v1153
        %1328 = vmatprep.subr.bf16.mxu0 %v1158
        %1329 = vmatpush1.bf16.msra.mxu0 %v1157
        %1330 = vmatprep.subr.bf16.mxu0 %v1162
        %1331 = vmatpush1.bf16.msra.mxu0 %v1161
        %1332 = vmatprep.subr.bf16.mxu0 %v1166
        %1333 = vmatpush1.bf16.msra.mxu0 %v1165
        %1334 = vmatprep.subr.bf16.mxu0 %v1170
        %1335 = vmatpush1.bf16.msra.mxu0 %v1169
        %1336 = vmatprep.subr.bf16.mxu0 %v1174
        %1337 = vmatpush1.bf16.msra.mxu0 %v1173
        %1338 = vmatprep.subr.bf16.mxu0 %v1178
        %1339 = vmatpush1.bf16.msra.mxu0 %v1177
        %1340 = vmatprep.subr.bf16.mxu0 %v1182
        %1341 = vmatpush1.bf16.msra.mxu0 %v1181
        %1342 = vmatprep.subr.bf16.mxu0 %v1186
        %1343 = vmatpush1.bf16.msra.mxu0 %v1185
        %1344 = vmatprep.subr.bf16.mxu0 %v1190
        %1345 = vmatpush1.bf16.msra.mxu0 %v1189
        %1346 = vmatprep.subr.bf16.mxu0 %v1194
        %1347 = vmatpush1.bf16.msra.mxu0 %v1193
        %1348 = vmatprep.subr.bf16.mxu0 %v1198
        %1349 = vmatpush1.bf16.msra.mxu0 %v1197
        %1350 = vmatprep.subr.bf16.mxu0 %v1202
        %1351 = vmatpush1.bf16.msra.mxu0 %v1201
        %1352 = vmatprep.mubr.bf16.mxu0 %v940
        %1353 = vmatmul.mubr.bf16.gmra.mrb[0].mxu0 %v939
        %v1354 = vpop.f32.mrb[0].mxu0
        %v1355 = vadd.f32 0.0, %v1354
        %v1356 = vpop.f32.mrb[0].mxu0
        %v1357 = vadd.f32 0.0, %v1356
        %v1358 = vpop.f32.mrb[0].mxu0
        %v1359 = vadd.f32 0.0, %v1358
        %v1360 = vpop.f32.mrb[0].mxu0
        %v1361 = vadd.f32 0.0, %v1360
        %1362 = vmatprep.mubr.bf16.mxu0 %v942
        %1363 = vmatmul.mubr.bf16.gmra.mrb[0].mxu0 %v941
        %v1364 = vpop.f32.mrb[0].mxu0
        %v1365 = vadd.f32 0.0, %v1364
        %v1366 = vpop.f32.mrb[0].mxu0
        %v1367 = vadd.f32 0.0, %v1366
        %v1368 = vpop.f32.mrb[0].mxu0
        %v1369 = vadd.f32 0.0, %v1368
        %v1370 = vpop.f32.mrb[0].mxu0
        %v1371 = vadd.f32 0.0, %v1370
        %1372 = vdwg.mxu0
        %v1373 = vld [vmem:[%s2] sm:$0xff]
        %v1374 = vld [vmem:[%s2 + $0x8] sm:$0xff]
        %v1375 = vld [vmem:[%s2 + $0x10] sm:$0xff]
        %v1376 = vld [vmem:[%s2 + $0x18] sm:$0xff]
        %1378 = vset.pattern.permute.xlu0 0
        %1379 = vperm.xlu0 %1378, %v1373
        %v1380 = vpop.permute.xlu0 %1379
        %1383 = vset.pattern.permute.xlu0 0
        %1384 = vperm.xlu0 %1383, %v1374
        %v1385 = vpop.permute.xlu0 %1384
        %1388 = vset.pattern.permute.xlu0 0
        %1389 = vperm.xlu0 %1388, %v1375
        %v1390 = vpop.permute.xlu0 %1389
        %1393 = vset.pattern.permute.xlu0 0
        %1394 = vperm.xlu0 %1393, %v1376
        %v1395 = vpop.permute.xlu0 %1394
        %v1397 = vmul.f32 %v1302, %v1380
        %v1398 = vmul.f32 %v1304, %v1380
        %v1399 = vmul.f32 %v1355, %v1380
        %v1400 = vmul.f32 %v1357, %v1380
        %v1401 = vmul.f32 %v1306, %v1385
        %v1402 = vmul.f32 %v1308, %v1385
        %v1403 = vmul.f32 %v1359, %v1385
        %v1404 = vmul.f32 %v1361, %v1385
        %v1405 = vmul.f32 %v1312, %v1390
        %v1406 = vmul.f32 %v1314, %v1390
        %v1407 = vmul.f32 %v1365, %v1390
        %v1408 = vmul.f32 %v1367, %v1390
        %v1409 = vmul.f32 %v1316, %v1395
        %v1410 = vmul.f32 %v1318, %v1395
        %v1411 = vmul.f32 %v1369, %v1395
        %v1412 = vmul.f32 %v1371, %v1395
        %v1413 = vld [vmem:[%s3] sm:$0xff]
        %v1414 = vld [vmem:[%s3 + $0x8] sm:$0xff]
        %v1415 = vld [vmem:[%s3 + $0x10] sm:$0xff]
        %v1416 = vld [vmem:[%s3 + $0x18] sm:$0xff]
        %1418 = vset.pattern.permute.xlu0 0
        %1419 = vperm.xlu0 %1418, %v1413
        %v1420 = vpop.permute.xlu0 %1419
        %1423 = vset.pattern.permute.xlu0 0
        %1424 = vperm.xlu0 %1423, %v1414
        %v1425 = vpop.permute.xlu0 %1424
        %1428 = vset.pattern.permute.xlu0 0
        %1429 = vperm.xlu0 %1428, %v1415
        %v1430 = vpop.permute.xlu0 %1429
        %1433 = vset.pattern.permute.xlu0 0
        %1434 = vperm.xlu0 %1433, %v1416
        %v1435 = vpop.permute.xlu0 %1434
        %v1437 = vadd.f32 %v1397, %v1420
        %v1438 = vadd.f32 %v1398, %v1420
        %v1439 = vadd.f32 %v1399, %v1420
        %v1440 = vadd.f32 %v1400, %v1420
        %v1441 = vadd.f32 %v1401, %v1425
        %v1442 = vadd.f32 %v1402, %v1425
        %v1443 = vadd.f32 %v1403, %v1425
        %v1444 = vadd.f32 %v1404, %v1425
        %v1445 = vadd.f32 %v1405, %v1430
        %v1446 = vadd.f32 %v1406, %v1430
        %v1447 = vadd.f32 %v1407, %v1430
        %v1448 = vadd.f32 %v1408, %v1430
        %v1449 = vadd.f32 %v1409, %v1435
        %v1450 = vadd.f32 %v1410, %v1435
        %v1451 = vadd.f32 %v1411, %v1435
        %v1452 = vadd.f32 %v1412, %v1435
        %v1453 = vmax.f32 %v1437, 0.0
        %v1454 = vmax.f32 %v1438, 0.0
        %v1455 = vmax.f32 %v1439, 0.0
        %v1456 = vmax.f32 %v1440, 0.0
        %v1457 = vmax.f32 %v1441, 0.0
        %v1458 = vmax.f32 %v1442, 0.0
        %v1459 = vmax.f32 %v1443, 0.0
        %v1460 = vmax.f32 %v1444, 0.0
        %v1461 = vmax.f32 %v1445, 0.0
        %v1462 = vmax.f32 %v1446, 0.0
        %v1463 = vmax.f32 %v1447, 0.0
        %v1464 = vmax.f32 %v1448, 0.0
        %v1465 = vmax.f32 %v1449, 0.0
        %v1466 = vmax.f32 %v1450, 0.0
        %v1467 = vmax.f32 %v1451, 0.0
        %v1468 = vmax.f32 %v1452, 0.0
        %v1469 = vpack.c.bf16 %v1457, %v1453
        %v1470 = vpack.c.bf16 %v1458, %v1454
        %v1471 = vpack.c.bf16 %v1459, %v1455
        %v1472 = vpack.c.bf16 %v1460, %v1456
        %v1473 = vpack.c.bf16 %v1465, %v1461
        %v1474 = vpack.c.bf16 %v1466, %v1462
        %v1475 = vpack.c.bf16 %v1467, %v1463
        %v1476 = vpack.c.bf16 %v1468, %v1464
        %v1485 = vunpack.c.l.b16 %v1469
        %v1486 = vunpack.c.l.b16 %v1470
        %v1487 = vunpack.c.l.b16 %v1471
        %v1488 = vunpack.c.l.b16 %v1472
        %v1489 = vunpack.c.h.b16 %v1469
        %v1490 = vunpack.c.h.b16 %v1470
        %v1491 = vunpack.c.h.b16 %v1471
        %v1492 = vunpack.c.h.b16 %v1472
        %v1493 = vunpack.c.l.b16 %v1473
        %v1494 = vunpack.c.l.b16 %v1474
        %v1495 = vunpack.c.l.b16 %v1475
        %v1496 = vunpack.c.l.b16 %v1476
        %v1497 = vunpack.c.h.b16 %v1473
        %v1498 = vunpack.c.h.b16 %v1474
        %v1499 = vunpack.c.h.b16 %v1475
        %v1500 = vunpack.c.h.b16 %v1476
        %v1501 = vpack.c.b16 %v1486, %v1485
        %v1502 = vpack.c.b16 %v1488, %v1487
        %v1503 = vpack.c.b16 %v1490, %v1489
        %v1504 = vpack.c.b16 %v1492, %v1491
        %v1505 = vpack.c.b16 %v1494, %v1493
        %v1506 = vpack.c.b16 %v1496, %v1495
        %v1507 = vpack.c.b16 %v1498, %v1497
        %v1508 = vpack.c.b16 %v1500, %v1499
        %1517 = vst [vmem:[%s848] sm:$0xff] %v1501
        %1518 = vst [vmem:[%s848 + $0x8] sm:$0xff] %v1502
        %1519 = vst [vmem:[%s848 + $0x10] sm:$0xff] %v1503
        %1520 = vst [vmem:[%s848 + $0x18] sm:$0xff] %v1504
        %1521 = vst [vmem:[%s848 + $0x20] sm:$0xff] %v1505
        %1522 = vst [vmem:[%s848 + $0x28] sm:$0xff] %v1506
        %1523 = vst [vmem:[%s848 + $0x30] sm:$0xff] %v1507
        %1524 = vst [vmem:[%s848 + $0x38] sm:$0xff] %v1508
        %s1525 = sand.u32 %s112, 1
        %s1526 = sand.u32 %s112, 1
        %s1527 = smul.addr %s1526, 64
        %s1528 = scalar_lea.vmem [#allocation3], %s1527
        // Predicated region
        $region103: #{model_forward.4} parent=97 // pred_check
          %p1529 = pneg %p122
        $region104: #{model_forward.4} parent=97 // pred_check_branch
          %1531 = sbr.rel (%p1529) target = $region106
        $region105: #{model_forward.4} parent=97 // pred_region
          %s1532 = smul.u32 4, %s15
          %s1533 = ssub.s32 7, %s1532
          %p1534 = scmp.lt.s32.totalorder %s1533, 4
          %s1535 = scalar_select %p1534, %s1533, 4
          %s1536 = smul.u32 256, %s1535
          %p1537 = scmp.ne.s32.totalorder 0, %s1536
          %s1538 = smul.addr %s1532, 4
          %s1539 = scalar_lea.vmem %s4, %s1538
          %s1540 = smul.u32 %s1535, 4
          // Predicated region
          $region107: #{model_forward.4} parent=105 // pred_check
            %p1541 = pneg %p1537
          $region108: #{model_forward.4} parent=105 // pred_check_branch
            %1543 = sbr.rel (%p1541) target = $region110
          $region109: #{model_forward.4} parent=105 // pred_region
            %p1544 = scmp.lt.u32.totalorder %s1540, 8
            %p1545 = pneg %p1544
            // Predicated region
            $region111: #{model_forward.4} parent=109 // pred_check
              _
            $region112: #{model_forward.4} parent=109 // pred_check_branch
              %1547 = sbr.rel (%p1544) target = $region114
            $region113: #{model_forward.4} parent=109 // pred_region
              %s1568 = sand.u32 %s1540, 7
              %p1569 = scmp.eq.s32.totalorder %s1568, 0
              // Predicated region
              $region126: #{model_forward.4} parent=113 // pred_check
                %p1570 = pneg %p1569
              $region127: #{model_forward.4} parent=113 // pred_check_branch
                %1572 = sbr.rel (%p1570) target = $region129
              $region128: #{model_forward.4} parent=113 // pred_region
                %s1573 = sshrl.u32 %s1540, 3
                %s1574 = sshrl.u32 %s1573, 4
                // While loop
                $region130: #{model_forward.4} parent=128 // loop_pre_header
                  _
                $region131: #{model_forward.4} parent=128 // loop_header
                  %s1578 = sphi 0, %s1580
                  %p1579 = scmp.ge.s32.totalorder %s1578, %s1574
                  %s1583 = sphi 0, %s1716
                  %s1584 = sphi %s1528, %s1719
                  %s1585 = sphi %s1539, %s1720
                $region132: #{model_forward.4} parent=128 // loop_header_branch
                  %1582 = sbr.rel (%p1579) target = $region136
                $region133: #{model_forward.4} parent=128 // loop_body
                  %v1586 = vld [vmem:[%s1584] sm:$0xff]
                  %1587 = vst [vmem:[%s1585] sm:$0xff] %v1586
                  %v1588 = vld [vmem:[%s1584 + $0x8] sm:$0xff]
                  %1589 = vst [vmem:[%s1585 + $0x8] sm:$0xff] %v1588
                  %v1590 = vld [vmem:[%s1584 + $0x10] sm:$0xff]
                  %1591 = vst [vmem:[%s1585 + $0x10] sm:$0xff] %v1590
                  %v1592 = vld [vmem:[%s1584 + $0x18] sm:$0xff]
                  %1593 = vst [vmem:[%s1585 + $0x18] sm:$0xff] %v1592
                  %v1594 = vld [vmem:[%s1584 + $0x20] sm:$0xff]
                  %1595 = vst [vmem:[%s1585 + $0x20] sm:$0xff] %v1594
                  %v1596 = vld [vmem:[%s1584 + $0x28] sm:$0xff]
                  %1597 = vst [vmem:[%s1585 + $0x28] sm:$0xff] %v1596
                  %v1598 = vld [vmem:[%s1584 + $0x30] sm:$0xff]
                  %1599 = vst [vmem:[%s1585 + $0x30] sm:$0xff] %v1598
                  %v1600 = vld [vmem:[%s1584 + $0x38] sm:$0xff]
                  %1601 = vst [vmem:[%s1585 + $0x38] sm:$0xff] %v1600
                  %v1602 = vld [vmem:[%s1584 + $0x40] sm:$0xff]
                  %1603 = vst [vmem:[%s1585 + $0x40] sm:$0xff] %v1602
                  %v1604 = vld [vmem:[%s1584 + $0x48] sm:$0xff]
                  %1605 = vst [vmem:[%s1585 + $0x48] sm:$0xff] %v1604
                  %v1606 = vld [vmem:[%s1584 + $0x50] sm:$0xff]
                  %1607 = vst [vmem:[%s1585 + $0x50] sm:$0xff] %v1606
                  %v1608 = vld [vmem:[%s1584 + $0x58] sm:$0xff]
                  %1609 = vst [vmem:[%s1585 + $0x58] sm:$0xff] %v1608
                  %v1610 = vld [vmem:[%s1584 + $0x60] sm:$0xff]
                  %1611 = vst [vmem:[%s1585 + $0x60] sm:$0xff] %v1610
                  %v1612 = vld [vmem:[%s1584 + $0x68] sm:$0xff]
                  %1613 = vst [vmem:[%s1585 + $0x68] sm:$0xff] %v1612
                  %v1614 = vld [vmem:[%s1584 + $0x70] sm:$0xff]
                  %1615 = vst [vmem:[%s1585 + $0x70] sm:$0xff] %v1614
                  %v1616 = vld [vmem:[%s1584 + $0x78] sm:$0xff]
                  %1617 = vst [vmem:[%s1585 + $0x78] sm:$0xff] %v1616
                  %v1618 = vld [vmem:[%s1584 + $0x10] sm:$0xff]
                  %1619 = vst [vmem:[%s1585 + $0x1c] sm:$0xff] %v1618
                  %v1620 = vld [vmem:[%s1584 + $0x18] sm:$0xff]
                  %1621 = vst [vmem:[%s1585 + $0x24] sm:$0xff] %v1620
                  %v1622 = vld [vmem:[%s1584 + $0x20] sm:$0xff]
                  %1623 = vst [vmem:[%s1585 + $0x2c] sm:$0xff] %v1622
                  %v1624 = vld [vmem:[%s1584 + $0x28] sm:$0xff]
                  %1625 = vst [vmem:[%s1585 + $0x34] sm:$0xff] %v1624
                  %v1626 = vld [vmem:[%s1584 + $0x30] sm:$0xff]
                  %1627 = vst [vmem:[%s1585 + $0x3c] sm:$0xff] %v1626
                  %v1628 = vld [vmem:[%s1584 + $0x38] sm:$0xff]
                  %1629 = vst [vmem:[%s1585 + $0x44] sm:$0xff] %v1628
                  %v1630 = vld [vmem:[%s1584 + $0x40] sm:$0xff]
                  %1631 = vst [vmem:[%s1585 + $0x4c] sm:$0xff] %v1630
                  %v1632 = vld [vmem:[%s1584 + $0x48] sm:$0xff]
                  %1633 = vst [vmem:[%s1585 + $0x54] sm:$0xff] %v1632
                  %v1634 = vld [vmem:[%s1584 + $0x50] sm:$0xff]
                  %1635 = vst [vmem:[%s1585 + $0x5c] sm:$0xff] %v1634
                  %v1636 = vld [vmem:[%s1584 + $0x58] sm:$0xff]
                  %1637 = vst [vmem:[%s1585 + $0x64] sm:$0xff] %v1636
                  %v1638 = vld [vmem:[%s1584 + $0x60] sm:$0xff]
                  %1639 = vst [vmem:[%s1585 + $0x6c] sm:$0xff] %v1638
                  %v1640 = vld [vmem:[%s1584 + $0x68] sm:$0xff]
                  %1641 = vst [vmem:[%s1585 + $0x74] sm:$0xff] %v1640
                  %v1642 = vld [vmem:[%s1584 + $0x70] sm:$0xff]
                  %1643 = vst [vmem:[%s1585 + $0x7c] sm:$0xff] %v1642
                  %v1644 = vld [vmem:[%s1584 + $0x78] sm:$0xff]
                  %1645 = vst [vmem:[%s1585 + $0x84] sm:$0xff] %v1644
                  %v1646 = vld [vmem:[%s1584 + $0x80] sm:$0xff]
                  %1647 = vst [vmem:[%s1585 + $0x8c] sm:$0xff] %v1646
                  %v1648 = vld [vmem:[%s1584 + $0x88] sm:$0xff]
                  %1649 = vst [vmem:[%s1585 + $0x94] sm:$0xff] %v1648
                  %v1650 = vld [vmem:[%s1584 + $0x20] sm:$0xff]
                  %1651 = vst [vmem:[%s1585 + $0x38] sm:$0xff] %v1650
                  %v1652 = vld [vmem:[%s1584 + $0x28] sm:$0xff]
                  %1653 = vst [vmem:[%s1585 + $0x40] sm:$0xff] %v1652
                  %v1654 = vld [vmem:[%s1584 + $0x30] sm:$0xff]
                  %1655 = vst [vmem:[%s1585 + $0x48] sm:$0xff] %v1654
                  %v1656 = vld [vmem:[%s1584 + $0x38] sm:$0xff]
                  %1657 = vst [vmem:[%s1585 + $0x50] sm:$0xff] %v1656
                  %v1658 = vld [vmem:[%s1584 + $0x40] sm:$0xff]
                  %1659 = vst [vmem:[%s1585 + $0x58] sm:$0xff] %v1658
                  %v1660 = vld [vmem:[%s1584 + $0x48] sm:$0xff]
                  %1661 = vst [vmem:[%s1585 + $0x60] sm:$0xff] %v1660
                  %v1662 = vld [vmem:[%s1584 + $0x50] sm:$0xff]
                  %1663 = vst [vmem:[%s1585 + $0x68] sm:$0xff] %v1662
                  %v1664 = vld [vmem:[%s1584 + $0x58] sm:$0xff]
                  %1665 = vst [vmem:[%s1585 + $0x70] sm:$0xff] %v1664
                  %v1666 = vld [vmem:[%s1584 + $0x60] sm:$0xff]
                  %1667 = vst [vmem:[%s1585 + $0x78] sm:$0xff] %v1666
                  %v1668 = vld [vmem:[%s1584 + $0x68] sm:$0xff]
                  %1669 = vst [vmem:[%s1585 + $0x80] sm:$0xff] %v1668
                  %v1670 = vld [vmem:[%s1584 + $0x70] sm:$0xff]
                  %1671 = vst [vmem:[%s1585 + $0x88] sm:$0xff] %v1670
                  %v1672 = vld [vmem:[%s1584 + $0x78] sm:$0xff]
                  %1673 = vst [vmem:[%s1585 + $0x90] sm:$0xff] %v1672
                  %v1674 = vld [vmem:[%s1584 + $0x80] sm:$0xff]
                  %1675 = vst [vmem:[%s1585 + $0x98] sm:$0xff] %v1674
                  %v1676 = vld [vmem:[%s1584 + $0x88] sm:$0xff]
                  %1677 = vst [vmem:[%s1585 + $0xa0] sm:$0xff] %v1676
                  %v1678 = vld [vmem:[%s1584 + $0x90] sm:$0xff]
                  %1679 = vst [vmem:[%s1585 + $0xa8] sm:$0xff] %v1678
                  %v1680 = vld [vmem:[%s1584 + $0x98] sm:$0xff]
                  %1681 = vst [vmem:[%s1585 + $0xb0] sm:$0xff] %v1680
                  %v1682 = vld [vmem:[%s1584 + $0x30] sm:$0xff]
                  %1683 = vst [vmem:[%s1585 + $0x54] sm:$0xff] %v1682
                  %v1684 = vld [vmem:[%s1584 + $0x38] sm:$0xff]
                  %1685 = vst [vmem:[%s1585 + $0x5c] sm:$0xff] %v1684
                  %v1686 = vld [vmem:[%s1584 + $0x40] sm:$0xff]
                  %1687 = vst [vmem:[%s1585 + $0x64] sm:$0xff] %v1686
                  %v1688 = vld [vmem:[%s1584 + $0x48] sm:$0xff]
                  %1689 = vst [vmem:[%s1585 + $0x6c] sm:$0xff] %v1688
                  %v1690 = vld [vmem:[%s1584 + $0x50] sm:$0xff]
                  %1691 = vst [vmem:[%s1585 + $0x74] sm:$0xff] %v1690
                  %v1692 = vld [vmem:[%s1584 + $0x58] sm:$0xff]
                  %1693 = vst [vmem:[%s1585 + $0x7c] sm:$0xff] %v1692
                  %v1694 = vld [vmem:[%s1584 + $0x60] sm:$0xff]
                  %1695 = vst [vmem:[%s1585 + $0x84] sm:$0xff] %v1694
                  %v1696 = vld [vmem:[%s1584 + $0x68] sm:$0xff]
                  %1697 = vst [vmem:[%s1585 + $0x8c] sm:$0xff] %v1696
                  %v1698 = vld [vmem:[%s1584 + $0x70] sm:$0xff]
                  %1699 = vst [vmem:[%s1585 + $0x94] sm:$0xff] %v1698
                  %v1700 = vld [vmem:[%s1584 + $0x78] sm:$0xff]
                  %1701 = vst [vmem:[%s1585 + $0x9c] sm:$0xff] %v1700
                  %v1702 = vld [vmem:[%s1584 + $0x80] sm:$0xff]
                  %1703 = vst [vmem:[%s1585 + $0xa4] sm:$0xff] %v1702
                  %v1704 = vld [vmem:[%s1584 + $0x88] sm:$0xff]
                  %1705 = vst [vmem:[%s1585 + $0xac] sm:$0xff] %v1704
                  %v1706 = vld [vmem:[%s1584 + $0x90] sm:$0xff]
                  %1707 = vst [vmem:[%s1585 + $0xb4] sm:$0xff] %v1706
                  %v1708 = vld [vmem:[%s1584 + $0x98] sm:$0xff]
                  %1709 = vst [vmem:[%s1585 + $0xbc] sm:$0xff] %v1708
                  %v1710 = vld [vmem:[%s1584 + $0xa0] sm:$0xff]
                  %1711 = vst [vmem:[%s1585 + $0xc4] sm:$0xff] %v1710
                  %v1712 = vld [vmem:[%s1584 + $0xa8] sm:$0xff]
                  %1713 = vst [vmem:[%s1585 + $0xcc] sm:$0xff] %v1712
                  %s1714 = sadd.s32 1, %s1583
                  %p1715 = scmp.ge.s32.totalorder %s1714, %s1574
                  %s1716 = scalar_select %p1715, 0, %s1714
                  %s1717 = smul.u32 %s1716, 128
                  %s1718 = smul.u32 %s1716, 128
                  %s1719 = scalar_lea.vmem %s1528, %s1717 [#allocation3]
                  %s1720 = scalar_lea.vmem %s1539, %s1718
                $region134: #{model_forward.4} parent=128 // loop_footer
                  %s1580 = sadd.s32 %s1578, 1
                $region135: #{model_forward.4} parent=128 // loop_footer_branch
                  %1577 = sbr.rel target = $region131
                $region136: #{model_forward.4} parent=128 // loop_exit
                  _
                %s1721 = sshrl.u32 %s1573, 4
                %s1722 = sand.u32 %s1573, 15
                %s1723 = smul.u32 %s1721, 16
                %s1724 = smul.u32 128, %s1723
                %s1725 = sshra.s32 %s1724, 4
                %s1726 = scalar_lea.vmem %s1528, %s1725 [#allocation3]
                %s1727 = smul.u32 128, %s1723
                %s1728 = sshra.s32 %s1727, 4
                %s1729 = scalar_lea.vmem %s1539, %s1728
                // While loop
                $region137: #{model_forward.4} parent=128 // loop_pre_header
                  _
                $region138: #{model_forward.4} parent=128 // loop_header
                  %s1733 = sphi 0, %s1735
                  %p1734 = scmp.ge.s32.totalorder %s1733, %s1722
                  %s1738 = sphi 0, %s1751
                  %s1739 = sphi %s1726, %s1754
                  %s1740 = sphi %s1729, %s1755
                $region139: #{model_forward.4} parent=128 // loop_header_branch
                  %1737 = sbr.rel (%p1734) target = $region143
                $region140: #{model_forward.4} parent=128 // loop_body
                  %v1741 = vld [vmem:[%s1739] sm:$0xff]
                  %1742 = vst [vmem:[%s1740] sm:$0xff] %v1741
                  %v1743 = vld [vmem:[%s1739 + $0x10] sm:$0xff]
                  %1744 = vst [vmem:[%s1740 + $0x1c] sm:$0xff] %v1743
                  %v1745 = vld [vmem:[%s1739 + $0x20] sm:$0xff]
                  %1746 = vst [vmem:[%s1740 + $0x38] sm:$0xff] %v1745
                  %v1747 = vld [vmem:[%s1739 + $0x30] sm:$0xff]
                  %1748 = vst [vmem:[%s1740 + $0x54] sm:$0xff] %v1747
                  %s1749 = sadd.s32 1, %s1738
                  %p1750 = scmp.ge.s32.totalorder %s1749, %s1722
                  %s1751 = scalar_select %p1750, 0, %s1749
                  %s1752 = smul.u32 %s1751, 8
                  %s1753 = smul.u32 %s1751, 8
                  %s1754 = scalar_lea.vmem %s1726, %s1752 [#allocation3]
                  %s1755 = scalar_lea.vmem %s1729, %s1753
                $region141: #{model_forward.4} parent=128 // loop_footer
                  %s1735 = sadd.s32 %s1733, 1
                $region142: #{model_forward.4} parent=128 // loop_footer_branch
                  %1732 = sbr.rel target = $region138
                $region143: #{model_forward.4} parent=128 // loop_exit
                  _
              $region129: #{model_forward.4} parent=113 // pred_fallthru
                _
              %p1756 = pneg %p1569
              // Predicated region
              $region144: #{model_forward.4} parent=113 // pred_check
                _
              $region145: #{model_forward.4} parent=113 // pred_check_branch
                %1758 = sbr.rel (%p1569) target = $region147
              $region146: #{model_forward.4} parent=113 // pred_region
                %s1759 = sand.u32 %s1540, 7
                %s1760 = ssub.s32 %s1540, %s1759
                %s1761 = scalar_lea.vmem %s1528, %s1760 [#allocation3]
                %s1762 = ssub.s32 %s1540, %s1759
                %s1763 = scalar_lea.vmem %s1539, %s1762
                %s1764 = sshrl.u32 %s1540, 3
                %s1765 = sshrl.u32 %s1764, 4
                // While loop
                $region148: #{model_forward.4} parent=146 // loop_pre_header
                  _
                $region149: #{model_forward.4} parent=146 // loop_header
                  %s1769 = sphi 0, %s1771
                  %p1770 = scmp.ge.s32.totalorder %s1769, %s1765
                  %s1774 = sphi 0, %s1907
                  %s1775 = sphi %s1528, %s1910
                  %s1776 = sphi %s1539, %s1911
                $region150: #{model_forward.4} parent=146 // loop_header_branch
                  %1773 = sbr.rel (%p1770) target = $region154
                $region151: #{model_forward.4} parent=146 // loop_body
                  %v1777 = vld [vmem:[%s1775] sm:$0xff]
                  %1778 = vst [vmem:[%s1776] sm:$0xff] %v1777
                  %v1779 = vld [vmem:[%s1775 + $0x8] sm:$0xff]
                  %1780 = vst [vmem:[%s1776 + $0x8] sm:$0xff] %v1779
                  %v1781 = vld [vmem:[%s1775 + $0x10] sm:$0xff]
                  %1782 = vst [vmem:[%s1776 + $0x10] sm:$0xff] %v1781
                  %v1783 = vld [vmem:[%s1775 + $0x18] sm:$0xff]
                  %1784 = vst [vmem:[%s1776 + $0x18] sm:$0xff] %v1783
                  %v1785 = vld [vmem:[%s1775 + $0x20] sm:$0xff]
                  %1786 = vst [vmem:[%s1776 + $0x20] sm:$0xff] %v1785
                  %v1787 = vld [vmem:[%s1775 + $0x28] sm:$0xff]
                  %1788 = vst [vmem:[%s1776 + $0x28] sm:$0xff] %v1787
                  %v1789 = vld [vmem:[%s1775 + $0x30] sm:$0xff]
                  %1790 = vst [vmem:[%s1776 + $0x30] sm:$0xff] %v1789
                  %v1791 = vld [vmem:[%s1775 + $0x38] sm:$0xff]
                  %1792 = vst [vmem:[%s1776 + $0x38] sm:$0xff] %v1791
                  %v1793 = vld [vmem:[%s1775 + $0x40] sm:$0xff]
                  %1794 = vst [vmem:[%s1776 + $0x40] sm:$0xff] %v1793
                  %v1795 = vld [vmem:[%s1775 + $0x48] sm:$0xff]
                  %1796 = vst [vmem:[%s1776 + $0x48] sm:$0xff] %v1795
                  %v1797 = vld [vmem:[%s1775 + $0x50] sm:$0xff]
                  %1798 = vst [vmem:[%s1776 + $0x50] sm:$0xff] %v1797
                  %v1799 = vld [vmem:[%s1775 + $0x58] sm:$0xff]
                  %1800 = vst [vmem:[%s1776 + $0x58] sm:$0xff] %v1799
                  %v1801 = vld [vmem:[%s1775 + $0x60] sm:$0xff]
                  %1802 = vst [vmem:[%s1776 + $0x60] sm:$0xff] %v1801
                  %v1803 = vld [vmem:[%s1775 + $0x68] sm:$0xff]
                  %1804 = vst [vmem:[%s1776 + $0x68] sm:$0xff] %v1803
                  %v1805 = vld [vmem:[%s1775 + $0x70] sm:$0xff]
                  %1806 = vst [vmem:[%s1776 + $0x70] sm:$0xff] %v1805
                  %v1807 = vld [vmem:[%s1775 + $0x78] sm:$0xff]
                  %1808 = vst [vmem:[%s1776 + $0x78] sm:$0xff] %v1807
                  %v1809 = vld [vmem:[%s1775 + $0x10] sm:$0xff]
                  %1810 = vst [vmem:[%s1776 + $0x1c] sm:$0xff] %v1809
                  %v1811 = vld [vmem:[%s1775 + $0x18] sm:$0xff]
                  %1812 = vst [vmem:[%s1776 + $0x24] sm:$0xff] %v1811
                  %v1813 = vld [vmem:[%s1775 + $0x20] sm:$0xff]
                  %1814 = vst [vmem:[%s1776 + $0x2c] sm:$0xff] %v1813
                  %v1815 = vld [vmem:[%s1775 + $0x28] sm:$0xff]
                  %1816 = vst [vmem:[%s1776 + $0x34] sm:$0xff] %v1815
                  %v1817 = vld [vmem:[%s1775 + $0x30] sm:$0xff]
                  %1818 = vst [vmem:[%s1776 + $0x3c] sm:$0xff] %v1817
                  %v1819 = vld [vmem:[%s1775 + $0x38] sm:$0xff]
                  %1820 = vst [vmem:[%s1776 + $0x44] sm:$0xff] %v1819
                  %v1821 = vld [vmem:[%s1775 + $0x40] sm:$0xff]
                  %1822 = vst [vmem:[%s1776 + $0x4c] sm:$0xff] %v1821
                  %v1823 = vld [vmem:[%s1775 + $0x48] sm:$0xff]
                  %1824 = vst [vmem:[%s1776 + $0x54] sm:$0xff] %v1823
                  %v1825 = vld [vmem:[%s1775 + $0x50] sm:$0xff]
                  %1826 = vst [vmem:[%s1776 + $0x5c] sm:$0xff] %v1825
                  %v1827 = vld [vmem:[%s1775 + $0x58] sm:$0xff]
                  %1828 = vst [vmem:[%s1776 + $0x64] sm:$0xff] %v1827
                  %v1829 = vld [vmem:[%s1775 + $0x60] sm:$0xff]
                  %1830 = vst [vmem:[%s1776 + $0x6c] sm:$0xff] %v1829
                  %v1831 = vld [vmem:[%s1775 + $0x68] sm:$0xff]
                  %1832 = vst [vmem:[%s1776 + $0x74] sm:$0xff] %v1831
                  %v1833 = vld [vmem:[%s1775 + $0x70] sm:$0xff]
                  %1834 = vst [vmem:[%s1776 + $0x7c] sm:$0xff] %v1833
                  %v1835 = vld [vmem:[%s1775 + $0x78] sm:$0xff]
                  %1836 = vst [vmem:[%s1776 + $0x84] sm:$0xff] %v1835
                  %v1837 = vld [vmem:[%s1775 + $0x80] sm:$0xff]
                  %1838 = vst [vmem:[%s1776 + $0x8c] sm:$0xff] %v1837
                  %v1839 = vld [vmem:[%s1775 + $0x88] sm:$0xff]
                  %1840 = vst [vmem:[%s1776 + $0x94] sm:$0xff] %v1839
                  %v1841 = vld [vmem:[%s1775 + $0x20] sm:$0xff]
                  %1842 = vst [vmem:[%s1776 + $0x38] sm:$0xff] %v1841
                  %v1843 = vld [vmem:[%s1775 + $0x28] sm:$0xff]
                  %1844 = vst [vmem:[%s1776 + $0x40] sm:$0xff] %v1843
                  %v1845 = vld [vmem:[%s1775 + $0x30] sm:$0xff]
                  %1846 = vst [vmem:[%s1776 + $0x48] sm:$0xff] %v1845
                  %v1847 = vld [vmem:[%s1775 + $0x38] sm:$0xff]
                  %1848 = vst [vmem:[%s1776 + $0x50] sm:$0xff] %v1847
                  %v1849 = vld [vmem:[%s1775 + $0x40] sm:$0xff]
                  %1850 = vst [vmem:[%s1776 + $0x58] sm:$0xff] %v1849
                  %v1851 = vld [vmem:[%s1775 + $0x48] sm:$0xff]
                  %1852 = vst [vmem:[%s1776 + $0x60] sm:$0xff] %v1851
                  %v1853 = vld [vmem:[%s1775 + $0x50] sm:$0xff]
                  %1854 = vst [vmem:[%s1776 + $0x68] sm:$0xff] %v1853
                  %v1855 = vld [vmem:[%s1775 + $0x58] sm:$0xff]
                  %1856 = vst [vmem:[%s1776 + $0x70] sm:$0xff] %v1855
                  %v1857 = vld [vmem:[%s1775 + $0x60] sm:$0xff]
                  %1858 = vst [vmem:[%s1776 + $0x78] sm:$0xff] %v1857
                  %v1859 = vld [vmem:[%s1775 + $0x68] sm:$0xff]
                  %1860 = vst [vmem:[%s1776 + $0x80] sm:$0xff] %v1859
                  %v1861 = vld [vmem:[%s1775 + $0x70] sm:$0xff]
                  %1862 = vst [vmem:[%s1776 + $0x88] sm:$0xff] %v1861
                  %v1863 = vld [vmem:[%s1775 + $0x78] sm:$0xff]
                  %1864 = vst [vmem:[%s1776 + $0x90] sm:$0xff] %v1863
                  %v1865 = vld [vmem:[%s1775 + $0x80] sm:$0xff]
                  %1866 = vst [vmem:[%s1776 + $0x98] sm:$0xff] %v1865
                  %v1867 = vld [vmem:[%s1775 + $0x88] sm:$0xff]
                  %1868 = vst [vmem:[%s1776 + $0xa0] sm:$0xff] %v1867
                  %v1869 = vld [vmem:[%s1775 + $0x90] sm:$0xff]
                  %1870 = vst [vmem:[%s1776 + $0xa8] sm:$0xff] %v1869
                  %v1871 = vld [vmem:[%s1775 + $0x98] sm:$0xff]
                  %1872 = vst [vmem:[%s1776 + $0xb0] sm:$0xff] %v1871
                  %v1873 = vld [vmem:[%s1775 + $0x30] sm:$0xff]
                  %1874 = vst [vmem:[%s1776 + $0x54] sm:$0xff] %v1873
                  %v1875 = vld [vmem:[%s1775 + $0x38] sm:$0xff]
                  %1876 = vst [vmem:[%s1776 + $0x5c] sm:$0xff] %v1875
                  %v1877 = vld [vmem:[%s1775 + $0x40] sm:$0xff]
                  %1878 = vst [vmem:[%s1776 + $0x64] sm:$0xff] %v1877
                  %v1879 = vld [vmem:[%s1775 + $0x48] sm:$0xff]
                  %1880 = vst [vmem:[%s1776 + $0x6c] sm:$0xff] %v1879
                  %v1881 = vld [vmem:[%s1775 + $0x50] sm:$0xff]
                  %1882 = vst [vmem:[%s1776 + $0x74] sm:$0xff] %v1881
                  %v1883 = vld [vmem:[%s1775 + $0x58] sm:$0xff]
                  %1884 = vst [vmem:[%s1776 + $0x7c] sm:$0xff] %v1883
                  %v1885 = vld [vmem:[%s1775 + $0x60] sm:$0xff]
                  %1886 = vst [vmem:[%s1776 + $0x84] sm:$0xff] %v1885
                  %v1887 = vld [vmem:[%s1775 + $0x68] sm:$0xff]
                  %1888 = vst [vmem:[%s1776 + $0x8c] sm:$0xff] %v1887
                  %v1889 = vld [vmem:[%s1775 + $0x70] sm:$0xff]
                  %1890 = vst [vmem:[%s1776 + $0x94] sm:$0xff] %v1889
                  %v1891 = vld [vmem:[%s1775 + $0x78] sm:$0xff]
                  %1892 = vst [vmem:[%s1776 + $0x9c] sm:$0xff] %v1891
                  %v1893 = vld [vmem:[%s1775 + $0x80] sm:$0xff]
                  %1894 = vst [vmem:[%s1776 + $0xa4] sm:$0xff] %v1893
                  %v1895 = vld [vmem:[%s1775 + $0x88] sm:$0xff]
                  %1896 = vst [vmem:[%s1776 + $0xac] sm:$0xff] %v1895
                  %v1897 = vld [vmem:[%s1775 + $0x90] sm:$0xff]
                  %1898 = vst [vmem:[%s1776 + $0xb4] sm:$0xff] %v1897
                  %v1899 = vld [vmem:[%s1775 + $0x98] sm:$0xff]
                  %1900 = vst [vmem:[%s1776 + $0xbc] sm:$0xff] %v1899
                  %v1901 = vld [vmem:[%s1775 + $0xa0] sm:$0xff]
                  %1902 = vst [vmem:[%s1776 + $0xc4] sm:$0xff] %v1901
                  %v1903 = vld [vmem:[%s1775 + $0xa8] sm:$0xff]
                  %1904 = vst [vmem:[%s1776 + $0xcc] sm:$0xff] %v1903
                  %s1905 = sadd.s32 1, %s1774
                  %p1906 = scmp.ge.s32.totalorder %s1905, %s1765
                  %s1907 = scalar_select %p1906, 0, %s1905
                  %s1908 = smul.u32 %s1907, 128
                  %s1909 = smul.u32 %s1907, 128
                  %s1910 = scalar_lea.vmem %s1528, %s1908 [#allocation3]
                  %s1911 = scalar_lea.vmem %s1539, %s1909
                $region152: #{model_forward.4} parent=146 // loop_footer
                  %s1771 = sadd.s32 %s1769, 1
                $region153: #{model_forward.4} parent=146 // loop_footer_branch
                  %1768 = sbr.rel target = $region149
                $region154: #{model_forward.4} parent=146 // loop_exit
                  _
                %s1912 = sshrl.u32 %s1764, 4
                %s1913 = sand.u32 %s1764, 15
                %s1914 = smul.u32 %s1912, 16
                %s1915 = smul.u32 128, %s1914
                %s1916 = sshra.s32 %s1915, 4
                %s1917 = scalar_lea.vmem %s1528, %s1916 [#allocation3]
                %s1918 = smul.u32 128, %s1914
                %s1919 = sshra.s32 %s1918, 4
                %s1920 = scalar_lea.vmem %s1539, %s1919
                // While loop
                $region155: #{model_forward.4} parent=146 // loop_pre_header
                  _
                $region156: #{model_forward.4} parent=146 // loop_header
                  %s1924 = sphi 0, %s1926
                  %p1925 = scmp.ge.s32.totalorder %s1924, %s1913
                  %s1929 = sphi 0, %s1942
                  %s1930 = sphi %s1917, %s1945
                  %s1931 = sphi %s1920, %s1946
                $region157: #{model_forward.4} parent=146 // loop_header_branch
                  %1928 = sbr.rel (%p1925) target = $region161
                $region158: #{model_forward.4} parent=146 // loop_body
                  %v1932 = vld [vmem:[%s1930] sm:$0xff]
                  %1933 = vst [vmem:[%s1931] sm:$0xff] %v1932
                  %v1934 = vld [vmem:[%s1930 + $0x10] sm:$0xff]
                  %1935 = vst [vmem:[%s1931 + $0x1c] sm:$0xff] %v1934
                  %v1936 = vld [vmem:[%s1930 + $0x20] sm:$0xff]
                  %1937 = vst [vmem:[%s1931 + $0x38] sm:$0xff] %v1936
                  %v1938 = vld [vmem:[%s1930 + $0x30] sm:$0xff]
                  %1939 = vst [vmem:[%s1931 + $0x54] sm:$0xff] %v1938
                  %s1940 = sadd.s32 1, %s1929
                  %p1941 = scmp.ge.s32.totalorder %s1940, %s1913
                  %s1942 = scalar_select %p1941, 0, %s1940
                  %s1943 = smul.u32 %s1942, 8
                  %s1944 = smul.u32 %s1942, 8
                  %s1945 = scalar_lea.vmem %s1917, %s1943 [#allocation3]
                  %s1946 = scalar_lea.vmem %s1920, %s1944
                $region159: #{model_forward.4} parent=146 // loop_footer
                  %s1926 = sadd.s32 %s1924, 1
                $region160: #{model_forward.4} parent=146 // loop_footer_branch
                  %1923 = sbr.rel target = $region156
                $region161: #{model_forward.4} parent=146 // loop_exit
                  _
                %s1947 = sshllo.u32 0, %s1759
                loop: start=0, step=1, limit=1
                $region162: #{model_forward.4} parent=146 // loop_pre_header
                  _
                $region163: #{model_forward.4} parent=146 // loop_header
                  %s1949 = sphi 0, %s1953
                  %p1950 = scmp.ge.s32.totalorder %s1949, 1
                  %s1954 = sphi %s1761, %s1761
                  %s1955 = sphi %s1763, %s1763
                $region164: #{model_forward.4} parent=146 // loop_header_branch
                  %1952 = sbr.rel (%p1950) target = $region168
                $region165: #{model_forward.4} parent=146 // loop_body
                  %v1956 = vld [vmem:[%s1954] sm:%s1947]
                  %1957 = vst [vmem:[%s1955] sm:%s1947] %v1956
                  %v1958 = vld [vmem:[%s1954 + $0x10] sm:%s1947]
                  %1959 = vst [vmem:[%s1955 + $0x1c] sm:%s1947] %v1958
                  %v1960 = vld [vmem:[%s1954 + $0x20] sm:%s1947]
                  %1961 = vst [vmem:[%s1955 + $0x38] sm:%s1947] %v1960
                  %v1962 = vld [vmem:[%s1954 + $0x30] sm:%s1947]
                  %1963 = vst [vmem:[%s1955 + $0x54] sm:%s1947] %v1962
                $region166: #{model_forward.4} parent=146 // loop_footer
                  %s1953 = sadd.s32 1, %s1949
                $region167: #{model_forward.4} parent=146 // loop_footer_branch
                  %1948 = sbr.rel target = $region163
                $region168: #{model_forward.4} parent=146 // loop_exit
                  _
              $region147: #{model_forward.4} parent=113 // pred_fallthru
                _
            $region114: #{model_forward.4} parent=109 // pred_fallthru
              _
            // Predicated region
            $region115: #{model_forward.4} parent=109 // pred_check
              %p1548 = pneg %p1544
            $region116: #{model_forward.4} parent=109 // pred_check_branch
              %1550 = sbr.rel (%p1548) target = $region118
            $region117: #{model_forward.4} parent=109 // pred_region
              %s1551 = sshllo.u32 0, %s1540
              loop: start=0, step=1, limit=1
              $region119: #{model_forward.4} parent=117 // loop_pre_header
                _
              $region120: #{model_forward.4} parent=117 // loop_header
                %s1553 = sphi 0, %s1557
                %p1554 = scmp.ge.s32.totalorder %s1553, 1
                %s1558 = sphi %s1528, %s1528
                %s1559 = sphi %s1539, %s1539
              $region121: #{model_forward.4} parent=117 // loop_header_branch
                %1556 = sbr.rel (%p1554) target = $region125
              $region122: #{model_forward.4} parent=117 // loop_body
                %v1560 = vld [vmem:[%s1558] sm:%s1551]
                %1561 = vst [vmem:[%s1559] sm:%s1551] %v1560
                %v1562 = vld [vmem:[%s1558 + $0x10] sm:%s1551]
                %1563 = vst [vmem:[%s1559 + $0x1c] sm:%s1551] %v1562
                %v1564 = vld [vmem:[%s1558 + $0x20] sm:%s1551]
                %1565 = vst [vmem:[%s1559 + $0x38] sm:%s1551] %v1564
                %v1566 = vld [vmem:[%s1558 + $0x30] sm:%s1551]
                %1567 = vst [vmem:[%s1559 + $0x54] sm:%s1551] %v1566
              $region123: #{model_forward.4} parent=117 // loop_footer
                %s1557 = sadd.s32 1, %s1553
              $region124: #{model_forward.4} parent=117 // loop_footer_branch
                %1552 = sbr.rel target = $region120
              $region125: #{model_forward.4} parent=117 // loop_exit
                _
            $region118: #{model_forward.4} parent=109 // pred_fallthru
              _
          $region110: #{model_forward.4} parent=105 // pred_fallthru
            _
          %1964 = vnop
        $region106: #{model_forward.4} parent=97 // pred_fallthru
          _
      $region98: #{model_forward.4} parent=5 // pred_fallthru
        _
      %p1965 = scmp.le.s32.totalorder 2, %s10
      // Predicated region
      $region169: #{model_forward.4} parent=5 // pred_check
        %p1966 = pneg %p1965
      $region170: #{model_forward.4} parent=5 // pred_check_branch
        %1968 = sbr.rel (%p1966) target = $region172
      $region171: #{model_forward.4} parent=5 // pred_region
        %s1969 = ssub.s32 %s10, 2
        // Predicated region
        $region173: #{model_forward.4} parent=171 // pred_check
          %p1970 = pneg %p128
        $region174: #{model_forward.4} parent=171 // pred_check_branch
          %1972 = sbr.rel (%p1970) target = $region176
        $region175: #{model_forward.4} parent=171 // pred_region
          %s1973 = sand.u32 %s113, 1
          %s1974 = sand.u32 %s113, 1
          %s1975 = smul.addr %s1974, 64
          %s1976 = scalar_lea.vmem [#allocation3], %s1975
        $region176: #{model_forward.4} parent=171 // pred_fallthru
          _
      $region172: #{model_forward.4} parent=5 // pred_fallthru
        _
    $region6: #{model_forward.4} parent=1 // loop_footer
      %s14 = sadd.s32 1, %s10
    $region7: #{model_forward.4} parent=1 // loop_footer_branch
      %9 = sbr.rel target = $region3
    $region8: #{model_forward.4} parent=1 // loop_exit
      _

// kernel: model_forward.5
$region0: #{model_forward.5}
  #allocation0 [shape = 'u32[]', space=smem, size = 0x4, offset = 0x4, fixed_abs, tag = 'smem constant byte address 0x4 - core index']
  #allocation1 [shape = 'u32[144,128]{1,0:T(1,128)}', space=vmem, size = 0x12000, scoped, tag = 'internal scratch']
  %s0 = inlined_call_operand.vmem [shape: bf16[512,162], index: 0, kind: input, shape index: {}]
  %s1 = inlined_call_operand.vmem [shape: bf16[64,512], index: 1, kind: input, shape index: {}]
  %s2 = inlined_call_operand.vmem [shape: f32[64,1], index: 2, kind: input, shape index: {}]
  %s3 = inlined_call_operand.vmem [shape: f32[64,1], index: 3, kind: input, shape index: {}]
  %s4 = inlined_call_operand.vmem [shape: bf16[64,162], index: 4, kind: output, shape index: {}]
  %s5 = sld [smem:[#allocation0]]
  $region26: #{model_forward.5} parent=0
    _
  %s7 = ssub.s32 1, %s5
  %s8 = scalar_select 0, %s7, %s5
  // Predicated region
  $region2: #{model_forward.5} parent=0 // pred_check
    _
  $region3: #{model_forward.5} parent=0 // pred_check_branch
    %10 = sbr.rel (0) target = $region5
  $region4: #{model_forward.5} parent=0 // pred_region
    _
  $region5: #{model_forward.5} parent=0 // pred_fallthru
    _
  // Predicated region
  $region6: #{model_forward.5} parent=0 // pred_check
    _
  $region7: #{model_forward.5} parent=0 // pred_check_branch
    %12 = sbr.rel (0) target = $region9
  $region8: #{model_forward.5} parent=0 // pred_region
    _
  $region9: #{model_forward.5} parent=0 // pred_fallthru
    _
  // Predicated region
  $region10: #{model_forward.5} parent=0 // pred_check
    _
  $region11: #{model_forward.5} parent=0 // pred_check_branch
    %14 = sbr.rel (0) target = $region13
  $region12: #{model_forward.5} parent=0 // pred_region
    _
  $region13: #{model_forward.5} parent=0 // pred_fallthru
    _
  // Predicated region
  $region14: #{model_forward.5} parent=0 // pred_check
    _
  $region15: #{model_forward.5} parent=0 // pred_check_branch
    %16 = sbr.rel (0) target = $region17
  $region16: #{model_forward.5} parent=0 // pred_region
    _
  $region17: #{model_forward.5} parent=0 // pred_fallthru
    _
  %v17 = vld [vmem:[%s1] sm:$0xff]
  %v18 = vld [vmem:[%s1 + $0x8] sm:$0xff]
  %v19 = vld [vmem:[%s1 + $0x10] sm:$0xff]
  %v20 = vld [vmem:[%s1 + $0x18] sm:$0xff]
  %v21 = vld [vmem:[%s1 + $0x20] sm:$0xff]
  %v22 = vld [vmem:[%s1 + $0x28] sm:$0xff]
  %v23 = vld [vmem:[%s1 + $0x30] sm:$0xff]
  %v24 = vld [vmem:[%s1 + $0x38] sm:$0xff]
  %v25 = vld [vmem:[%s1 + $0x40] sm:$0xff]
  %v26 = vld [vmem:[%s1 + $0x48] sm:$0xff]
  %v27 = vld [vmem:[%s1 + $0x50] sm:$0xff]
  %v28 = vld [vmem:[%s1 + $0x58] sm:$0xff]
  %v29 = vld [vmem:[%s1 + $0x60] sm:$0xff]
  %v30 = vld [vmem:[%s1 + $0x68] sm:$0xff]
  %v31 = vld [vmem:[%s1 + $0x70] sm:$0xff]
  %v32 = vld [vmem:[%s1 + $0x78] sm:$0xff]
  %v33 = vld [vmem:[%s0] sm:$0xff]
  %v34 = vld [vmem:[%s0 + $0x8] sm:$0xff]
  %v35 = vld [vmem:[%s0 + $0x10] sm:$0xff]
  %v36 = vld [vmem:[%s0 + $0x18] sm:$0xff]
  %v37 = vld [vmem:[%s0 + $0x20] sm:$0xff]
  %v38 = vld [vmem:[%s0 + $0x28] sm:$0xff]
  %v39 = vld [vmem:[%s0 + $0x30] sm:$0xff]
  %v40 = vld [vmem:[%s0 + $0x38] sm:$0xff]
  %v41 = vld [vmem:[%s0 + $0x40] sm:$0xff]
  %v42 = vld [vmem:[%s0 + $0x48] sm:$0xff]
  %v43 = vld [vmem:[%s0 + $0x50] sm:$0xff]
  %v44 = vld [vmem:[%s0 + $0x58] sm:$0xff]
  %v45 = vld [vmem:[%s0 + $0x60] sm:$0xff]
  %v46 = vld [vmem:[%s0 + $0x68] sm:$0xff]
  %v47 = vld [vmem:[%s0 + $0x70] sm:$0xff]
  %v48 = vld [vmem:[%s0 + $0x78] sm:$0xff]
  %v49 = vld [vmem:[%s0 + $0x80] sm:$0xff]
  %v50 = vld [vmem:[%s0 + $0x88] sm:$0xff]
  %v51 = vld [vmem:[%s0 + $0x90] sm:$0xff]
  %v52 = vld [vmem:[%s0 + $0x98] sm:$0xff]
  %v53 = vld [vmem:[%s0 + $0xa0] sm:$0xff]
  %v54 = vld [vmem:[%s0 + $0xa8] sm:$0xff]
  %v55 = vld [vmem:[%s0 + $0xb0] sm:$0xff]
  %v56 = vld [vmem:[%s0 + $0xb8] sm:$0xff]
  %v57 = vld [vmem:[%s0 + $0xc0] sm:$0xff]
  %v58 = vld [vmem:[%s0 + $0xc8] sm:$0xff]
  %v59 = vld [vmem:[%s0 + $0xd0] sm:$0xff]
  %v60 = vld [vmem:[%s0 + $0xd8] sm:$0xff]
  %v61 = vld [vmem:[%s0 + $0xe0] sm:$0xff]
  %v62 = vld [vmem:[%s0 + $0xe8] sm:$0xff]
  %v63 = vld [vmem:[%s0 + $0xf0] sm:$0xff]
  %v64 = vld [vmem:[%s0 + $0xf8] sm:$0xff]
  %v65 = vld [vmem:[%s0 + $0x100] sm:$0xff]
  %v66 = vld [vmem:[%s0 + $0x108] sm:$0xff]
  %v67 = vld [vmem:[%s0 + $0x110] sm:$0xff]
  %v68 = vld [vmem:[%s0 + $0x118] sm:$0xff]
  %v69 = vld [vmem:[%s0 + $0x120] sm:$0xff]
  %v70 = vld [vmem:[%s0 + $0x128] sm:$0xff]
  %v71 = vld [vmem:[%s0 + $0x130] sm:$0xff]
  %v72 = vld [vmem:[%s0 + $0x138] sm:$0xff]
  %v73 = vld [vmem:[%s0 + $0x140] sm:$0xff]
  %v74 = vld [vmem:[%s0 + $0x148] sm:$0xff]
  %v75 = vld [vmem:[%s0 + $0x150] sm:$0xff]
  %v76 = vld [vmem:[%s0 + $0x158] sm:$0xff]
  %v77 = vld [vmem:[%s0 + $0x160] sm:$0xff]
  %v78 = vld [vmem:[%s0 + $0x168] sm:$0xff]
  %v79 = vld [vmem:[%s0 + $0x170] sm:$0xff]
  %v80 = vld [vmem:[%s0 + $0x178] sm:$0xff]
  %v81 = vld [vmem:[%s0 + $0x180] sm:$0xff]
  %v82 = vld [vmem:[%s0 + $0x188] sm:$0xff]
  %v83 = vld [vmem:[%s0 + $0x190] sm:$0xff]
  %v84 = vld [vmem:[%s0 + $0x198] sm:$0xff]
  %v85 = vld [vmem:[%s0 + $0x1a0] sm:$0xff]
  %v86 = vld [vmem:[%s0 + $0x1a8] sm:$0xff]
  %v87 = vld [vmem:[%s0 + $0x1b0] sm:$0xff]
  %v88 = vld [vmem:[%s0 + $0x1b8] sm:$0xff]
  %v89 = vld [vmem:[%s0 + $0x1c0] sm:$0xff]
  %v90 = vld [vmem:[%s0 + $0x1c8] sm:$0xff]
  %v91 = vld [vmem:[%s0 + $0x1d0] sm:$0xff]
  %v92 = vld [vmem:[%s0 + $0x1d8] sm:$0xff]
  %v93 = vld [vmem:[%s0 + $0x1e0] sm:$0xff]
  %v94 = vld [vmem:[%s0 + $0x1e8] sm:$0xff]
  %v95 = vld [vmem:[%s0 + $0x1f0] sm:$0xff]
  %v96 = vld [vmem:[%s0 + $0x1f8] sm:$0xff]
  %v113 = vunpack.c.l.b16 %v17
  %v114 = vunpack.c.h.b16 %v17
  %v115 = vunpack.c.l.b16 %v18
  %v116 = vunpack.c.h.b16 %v18
  %v117 = vunpack.c.l.b16 %v19
  %v118 = vunpack.c.h.b16 %v19
  %v119 = vunpack.c.l.b16 %v20
  %v120 = vunpack.c.h.b16 %v20
  %v121 = vunpack.c.l.b16 %v21
  %v122 = vunpack.c.h.b16 %v21
  %v123 = vunpack.c.l.b16 %v22
  %v124 = vunpack.c.h.b16 %v22
  %v125 = vunpack.c.l.b16 %v23
  %v126 = vunpack.c.h.b16 %v23
  %v127 = vunpack.c.l.b16 %v24
  %v128 = vunpack.c.h.b16 %v24
  %v129 = vunpack.c.l.b16 %v25
  %v130 = vunpack.c.h.b16 %v25
  %v131 = vunpack.c.l.b16 %v26
  %v132 = vunpack.c.h.b16 %v26
  %v133 = vunpack.c.l.b16 %v27
  %v134 = vunpack.c.h.b16 %v27
  %v135 = vunpack.c.l.b16 %v28
  %v136 = vunpack.c.h.b16 %v28
  %v137 = vunpack.c.l.b16 %v29
  %v138 = vunpack.c.h.b16 %v29
  %v139 = vunpack.c.l.b16 %v30
  %v140 = vunpack.c.h.b16 %v30
  %v141 = vunpack.c.l.b16 %v31
  %v142 = vunpack.c.h.b16 %v31
  %v143 = vunpack.c.l.b16 %v32
  %v144 = vunpack.c.h.b16 %v32
  %v145 = vpack.c.b16 %v117, %v113
  %v146 = vpack.c.b16 %v118, %v114
  %v147 = vpack.c.b16 %v119, %v115
  %v148 = vpack.c.b16 %v120, %v116
  %v149 = vpack.c.b16 %v125, %v121
  %v150 = vpack.c.b16 %v126, %v122
  %v151 = vpack.c.b16 %v127, %v123
  %v152 = vpack.c.b16 %v128, %v124
  %v153 = vpack.c.b16 %v133, %v129
  %v154 = vpack.c.b16 %v134, %v130
  %v155 = vpack.c.b16 %v135, %v131
  %v156 = vpack.c.b16 %v136, %v132
  %v157 = vpack.c.b16 %v141, %v137
  %v158 = vpack.c.b16 %v142, %v138
  %v159 = vpack.c.b16 %v143, %v139
  %v160 = vpack.c.b16 %v144, %v140
  %v241 = vunpack.c.l.b16 %v33
  %v242 = vunpack.c.h.b16 %v33
  %v243 = vunpack.c.l.b16 %v34
  %v244 = vunpack.c.h.b16 %v34
  %v245 = vunpack.c.l.b16 %v35
  %v246 = vunpack.c.h.b16 %v35
  %v247 = vunpack.c.l.b16 %v36
  %v248 = vunpack.c.h.b16 %v36
  %v249 = vunpack.c.l.b16 %v37
  %v250 = vunpack.c.h.b16 %v37
  %v251 = vunpack.c.l.b16 %v38
  %v252 = vunpack.c.h.b16 %v38
  %v253 = vunpack.c.l.b16 %v39
  %v254 = vunpack.c.h.b16 %v39
  %v255 = vunpack.c.l.b16 %v40
  %v256 = vunpack.c.h.b16 %v40
  %v257 = vunpack.c.l.b16 %v41
  %v258 = vunpack.c.h.b16 %v41
  %v259 = vunpack.c.l.b16 %v42
  %v260 = vunpack.c.h.b16 %v42
  %v261 = vunpack.c.l.b16 %v43
  %v262 = vunpack.c.h.b16 %v43
  %v263 = vunpack.c.l.b16 %v44
  %v264 = vunpack.c.h.b16 %v44
  %v265 = vunpack.c.l.b16 %v45
  %v266 = vunpack.c.h.b16 %v45
  %v267 = vunpack.c.l.b16 %v46
  %v268 = vunpack.c.h.b16 %v46
  %v269 = vunpack.c.l.b16 %v47
  %v270 = vunpack.c.h.b16 %v47
  %v271 = vunpack.c.l.b16 %v48
  %v272 = vunpack.c.h.b16 %v48
  %v273 = vunpack.c.l.b16 %v49
  %v274 = vunpack.c.h.b16 %v49
  %v275 = vunpack.c.l.b16 %v50
  %v276 = vunpack.c.h.b16 %v50
  %v277 = vunpack.c.l.b16 %v51
  %v278 = vunpack.c.h.b16 %v51
  %v279 = vunpack.c.l.b16 %v52
  %v280 = vunpack.c.h.b16 %v52
  %v281 = vunpack.c.l.b16 %v53
  %v282 = vunpack.c.h.b16 %v53
  %v283 = vunpack.c.l.b16 %v54
  %v284 = vunpack.c.h.b16 %v54
  %v285 = vunpack.c.l.b16 %v55
  %v286 = vunpack.c.h.b16 %v55
  %v287 = vunpack.c.l.b16 %v56
  %v288 = vunpack.c.h.b16 %v56
  %v289 = vunpack.c.l.b16 %v57
  %v290 = vunpack.c.h.b16 %v57
  %v291 = vunpack.c.l.b16 %v58
  %v292 = vunpack.c.h.b16 %v58
  %v293 = vunpack.c.l.b16 %v59
  %v294 = vunpack.c.h.b16 %v59
  %v295 = vunpack.c.l.b16 %v60
  %v296 = vunpack.c.h.b16 %v60
  %v297 = vunpack.c.l.b16 %v61
  %v298 = vunpack.c.h.b16 %v61
  %v299 = vunpack.c.l.b16 %v62
  %v300 = vunpack.c.h.b16 %v62
  %v301 = vunpack.c.l.b16 %v63
  %v302 = vunpack.c.h.b16 %v63
  %v303 = vunpack.c.l.b16 %v64
  %v304 = vunpack.c.h.b16 %v64
  %v305 = vunpack.c.l.b16 %v65
  %v306 = vunpack.c.h.b16 %v65
  %v307 = vunpack.c.l.b16 %v66
  %v308 = vunpack.c.h.b16 %v66
  %v309 = vunpack.c.l.b16 %v67
  %v310 = vunpack.c.h.b16 %v67
  %v311 = vunpack.c.l.b16 %v68
  %v312 = vunpack.c.h.b16 %v68
  %v313 = vunpack.c.l.b16 %v69
  %v314 = vunpack.c.h.b16 %v69
  %v315 = vunpack.c.l.b16 %v70
  %v316 = vunpack.c.h.b16 %v70
  %v317 = vunpack.c.l.b16 %v71
  %v318 = vunpack.c.h.b16 %v71
  %v319 = vunpack.c.l.b16 %v72
  %v320 = vunpack.c.h.b16 %v72
  %v321 = vunpack.c.l.b16 %v73
  %v322 = vunpack.c.h.b16 %v73
  %v323 = vunpack.c.l.b16 %v74
  %v324 = vunpack.c.h.b16 %v74
  %v325 = vunpack.c.l.b16 %v75
  %v326 = vunpack.c.h.b16 %v75
  %v327 = vunpack.c.l.b16 %v76
  %v328 = vunpack.c.h.b16 %v76
  %v329 = vunpack.c.l.b16 %v77
  %v330 = vunpack.c.h.b16 %v77
  %v331 = vunpack.c.l.b16 %v78
  %v332 = vunpack.c.h.b16 %v78
  %v333 = vunpack.c.l.b16 %v79
  %v334 = vunpack.c.h.b16 %v79
  %v335 = vunpack.c.l.b16 %v80
  %v336 = vunpack.c.h.b16 %v80
  %v337 = vunpack.c.l.b16 %v81
  %v338 = vunpack.c.h.b16 %v81
  %v339 = vunpack.c.l.b16 %v82
  %v340 = vunpack.c.h.b16 %v82
  %v341 = vunpack.c.l.b16 %v83
  %v342 = vunpack.c.h.b16 %v83
  %v343 = vunpack.c.l.b16 %v84
  %v344 = vunpack.c.h.b16 %v84
  %v345 = vunpack.c.l.b16 %v85
  %v346 = vunpack.c.h.b16 %v85
  %v347 = vunpack.c.l.b16 %v86
  %v348 = vunpack.c.h.b16 %v86
  %v349 = vunpack.c.l.b16 %v87
  %v350 = vunpack.c.h.b16 %v87
  %v351 = vunpack.c.l.b16 %v88
  %v352 = vunpack.c.h.b16 %v88
  %v353 = vunpack.c.l.b16 %v89
  %v354 = vunpack.c.h.b16 %v89
  %v355 = vunpack.c.l.b16 %v90
  %v356 = vunpack.c.h.b16 %v90
  %v357 = vunpack.c.l.b16 %v91
  %v358 = vunpack.c.h.b16 %v91
  %v359 = vunpack.c.l.b16 %v92
  %v360 = vunpack.c.h.b16 %v92
  %v361 = vunpack.c.l.b16 %v93
  %v362 = vunpack.c.h.b16 %v93
  %v363 = vunpack.c.l.b16 %v94
  %v364 = vunpack.c.h.b16 %v94
  %v365 = vunpack.c.l.b16 %v95
  %v366 = vunpack.c.h.b16 %v95
  %v367 = vunpack.c.l.b16 %v96
  %v368 = vunpack.c.h.b16 %v96
  %v369 = vpack.c.b16 %v243, %v241
  %v370 = vpack.c.b16 %v244, %v242
  %v371 = vpack.c.b16 %v247, %v245
  %v372 = vpack.c.b16 %v248, %v246
  %v373 = vpack.c.b16 %v251, %v249
  %v374 = vpack.c.b16 %v252, %v250
  %v375 = vpack.c.b16 %v255, %v253
  %v376 = vpack.c.b16 %v256, %v254
  %v377 = vpack.c.b16 %v259, %v257
  %v378 = vpack.c.b16 %v260, %v258
  %v379 = vpack.c.b16 %v263, %v261
  %v380 = vpack.c.b16 %v264, %v262
  %v381 = vpack.c.b16 %v267, %v265
  %v382 = vpack.c.b16 %v268, %v266
  %v383 = vpack.c.b16 %v271, %v269
  %v384 = vpack.c.b16 %v272, %v270
  %v385 = vpack.c.b16 %v275, %v273
  %v386 = vpack.c.b16 %v276, %v274
  %v387 = vpack.c.b16 %v279, %v277
  %v388 = vpack.c.b16 %v280, %v278
  %v389 = vpack.c.b16 %v283, %v281
  %v390 = vpack.c.b16 %v284, %v282
  %v391 = vpack.c.b16 %v287, %v285
  %v392 = vpack.c.b16 %v288, %v286
  %v393 = vpack.c.b16 %v291, %v289
  %v394 = vpack.c.b16 %v292, %v290
  %v395 = vpack.c.b16 %v295, %v293
  %v396 = vpack.c.b16 %v296, %v294
  %v397 = vpack.c.b16 %v299, %v297
  %v398 = vpack.c.b16 %v300, %v298
  %v399 = vpack.c.b16 %v303, %v301
  %v400 = vpack.c.b16 %v304, %v302
  %v401 = vpack.c.b16 %v307, %v305
  %v402 = vpack.c.b16 %v308, %v306
  %v403 = vpack.c.b16 %v311, %v309
  %v404 = vpack.c.b16 %v312, %v310
  %v405 = vpack.c.b16 %v315, %v313
  %v406 = vpack.c.b16 %v316, %v314
  %v407 = vpack.c.b16 %v319, %v317
  %v408 = vpack.c.b16 %v320, %v318
  %v409 = vpack.c.b16 %v323, %v321
  %v410 = vpack.c.b16 %v324, %v322
  %v411 = vpack.c.b16 %v327, %v325
  %v412 = vpack.c.b16 %v328, %v326
  %v413 = vpack.c.b16 %v331, %v329
  %v414 = vpack.c.b16 %v332, %v330
  %v415 = vpack.c.b16 %v335, %v333
  %v416 = vpack.c.b16 %v336, %v334
  %v417 = vpack.c.b16 %v339, %v337
  %v418 = vpack.c.b16 %v340, %v338
  %v419 = vpack.c.b16 %v343, %v341
  %v420 = vpack.c.b16 %v344, %v342
  %v421 = vpack.c.b16 %v347, %v345
  %v422 = vpack.c.b16 %v348, %v346
  %v423 = vpack.c.b16 %v351, %v349
  %v424 = vpack.c.b16 %v352, %v350
  %v425 = vpack.c.b16 %v355, %v353
  %v426 = vpack.c.b16 %v356, %v354
  %v427 = vpack.c.b16 %v359, %v357
  %v428 = vpack.c.b16 %v360, %v358
  %v429 = vpack.c.b16 %v363, %v361
  %v430 = vpack.c.b16 %v364, %v362
  %v431 = vpack.c.b16 %v367, %v365
  %v432 = vpack.c.b16 %v368, %v366
  %497 = vmatprep.subr.bf16.mxu0 %v370
  %498 = vmatpush1.bf16.msra.mxu0 %v369
  %499 = vmatprep.subr.bf16.mxu0 %v372
  %500 = vmatpush1.bf16.msra.mxu0 %v371
  %501 = vmatprep.subr.bf16.mxu0 %v374
  %502 = vmatpush1.bf16.msra.mxu0 %v373
  %503 = vmatprep.subr.bf16.mxu0 %v376
  %504 = vmatpush1.bf16.msra.mxu0 %v375
  %505 = vmatprep.subr.bf16.mxu0 %v378
  %506 = vmatpush1.bf16.msra.mxu0 %v377
  %507 = vmatprep.subr.bf16.mxu0 %v380
  %508 = vmatpush1.bf16.msra.mxu0 %v379
  %509 = vmatprep.subr.bf16.mxu0 %v382
  %510 = vmatpush1.bf16.msra.mxu0 %v381
  %511 = vmatprep.subr.bf16.mxu0 %v384
  %512 = vmatpush1.bf16.msra.mxu0 %v383
  %513 = vmatprep.subr.bf16.mxu0 %v386
  %514 = vmatpush1.bf16.msra.mxu0 %v385
  %515 = vmatprep.subr.bf16.mxu0 %v388
  %516 = vmatpush1.bf16.msra.mxu0 %v387
  %517 = vmatprep.subr.bf16.mxu0 %v390
  %518 = vmatpush1.bf16.msra.mxu0 %v389
  %519 = vmatprep.subr.bf16.mxu0 %v392
  %520 = vmatpush1.bf16.msra.mxu0 %v391
  %521 = vmatprep.subr.bf16.mxu0 %v394
  %522 = vmatpush1.bf16.msra.mxu0 %v393
  %523 = vmatprep.subr.bf16.mxu0 %v396
  %524 = vmatpush1.bf16.msra.mxu0 %v395
  %525 = vmatprep.subr.bf16.mxu0 %v398
  %526 = vmatpush1.bf16.msra.mxu0 %v397
  %527 = vmatprep.subr.bf16.mxu0 %v400
  %528 = vmatpush1.bf16.msra.mxu0 %v399
  %529 = vmatprep.mubr.bf16.mxu0 %v146
  %530 = vmatmul.mubr.bf16.gmra.mrb[0].mxu0 %v145
  %v531 = vpop.f32.mrb[0].mxu0
  %v532 = vadd.f32 0.0, %v531
  %v533 = vpop.f32.mrb[0].mxu0
  %v534 = vadd.f32 0.0, %v533
  %v535 = vpop.f32.mrb[0].mxu0
  %v536 = vadd.f32 0.0, %v535
  %v537 = vpop.f32.mrb[0].mxu0
  %v538 = vadd.f32 0.0, %v537
  %539 = vmatprep.mubr.bf16.mxu0 %v150
  %540 = vmatmul.mubr.bf16.gmra.mrb[0].mxu0 %v149
  %v541 = vpop.f32.mrb[0].mxu0
  %v542 = vadd.f32 0.0, %v541
  %v543 = vpop.f32.mrb[0].mxu0
  %v544 = vadd.f32 0.0, %v543
  %v545 = vpop.f32.mrb[0].mxu0
  %v546 = vadd.f32 0.0, %v545
  %v547 = vpop.f32.mrb[0].mxu0
  %v548 = vadd.f32 0.0, %v547
  %549 = vmatprep.mubr.bf16.mxu0 %v154
  %550 = vmatmul.mubr.bf16.gmra.mrb[0].mxu0 %v153
  %v551 = vpop.f32.mrb[0].mxu0
  %v552 = vadd.f32 0.0, %v551
  %v553 = vpop.f32.mrb[0].mxu0
  %v554 = vadd.f32 0.0, %v553
  %v555 = vpop.f32.mrb[0].mxu0
  %v556 = vadd.f32 0.0, %v555
  %v557 = vpop.f32.mrb[0].mxu0
  %v558 = vadd.f32 0.0, %v557
  %559 = vmatprep.mubr.bf16.mxu0 %v158
  %560 = vmatmul.mubr.bf16.gmra.mrb[0].mxu0 %v157
  %v561 = vpop.f32.mrb[0].mxu0
  %v562 = vadd.f32 0.0, %v561
  %v563 = vpop.f32.mrb[0].mxu0
  %v564 = vadd.f32 0.0, %v563
  %v565 = vpop.f32.mrb[0].mxu0
  %v566 = vadd.f32 0.0, %v565
  %v567 = vpop.f32.mrb[0].mxu0
  %v568 = vadd.f32 0.0, %v567
  %569 = vdwg.mxu0
  %570 = vmatprep.subr.bf16.mxu0 %v402
  %571 = vmatpush1.bf16.msra.mxu0 %v401
  %572 = vmatprep.subr.bf16.mxu0 %v404
  %573 = vmatpush1.bf16.msra.mxu0 %v403
  %574 = vmatprep.subr.bf16.mxu0 %v406
  %575 = vmatpush1.bf16.msra.mxu0 %v405
  %576 = vmatprep.subr.bf16.mxu0 %v408
  %577 = vmatpush1.bf16.msra.mxu0 %v407
  %578 = vmatprep.subr.bf16.mxu0 %v410
  %579 = vmatpush1.bf16.msra.mxu0 %v409
  %580 = vmatprep.subr.bf16.mxu0 %v412
  %581 = vmatpush1.bf16.msra.mxu0 %v411
  %582 = vmatprep.subr.bf16.mxu0 %v414
  %583 = vmatpush1.bf16.msra.mxu0 %v413
  %584 = vmatprep.subr.bf16.mxu0 %v416
  %585 = vmatpush1.bf16.msra.mxu0 %v415
  %586 = vmatprep.subr.bf16.mxu0 %v418
  %587 = vmatpush1.bf16.msra.mxu0 %v417
  %588 = vmatprep.subr.bf16.mxu0 %v420
  %589 = vmatpush1.bf16.msra.mxu0 %v419
  %590 = vmatprep.subr.bf16.mxu0 %v422
  %591 = vmatpush1.bf16.msra.mxu0 %v421
  %592 = vmatprep.subr.bf16.mxu0 %v424
  %593 = vmatpush1.bf16.msra.mxu0 %v423
  %594 = vmatprep.subr.bf16.mxu0 %v426
  %595 = vmatpush1.bf16.msra.mxu0 %v425
  %596 = vmatprep.subr.bf16.mxu0 %v428
  %597 = vmatpush1.bf16.msra.mxu0 %v427
  %598 = vmatprep.subr.bf16.mxu0 %v430
  %599 = vmatpush1.bf16.msra.mxu0 %v429
  %600 = vmatprep.subr.bf16.mxu0 %v432
  %601 = vmatpush1.bf16.msra.mxu0 %v431
  %602 = vmatprep.mubr.bf16.mxu0 %v148
  %603 = vmatmul.mubr.bf16.gmra.mrb[0].mxu0 %v147
  %v604 = vpop.f32.mrb[0].mxu0
  %v605 = vadd.f32 %v532, %v604
  %v606 = vpop.f32.mrb[0].mxu0
  %v607 = vadd.f32 %v534, %v606
  %v608 = vpop.f32.mrb[0].mxu0
  %v609 = vadd.f32 %v536, %v608
  %v610 = vpop.f32.mrb[0].mxu0
  %v611 = vadd.f32 %v538, %v610
  %612 = vmatprep.mubr.bf16.mxu0 %v152
  %613 = vmatmul.mubr.bf16.gmra.mrb[0].mxu0 %v151
  %v614 = vpop.f32.mrb[0].mxu0
  %v615 = vadd.f32 %v542, %v614
  %v616 = vpop.f32.mrb[0].mxu0
  %v617 = vadd.f32 %v544, %v616
  %v618 = vpop.f32.mrb[0].mxu0
  %v619 = vadd.f32 %v546, %v618
  %v620 = vpop.f32.mrb[0].mxu0
  %v621 = vadd.f32 %v548, %v620
  %622 = vmatprep.mubr.bf16.mxu0 %v156
  %623 = vmatmul.mubr.bf16.gmra.mrb[0].mxu0 %v155
  %v624 = vpop.f32.mrb[0].mxu0
  %v625 = vadd.f32 %v552, %v624
  %v626 = vpop.f32.mrb[0].mxu0
  %v627 = vadd.f32 %v554, %v626
  %v628 = vpop.f32.mrb[0].mxu0
  %v629 = vadd.f32 %v556, %v628
  %v630 = vpop.f32.mrb[0].mxu0
  %v631 = vadd.f32 %v558, %v630
  %632 = vmatprep.mubr.bf16.mxu0 %v160
  %633 = vmatmul.mubr.bf16.gmra.mrb[0].mxu0 %v159
  %v634 = vpop.f32.mrb[0].mxu0
  %v635 = vadd.f32 %v562, %v634
  %v636 = vpop.f32.mrb[0].mxu0
  %v637 = vadd.f32 %v564, %v636
  %v638 = vpop.f32.mrb[0].mxu0
  %v639 = vadd.f32 %v566, %v638
  %v640 = vpop.f32.mrb[0].mxu0
  %v641 = vadd.f32 %v568, %v640
  %642 = vdwg.mxu0
  %v643 = vld [vmem:[%s2] sm:$0xff]
  %v644 = vld [vmem:[%s2 + $0x8] sm:$0xff]
  %v645 = vld [vmem:[%s2 + $0x10] sm:$0xff]
  %v646 = vld [vmem:[%s2 + $0x18] sm:$0xff]
  %v647 = vld [vmem:[%s2 + $0x20] sm:$0xff]
  %v648 = vld [vmem:[%s2 + $0x28] sm:$0xff]
  %v649 = vld [vmem:[%s2 + $0x30] sm:$0xff]
  %v650 = vld [vmem:[%s2 + $0x38] sm:$0xff]
  %652 = vset.pattern.permute.xlu0 0
  %653 = vperm.xlu0 %652, %v643
  %v654 = vpop.permute.xlu0 %653
  %657 = vset.pattern.permute.xlu0 0
  %658 = vperm.xlu0 %657, %v644
  %v659 = vpop.permute.xlu0 %658
  %662 = vset.pattern.permute.xlu0 0
  %663 = vperm.xlu0 %662, %v645
  %v664 = vpop.permute.xlu0 %663
  %667 = vset.pattern.permute.xlu0 0
  %668 = vperm.xlu0 %667, %v646
  %v669 = vpop.permute.xlu0 %668
  %672 = vset.pattern.permute.xlu0 0
  %673 = vperm.xlu0 %672, %v647
  %v674 = vpop.permute.xlu0 %673
  %677 = vset.pattern.permute.xlu0 0
  %678 = vperm.xlu0 %677, %v648
  %v679 = vpop.permute.xlu0 %678
  %682 = vset.pattern.permute.xlu0 0
  %683 = vperm.xlu0 %682, %v649
  %v684 = vpop.permute.xlu0 %683
  %687 = vset.pattern.permute.xlu0 0
  %688 = vperm.xlu0 %687, %v650
  %v689 = vpop.permute.xlu0 %688
  %v691 = vmul.f32 %v605, %v654
  %v692 = vmul.f32 %v607, %v654
  %v693 = vmul.f32 %v609, %v659
  %v694 = vmul.f32 %v611, %v659
  %v695 = vmul.f32 %v615, %v664
  %v696 = vmul.f32 %v617, %v664
  %v697 = vmul.f32 %v619, %v669
  %v698 = vmul.f32 %v621, %v669
  %v699 = vmul.f32 %v625, %v674
  %v700 = vmul.f32 %v627, %v674
  %v701 = vmul.f32 %v629, %v679
  %v702 = vmul.f32 %v631, %v679
  %v703 = vmul.f32 %v635, %v684
  %v704 = vmul.f32 %v637, %v684
  %v705 = vmul.f32 %v639, %v689
  %v706 = vmul.f32 %v641, %v689
  %v707 = vld [vmem:[%s3] sm:$0xff]
  %v708 = vld [vmem:[%s3 + $0x8] sm:$0xff]
  %v709 = vld [vmem:[%s3 + $0x10] sm:$0xff]
  %v710 = vld [vmem:[%s3 + $0x18] sm:$0xff]
  %v711 = vld [vmem:[%s3 + $0x20] sm:$0xff]
  %v712 = vld [vmem:[%s3 + $0x28] sm:$0xff]
  %v713 = vld [vmem:[%s3 + $0x30] sm:$0xff]
  %v714 = vld [vmem:[%s3 + $0x38] sm:$0xff]
  %716 = vset.pattern.permute.xlu0 0
  %717 = vperm.xlu0 %716, %v707
  %v718 = vpop.permute.xlu0 %717
  %721 = vset.pattern.permute.xlu0 0
  %722 = vperm.xlu0 %721, %v708
  %v723 = vpop.permute.xlu0 %722
  %726 = vset.pattern.permute.xlu0 0
  %727 = vperm.xlu0 %726, %v709
  %v728 = vpop.permute.xlu0 %727
  %731 = vset.pattern.permute.xlu0 0
  %732 = vperm.xlu0 %731, %v710
  %v733 = vpop.permute.xlu0 %732
  %736 = vset.pattern.permute.xlu0 0
  %737 = vperm.xlu0 %736, %v711
  %v738 = vpop.permute.xlu0 %737
  %741 = vset.pattern.permute.xlu0 0
  %742 = vperm.xlu0 %741, %v712
  %v743 = vpop.permute.xlu0 %742
  %746 = vset.pattern.permute.xlu0 0
  %747 = vperm.xlu0 %746, %v713
  %v748 = vpop.permute.xlu0 %747
  %751 = vset.pattern.permute.xlu0 0
  %752 = vperm.xlu0 %751, %v714
  %v753 = vpop.permute.xlu0 %752
  %v755 = vadd.f32 %v691, %v718
  %v756 = vadd.f32 %v692, %v718
  %v757 = vadd.f32 %v693, %v723
  %v758 = vadd.f32 %v694, %v723
  %v759 = vadd.f32 %v695, %v728
  %v760 = vadd.f32 %v696, %v728
  %v761 = vadd.f32 %v697, %v733
  %v762 = vadd.f32 %v698, %v733
  %v763 = vadd.f32 %v699, %v738
  %v764 = vadd.f32 %v700, %v738
  %v765 = vadd.f32 %v701, %v743
  %v766 = vadd.f32 %v702, %v743
  %v767 = vadd.f32 %v703, %v748
  %v768 = vadd.f32 %v704, %v748
  %v769 = vadd.f32 %v705, %v753
  %v770 = vadd.f32 %v706, %v753
  %v771 = vmax.f32 %v755, 0.0
  %v772 = vmax.f32 %v756, 0.0
  %v773 = vmax.f32 %v757, 0.0
  %v774 = vmax.f32 %v758, 0.0
  %v775 = vmax.f32 %v759, 0.0
  %v776 = vmax.f32 %v760, 0.0
  %v777 = vmax.f32 %v761, 0.0
  %v778 = vmax.f32 %v762, 0.0
  %v779 = vmax.f32 %v763, 0.0
  %v780 = vmax.f32 %v764, 0.0
  %v781 = vmax.f32 %v765, 0.0
  %v782 = vmax.f32 %v766, 0.0
  %v783 = vmax.f32 %v767, 0.0
  %v784 = vmax.f32 %v768, 0.0
  %v785 = vmax.f32 %v769, 0.0
  %v786 = vmax.f32 %v770, 0.0
  %v787 = vpack.c.bf16 %v773, %v771
  %v788 = vpack.c.bf16 %v774, %v772
  %v789 = vpack.c.bf16 %v777, %v775
  %v790 = vpack.c.bf16 %v778, %v776
  %v791 = vpack.c.bf16 %v781, %v779
  %v792 = vpack.c.bf16 %v782, %v780
  %v793 = vpack.c.bf16 %v785, %v783
  %v794 = vpack.c.bf16 %v786, %v784
  %v803 = vunpack.c.l.b16 %v787
  %v804 = vunpack.c.l.b16 %v788
  %v805 = vunpack.c.h.b16 %v787
  %v806 = vunpack.c.h.b16 %v788
  %v807 = vunpack.c.l.b16 %v789
  %v808 = vunpack.c.l.b16 %v790
  %v809 = vunpack.c.h.b16 %v789
  %v810 = vunpack.c.h.b16 %v790
  %v811 = vunpack.c.l.b16 %v791
  %v812 = vunpack.c.l.b16 %v792
  %v813 = vunpack.c.h.b16 %v791
  %v814 = vunpack.c.h.b16 %v792
  %v815 = vunpack.c.l.b16 %v793
  %v816 = vunpack.c.l.b16 %v794
  %v817 = vunpack.c.h.b16 %v793
  %v818 = vunpack.c.h.b16 %v794
  %v819 = vpack.c.b16 %v804, %v803
  %v820 = vpack.c.b16 %v806, %v805
  %v821 = vpack.c.b16 %v808, %v807
  %v822 = vpack.c.b16 %v810, %v809
  %v823 = vpack.c.b16 %v812, %v811
  %v824 = vpack.c.b16 %v814, %v813
  %v825 = vpack.c.b16 %v816, %v815
  %v826 = vpack.c.b16 %v818, %v817
  %vm835 = vcmask 1043456
  %vm836 = vcmask 277508
  %vm837 = vmor %vm836, %vm835
  %838 = vst.msk [vmem:[%s4] sm:$0xff] %vm837, %v819
  %839 = vst.msk [vmem:[%s4 + $0x8] sm:$0xff] %vm837, %v820
  %840 = vst.msk [vmem:[%s4 + $0x10] sm:$0xff] %vm837, %v821
  %841 = vst.msk [vmem:[%s4 + $0x18] sm:$0xff] %vm837, %v822
  %842 = vst.msk [vmem:[%s4 + $0x20] sm:$0xff] %vm837, %v823
  %843 = vst.msk [vmem:[%s4 + $0x28] sm:$0xff] %vm837, %v824
  %844 = vst.msk [vmem:[%s4 + $0x30] sm:$0xff] %vm837, %v825
  %845 = vst.msk [vmem:[%s4 + $0x38] sm:$0xff] %vm837, %v826
  // Predicated region
  $region18: #{model_forward.5} parent=0 // pred_check
    _
  $region19: #{model_forward.5} parent=0 // pred_check_branch
    %847 = sbr.rel (0) target = $region21
  $region20: #{model_forward.5} parent=0 // pred_region
    _
  $region21: #{model_forward.5} parent=0 // pred_fallthru
    _
  // Predicated region
  $region22: #{model_forward.5} parent=0 // pred_check
    _
  $region23: #{model_forward.5} parent=0 // pred_check_branch
    %849 = sbr.rel (0) target = $region25
  $region24: #{model_forward.5} parent=0 // pred_region
    _
  $region25: #{model_forward.5} parent=0 // pred_fallthru
    _

// kernel: model_forward.6
$region0: #{model_forward.6}
  #allocation0 [shape = 'u32[]', space=smem, size = 0x4, offset = 0x4, fixed_abs, tag = 'smem constant byte address 0x4 - core index']
  #allocation1 [shape = 'u32[144,128]{1,0:T(1,128)}', space=vmem, size = 0x12000, scoped, tag = 'internal scratch']
  %s0 = inlined_call_operand.vmem [shape: bf16[576,98], index: 0, kind: input, shape index: {}]
  %s1 = inlined_call_operand.vmem [shape: bf16[64,576], index: 1, kind: input, shape index: {}]
  %s2 = inlined_call_operand.vmem [shape: f32[64,1], index: 2, kind: input, shape index: {}]
  %s3 = inlined_call_operand.vmem [shape: f32[64,1], index: 3, kind: input, shape index: {}]
  %s4 = inlined_call_operand.vmem [shape: bf16[64,98], index: 4, kind: output, shape index: {}]
  %s5 = sld [smem:[#allocation0]]
  $region26: #{model_forward.6} parent=0
    _
  %s7 = ssub.s32 1, %s5
  %s8 = scalar_select 0, %s7, %s5
  // Predicated region
  $region2: #{model_forward.6} parent=0 // pred_check
    _
  $region3: #{model_forward.6} parent=0 // pred_check_branch
    %10 = sbr.rel (0) target = $region5
  $region4: #{model_forward.6} parent=0 // pred_region
    _
  $region5: #{model_forward.6} parent=0 // pred_fallthru
    _
  // Predicated region
  $region6: #{model_forward.6} parent=0 // pred_check
    _
  $region7: #{model_forward.6} parent=0 // pred_check_branch
    %12 = sbr.rel (0) target = $region9
  $region8: #{model_forward.6} parent=0 // pred_region
    _
  $region9: #{model_forward.6} parent=0 // pred_fallthru
    _
  // Predicated region
  $region10: #{model_forward.6} parent=0 // pred_check
    _
  $region11: #{model_forward.6} parent=0 // pred_check_branch
    %14 = sbr.rel (0) target = $region13
  $region12: #{model_forward.6} parent=0 // pred_region
    _
  $region13: #{model_forward.6} parent=0 // pred_fallthru
    _
  // Predicated region
  $region14: #{model_forward.6} parent=0 // pred_check
    _
  $region15: #{model_forward.6} parent=0 // pred_check_branch
    %16 = sbr.rel (0) target = $region17
  $region16: #{model_forward.6} parent=0 // pred_region
    _
  $region17: #{model_forward.6} parent=0 // pred_fallthru
    _
  %v18 = vld [vmem:[%s1] sm:$0xff]
  %v19 = vld [vmem:[%s1 + $0x8] sm:$0xff]
  %v20 = vld [vmem:[%s1 + $0x10] sm:$0xf]
  %v21 = vld [vmem:[%s1 + $0x14] sm:$0xff]
  %v22 = vld [vmem:[%s1 + $0x1c] sm:$0xff]
  %v23 = vld [vmem:[%s1 + $0x24] sm:$0xf]
  %v24 = vld [vmem:[%s1 + $0x28] sm:$0xff]
  %v25 = vld [vmem:[%s1 + $0x30] sm:$0xff]
  %v26 = vld [vmem:[%s1 + $0x38] sm:$0xf]
  %v27 = vld [vmem:[%s1 + $0x3c] sm:$0xff]
  %v28 = vld [vmem:[%s1 + $0x44] sm:$0xff]
  %v29 = vld [vmem:[%s1 + $0x4c] sm:$0xf]
  %v30 = vld [vmem:[%s1 + $0x50] sm:$0xff]
  %v31 = vld [vmem:[%s1 + $0x58] sm:$0xff]
  %v32 = vld [vmem:[%s1 + $0x60] sm:$0xf]
  %v33 = vld [vmem:[%s1 + $0x64] sm:$0xff]
  %v34 = vld [vmem:[%s1 + $0x6c] sm:$0xff]
  %v35 = vld [vmem:[%s1 + $0x74] sm:$0xf]
  %v36 = vld [vmem:[%s1 + $0x78] sm:$0xff]
  %v37 = vld [vmem:[%s1 + $0x80] sm:$0xff]
  %v38 = vld [vmem:[%s1 + $0x88] sm:$0xf]
  %v39 = vld [vmem:[%s1 + $0x8c] sm:$0xff]
  %v40 = vld [vmem:[%s1 + $0x94] sm:$0xff]
  %v41 = vld [vmem:[%s1 + $0x9c] sm:$0xf]
  %v42 = vld [vmem:[%s0] sm:$0xf]
  %v43 = vld [vmem:[%s0 + $0x4] sm:$0xf]
  %v44 = vld [vmem:[%s0 + $0x8] sm:$0xf]
  %v45 = vld [vmem:[%s0 + $0xc] sm:$0xf]
  %v46 = vld [vmem:[%s0 + $0x10] sm:$0xf]
  %v47 = vld [vmem:[%s0 + $0x14] sm:$0xf]
  %v48 = vld [vmem:[%s0 + $0x18] sm:$0xf]
  %v49 = vld [vmem:[%s0 + $0x1c] sm:$0xf]
  %v50 = vld [vmem:[%s0 + $0x20] sm:$0xf]
  %v51 = vld [vmem:[%s0 + $0x24] sm:$0xf]
  %v52 = vld [vmem:[%s0 + $0x28] sm:$0xf]
  %v53 = vld [vmem:[%s0 + $0x2c] sm:$0xf]
  %v54 = vld [vmem:[%s0 + $0x30] sm:$0xf]
  %v55 = vld [vmem:[%s0 + $0x34] sm:$0xf]
  %v56 = vld [vmem:[%s0 + $0x38] sm:$0xf]
  %v57 = vld [vmem:[%s0 + $0x3c] sm:$0xf]
  %v58 = vld [vmem:[%s0 + $0x40] sm:$0xf]
  %v59 = vld [vmem:[%s0 + $0x44] sm:$0xf]
  %v60 = vld [vmem:[%s0 + $0x48] sm:$0xf]
  %v61 = vld [vmem:[%s0 + $0x4c] sm:$0xf]
  %v62 = vld [vmem:[%s0 + $0x50] sm:$0xf]
  %v63 = vld [vmem:[%s0 + $0x54] sm:$0xf]
  %v64 = vld [vmem:[%s0 + $0x58] sm:$0xf]
  %v65 = vld [vmem:[%s0 + $0x5c] sm:$0xf]
  %v66 = vld [vmem:[%s0 + $0x60] sm:$0xf]
  %v67 = vld [vmem:[%s0 + $0x64] sm:$0xf]
  %v68 = vld [vmem:[%s0 + $0x68] sm:$0xf]
  %v69 = vld [vmem:[%s0 + $0x6c] sm:$0xf]
  %v70 = vld [vmem:[%s0 + $0x70] sm:$0xf]
  %v71 = vld [vmem:[%s0 + $0x74] sm:$0xf]
  %v72 = vld [vmem:[%s0 + $0x78] sm:$0xf]
  %v73 = vld [vmem:[%s0 + $0x7c] sm:$0xf]
  %v74 = vld [vmem:[%s0 + $0x80] sm:$0xf]
  %v75 = vld [vmem:[%s0 + $0x84] sm:$0xf]
  %v76 = vld [vmem:[%s0 + $0x88] sm:$0xf]
  %v77 = vld [vmem:[%s0 + $0x8c] sm:$0xf]
  %v78 = vld [vmem:[%s0 + $0x90] sm:$0xf]
  %v79 = vld [vmem:[%s0 + $0x94] sm:$0xf]
  %v80 = vld [vmem:[%s0 + $0x98] sm:$0xf]
  %v81 = vld [vmem:[%s0 + $0x9c] sm:$0xf]
  %v82 = vld [vmem:[%s0 + $0xa0] sm:$0xf]
  %v83 = vld [vmem:[%s0 + $0xa4] sm:$0xf]
  %v84 = vld [vmem:[%s0 + $0xa8] sm:$0xf]
  %v85 = vld [vmem:[%s0 + $0xac] sm:$0xf]
  %v86 = vld [vmem:[%s0 + $0xb0] sm:$0xf]
  %v87 = vld [vmem:[%s0 + $0xb4] sm:$0xf]
  %v88 = vld [vmem:[%s0 + $0xb8] sm:$0xf]
  %v89 = vld [vmem:[%s0 + $0xbc] sm:$0xf]
  %v90 = vld [vmem:[%s0 + $0xc0] sm:$0xf]
  %v91 = vld [vmem:[%s0 + $0xc4] sm:$0xf]
  %v92 = vld [vmem:[%s0 + $0xc8] sm:$0xf]
  %v93 = vld [vmem:[%s0 + $0xcc] sm:$0xf]
  %v94 = vld [vmem:[%s0 + $0xd0] sm:$0xf]
  %v95 = vld [vmem:[%s0 + $0xd4] sm:$0xf]
  %v96 = vld [vmem:[%s0 + $0xd8] sm:$0xf]
  %v97 = vld [vmem:[%s0 + $0xdc] sm:$0xf]
  %v98 = vld [vmem:[%s0 + $0xe0] sm:$0xf]
  %v99 = vld [vmem:[%s0 + $0xe4] sm:$0xf]
  %v100 = vld [vmem:[%s0 + $0xe8] sm:$0xf]
  %v101 = vld [vmem:[%s0 + $0xec] sm:$0xf]
  %v102 = vld [vmem:[%s0 + $0xf0] sm:$0xf]
  %v103 = vld [vmem:[%s0 + $0xf4] sm:$0xf]
  %v104 = vld [vmem:[%s0 + $0xf8] sm:$0xf]
  %v105 = vld [vmem:[%s0 + $0xfc] sm:$0xf]
  %v106 = vld [vmem:[%s0 + $0x100] sm:$0xf]
  %v107 = vld [vmem:[%s0 + $0x104] sm:$0xf]
  %v108 = vld [vmem:[%s0 + $0x108] sm:$0xf]
  %v109 = vld [vmem:[%s0 + $0x10c] sm:$0xf]
  %v110 = vld [vmem:[%s0 + $0x110] sm:$0xf]
  %v111 = vld [vmem:[%s0 + $0x114] sm:$0xf]
  %v112 = vld [vmem:[%s0 + $0x118] sm:$0xf]
  %v113 = vld [vmem:[%s0 + $0x11c] sm:$0xf]
  %v138 = vunpack.c.l.b16 %v18
  %v139 = vunpack.c.h.b16 %v18
  %v140 = vunpack.c.l.b16 %v19
  %v141 = vunpack.c.h.b16 %v19
  %v142 = vunpack.c.l.b16 %v20
  %v143 = vunpack.c.l.b16 %v21
  %v144 = vunpack.c.h.b16 %v21
  %v145 = vunpack.c.l.b16 %v22
  %v146 = vunpack.c.h.b16 %v22
  %v147 = vunpack.c.l.b16 %v23
  %v148 = vunpack.c.l.b16 %v24
  %v149 = vunpack.c.h.b16 %v24
  %v150 = vunpack.c.l.b16 %v25
  %v151 = vunpack.c.h.b16 %v25
  %v152 = vunpack.c.l.b16 %v26
  %v153 = vunpack.c.l.b16 %v27
  %v154 = vunpack.c.h.b16 %v27
  %v155 = vunpack.c.l.b16 %v28
  %v156 = vunpack.c.h.b16 %v28
  %v157 = vunpack.c.l.b16 %v29
  %v158 = vunpack.c.l.b16 %v30
  %v159 = vunpack.c.h.b16 %v30
  %v160 = vunpack.c.l.b16 %v31
  %v161 = vunpack.c.h.b16 %v31
  %v162 = vunpack.c.l.b16 %v32
  %v163 = vunpack.c.l.b16 %v33
  %v164 = vunpack.c.h.b16 %v33
  %v165 = vunpack.c.l.b16 %v34
  %v166 = vunpack.c.h.b16 %v34
  %v167 = vunpack.c.l.b16 %v35
  %v168 = vunpack.c.l.b16 %v36
  %v169 = vunpack.c.h.b16 %v36
  %v170 = vunpack.c.l.b16 %v37
  %v171 = vunpack.c.h.b16 %v37
  %v172 = vunpack.c.l.b16 %v38
  %v173 = vunpack.c.l.b16 %v39
  %v174 = vunpack.c.h.b16 %v39
  %v175 = vunpack.c.l.b16 %v40
  %v176 = vunpack.c.h.b16 %v40
  %v177 = vunpack.c.l.b16 %v41
  %v178 = vpack.c.b16 %v143, %v138
  %v179 = vpack.c.b16 %v144, %v139
  %v180 = vpack.c.b16 %v145, %v140
  %v181 = vpack.c.b16 %v146, %v141
  %v182 = vpack.c.b16 %v147, %v142
  %v183 = vpack.c.b16 %v153, %v148
  %v184 = vpack.c.b16 %v154, %v149
  %v185 = vpack.c.b16 %v155, %v150
  %v186 = vpack.c.b16 %v156, %v151
  %v187 = vpack.c.b16 %v157, %v152
  %v188 = vpack.c.b16 %v163, %v158
  %v189 = vpack.c.b16 %v164, %v159
  %v190 = vpack.c.b16 %v165, %v160
  %v191 = vpack.c.b16 %v166, %v161
  %v192 = vpack.c.b16 %v167, %v162
  %v193 = vpack.c.b16 %v173, %v168
  %v194 = vpack.c.b16 %v174, %v169
  %v195 = vpack.c.b16 %v175, %v170
  %v196 = vpack.c.b16 %v176, %v171
  %v197 = vpack.c.b16 %v177, %v172
  %v286 = vunpack.c.l.b16 %v42
  %v287 = vunpack.c.l.b16 %v43
  %v288 = vunpack.c.l.b16 %v44
  %v289 = vunpack.c.l.b16 %v45
  %v290 = vunpack.c.l.b16 %v46
  %v291 = vunpack.c.l.b16 %v47
  %v292 = vunpack.c.l.b16 %v48
  %v293 = vunpack.c.l.b16 %v49
  %v294 = vunpack.c.l.b16 %v50
  %v295 = vunpack.c.l.b16 %v51
  %v296 = vunpack.c.l.b16 %v52
  %v297 = vunpack.c.l.b16 %v53
  %v298 = vunpack.c.l.b16 %v54
  %v299 = vunpack.c.l.b16 %v55
  %v300 = vunpack.c.l.b16 %v56
  %v301 = vunpack.c.l.b16 %v57
  %v302 = vunpack.c.l.b16 %v58
  %v303 = vunpack.c.l.b16 %v59
  %v304 = vunpack.c.l.b16 %v60
  %v305 = vunpack.c.l.b16 %v61
  %v306 = vunpack.c.l.b16 %v62
  %v307 = vunpack.c.l.b16 %v63
  %v308 = vunpack.c.l.b16 %v64
  %v309 = vunpack.c.l.b16 %v65
  %v310 = vunpack.c.l.b16 %v66
  %v311 = vunpack.c.l.b16 %v67
  %v312 = vunpack.c.l.b16 %v68
  %v313 = vunpack.c.l.b16 %v69
  %v314 = vunpack.c.l.b16 %v70
  %v315 = vunpack.c.l.b16 %v71
  %v316 = vunpack.c.l.b16 %v72
  %v317 = vunpack.c.l.b16 %v73
  %v318 = vunpack.c.l.b16 %v74
  %v319 = vunpack.c.l.b16 %v75
  %v320 = vunpack.c.l.b16 %v76
  %v321 = vunpack.c.l.b16 %v77
  %v322 = vunpack.c.l.b16 %v78
  %v323 = vunpack.c.l.b16 %v79
  %v324 = vunpack.c.l.b16 %v80
  %v325 = vunpack.c.l.b16 %v81
  %v326 = vunpack.c.l.b16 %v82
  %v327 = vunpack.c.l.b16 %v83
  %v328 = vunpack.c.l.b16 %v84
  %v329 = vunpack.c.l.b16 %v85
  %v330 = vunpack.c.l.b16 %v86
  %v331 = vunpack.c.l.b16 %v87
  %v332 = vunpack.c.l.b16 %v88
  %v333 = vunpack.c.l.b16 %v89
  %v334 = vunpack.c.l.b16 %v90
  %v335 = vunpack.c.l.b16 %v91
  %v336 = vunpack.c.l.b16 %v92
  %v337 = vunpack.c.l.b16 %v93
  %v338 = vunpack.c.l.b16 %v94
  %v339 = vunpack.c.l.b16 %v95
  %v340 = vunpack.c.l.b16 %v96
  %v341 = vunpack.c.l.b16 %v97
  %v342 = vunpack.c.l.b16 %v98
  %v343 = vunpack.c.l.b16 %v99
  %v344 = vunpack.c.l.b16 %v100
  %v345 = vunpack.c.l.b16 %v101
  %v346 = vunpack.c.l.b16 %v102
  %v347 = vunpack.c.l.b16 %v103
  %v348 = vunpack.c.l.b16 %v104
  %v349 = vunpack.c.l.b16 %v105
  %v350 = vunpack.c.l.b16 %v106
  %v351 = vunpack.c.l.b16 %v107
  %v352 = vunpack.c.l.b16 %v108
  %v353 = vunpack.c.l.b16 %v109
  %v354 = vunpack.c.l.b16 %v110
  %v355 = vunpack.c.l.b16 %v111
  %v356 = vunpack.c.l.b16 %v112
  %v357 = vunpack.c.l.b16 %v113
  %v358 = vpack.c.b16 %v287, %v286
  %v359 = vpack.c.b16 %v289, %v288
  %v360 = vpack.c.b16 %v291, %v290
  %v361 = vpack.c.b16 %v293, %v292
  %v362 = vpack.c.b16 %v295, %v294
  %v363 = vpack.c.b16 %v297, %v296
  %v364 = vpack.c.b16 %v299, %v298
  %v365 = vpack.c.b16 %v301, %v300
  %v366 = vpack.c.b16 %v303, %v302
  %v367 = vpack.c.b16 %v305, %v304
  %v368 = vpack.c.b16 %v307, %v306
  %v369 = vpack.c.b16 %v309, %v308
  %v370 = vpack.c.b16 %v311, %v310
  %v371 = vpack.c.b16 %v313, %v312
  %v372 = vpack.c.b16 %v315, %v314
  %v373 = vpack.c.b16 %v317, %v316
  %v374 = vpack.c.b16 %v319, %v318
  %v375 = vpack.c.b16 %v321, %v320
  %v376 = vpack.c.b16 %v323, %v322
  %v377 = vpack.c.b16 %v325, %v324
  %v378 = vpack.c.b16 %v327, %v326
  %v379 = vpack.c.b16 %v329, %v328
  %v380 = vpack.c.b16 %v331, %v330
  %v381 = vpack.c.b16 %v333, %v332
  %v382 = vpack.c.b16 %v335, %v334
  %v383 = vpack.c.b16 %v337, %v336
  %v384 = vpack.c.b16 %v339, %v338
  %v385 = vpack.c.b16 %v341, %v340
  %v386 = vpack.c.b16 %v343, %v342
  %v387 = vpack.c.b16 %v345, %v344
  %v388 = vpack.c.b16 %v347, %v346
  %v389 = vpack.c.b16 %v349, %v348
  %v390 = vpack.c.b16 %v351, %v350
  %v391 = vpack.c.b16 %v353, %v352
  %v392 = vpack.c.b16 %v355, %v354
  %v393 = vpack.c.b16 %v357, %v356
  %vm430 = vcmask 523264
  %v432 = vsel %vm430, %v182, 0
  %v435 = vsel %vm430, %v187, 0
  %v438 = vsel %vm430, %v192, 0
  %v441 = vsel %vm430, %v197, 0
  %443 = vmatprep.subr.bf16.mxu0 0
  %444 = vmatpush1.bf16.msra.mxu0 %v358
  %445 = vmatprep.subr.bf16.mxu0 0
  %446 = vmatpush1.bf16.msra.mxu0 %v359
  %447 = vmatprep.subr.bf16.mxu0 0
  %448 = vmatpush1.bf16.msra.mxu0 %v360
  %449 = vmatprep.subr.bf16.mxu0 0
  %450 = vmatpush1.bf16.msra.mxu0 %v361
  %451 = vmatprep.subr.bf16.mxu0 0
  %452 = vmatpush1.bf16.msra.mxu0 %v362
  %453 = vmatprep.subr.bf16.mxu0 0
  %454 = vmatpush1.bf16.msra.mxu0 %v363
  %455 = vmatprep.subr.bf16.mxu0 0
  %456 = vmatpush1.bf16.msra.mxu0 %v364
  %457 = vmatprep.subr.bf16.mxu0 0
  %458 = vmatpush1.bf16.msra.mxu0 %v365
  %459 = vmatprep.subr.bf16.mxu0 0
  %460 = vmatpush1.bf16.msra.mxu0 %v366
  %461 = vmatprep.subr.bf16.mxu0 0
  %462 = vmatpush1.bf16.msra.mxu0 %v367
  %463 = vmatprep.subr.bf16.mxu0 0
  %464 = vmatpush1.bf16.msra.mxu0 %v368
  %465 = vmatprep.subr.bf16.mxu0 0
  %466 = vmatpush1.bf16.msra.mxu0 %v369
  %467 = vmatprep.subr.bf16.mxu0 0
  %468 = vmatpush1.bf16.msra.mxu0 %v370
  %469 = vmatprep.subr.bf16.mxu0 0
  %470 = vmatpush1.bf16.msra.mxu0 %v371
  %471 = vmatprep.subr.bf16.mxu0 0
  %472 = vmatpush1.bf16.msra.mxu0 %v372
  %473 = vmatprep.subr.bf16.mxu0 0
  %474 = vmatpush1.bf16.msra.mxu0 %v373
  %475 = vmatprep.mubr.bf16.mxu0 %v179
  %476 = vmatmul.mubr.bf16.gmra.mrb[0].mxu0 %v178
  %v477 = vpop.f32.mrb[0].mxu0
  %v478 = vadd.f32 0.0, %v477
  %v479 = vpop.f32.mrb[0].mxu0
  %v480 = vpop.f32.mrb[0].mxu0
  %v481 = vadd.f32 0.0, %v480
  %v482 = vpop.f32.mrb[0].mxu0
  %483 = vmatprep.mubr.bf16.mxu0 %v184
  %484 = vmatmul.mubr.bf16.gmra.mrb[0].mxu0 %v183
  %v485 = vpop.f32.mrb[0].mxu0
  %v486 = vadd.f32 0.0, %v485
  %v487 = vpop.f32.mrb[0].mxu0
  %v488 = vpop.f32.mrb[0].mxu0
  %v489 = vadd.f32 0.0, %v488
  %v490 = vpop.f32.mrb[0].mxu0
  %491 = vmatprep.mubr.bf16.mxu0 %v189
  %492 = vmatmul.mubr.bf16.gmra.mrb[0].mxu0 %v188
  %v493 = vpop.f32.mrb[0].mxu0
  %v494 = vadd.f32 0.0, %v493
  %v495 = vpop.f32.mrb[0].mxu0
  %v496 = vpop.f32.mrb[0].mxu0
  %v497 = vadd.f32 0.0, %v496
  %v498 = vpop.f32.mrb[0].mxu0
  %499 = vmatprep.mubr.bf16.mxu0 %v194
  %500 = vmatmul.mubr.bf16.gmra.mrb[0].mxu0 %v193
  %v501 = vpop.f32.mrb[0].mxu0
  %v502 = vadd.f32 0.0, %v501
  %v503 = vpop.f32.mrb[0].mxu0
  %v504 = vpop.f32.mrb[0].mxu0
  %v505 = vadd.f32 0.0, %v504
  %v506 = vpop.f32.mrb[0].mxu0
  %507 = vdwg.mxu0
  %508 = vmatprep.subr.bf16.mxu0 0
  %509 = vmatpush1.bf16.msra.mxu0 %v374
  %510 = vmatprep.subr.bf16.mxu0 0
  %511 = vmatpush1.bf16.msra.mxu0 %v375
  %512 = vmatprep.subr.bf16.mxu0 0
  %513 = vmatpush1.bf16.msra.mxu0 %v376
  %514 = vmatprep.subr.bf16.mxu0 0
  %515 = vmatpush1.bf16.msra.mxu0 %v377
  %516 = vmatprep.subr.bf16.mxu0 0
  %517 = vmatpush1.bf16.msra.mxu0 %v378
  %518 = vmatprep.subr.bf16.mxu0 0
  %519 = vmatpush1.bf16.msra.mxu0 %v379
  %520 = vmatprep.subr.bf16.mxu0 0
  %521 = vmatpush1.bf16.msra.mxu0 %v380
  %522 = vmatprep.subr.bf16.mxu0 0
  %523 = vmatpush1.bf16.msra.mxu0 %v381
  %524 = vmatprep.subr.bf16.mxu0 0
  %525 = vmatpush1.bf16.msra.mxu0 %v382
  %526 = vmatprep.subr.bf16.mxu0 0
  %527 = vmatpush1.bf16.msra.mxu0 %v383
  %528 = vmatprep.subr.bf16.mxu0 0
  %529 = vmatpush1.bf16.msra.mxu0 %v384
  %530 = vmatprep.subr.bf16.mxu0 0
  %531 = vmatpush1.bf16.msra.mxu0 %v385
  %532 = vmatprep.subr.bf16.mxu0 0
  %533 = vmatpush1.bf16.msra.mxu0 %v386
  %534 = vmatprep.subr.bf16.mxu0 0
  %535 = vmatpush1.bf16.msra.mxu0 %v387
  %536 = vmatprep.subr.bf16.mxu0 0
  %537 = vmatpush1.bf16.msra.mxu0 %v388
  %538 = vmatprep.subr.bf16.mxu0 0
  %539 = vmatpush1.bf16.msra.mxu0 %v389
  %540 = vmatprep.mubr.bf16.mxu0 %v181
  %541 = vmatmul.mubr.bf16.gmra.mrb[0].mxu0 %v180
  %v542 = vpop.f32.mrb[0].mxu0
  %v543 = vadd.f32 %v478, %v542
  %v544 = vpop.f32.mrb[0].mxu0
  %v545 = vpop.f32.mrb[0].mxu0
  %v546 = vadd.f32 %v481, %v545
  %v547 = vpop.f32.mrb[0].mxu0
  %548 = vmatprep.mubr.bf16.mxu0 %v186
  %549 = vmatmul.mubr.bf16.gmra.mrb[0].mxu0 %v185
  %v550 = vpop.f32.mrb[0].mxu0
  %v551 = vadd.f32 %v486, %v550
  %v552 = vpop.f32.mrb[0].mxu0
  %v553 = vpop.f32.mrb[0].mxu0
  %v554 = vadd.f32 %v489, %v553
  %v555 = vpop.f32.mrb[0].mxu0
  %556 = vmatprep.mubr.bf16.mxu0 %v191
  %557 = vmatmul.mubr.bf16.gmra.mrb[0].mxu0 %v190
  %v558 = vpop.f32.mrb[0].mxu0
  %v559 = vadd.f32 %v494, %v558
  %v560 = vpop.f32.mrb[0].mxu0
  %v561 = vpop.f32.mrb[0].mxu0
  %v562 = vadd.f32 %v497, %v561
  %v563 = vpop.f32.mrb[0].mxu0
  %564 = vmatprep.mubr.bf16.mxu0 %v196
  %565 = vmatmul.mubr.bf16.gmra.mrb[0].mxu0 %v195
  %v566 = vpop.f32.mrb[0].mxu0
  %v567 = vadd.f32 %v502, %v566
  %v568 = vpop.f32.mrb[0].mxu0
  %v569 = vpop.f32.mrb[0].mxu0
  %v570 = vadd.f32 %v505, %v569
  %v571 = vpop.f32.mrb[0].mxu0
  %572 = vdwg.mxu0
  %573 = vmatprep.subr.bf16.mxu0 0
  %574 = vmatpush1.bf16.msra.mxu0 %v390
  %575 = vmatprep.subr.bf16.mxu0 0
  %576 = vmatpush1.bf16.msra.mxu0 %v391
  %577 = vmatprep.subr.bf16.mxu0 0
  %578 = vmatpush1.bf16.msra.mxu0 %v392
  %579 = vmatprep.subr.bf16.mxu0 0
  %580 = vmatpush1.bf16.msra.mxu0 %v393
  %581 = vmatprep.subr.bf16.mxu0 0
  %582 = vmatpush1.bf16.msra.mxu0 0
  %583 = vmatprep.subr.bf16.mxu0 0
  %584 = vmatpush1.bf16.msra.mxu0 0
  %585 = vmatprep.subr.bf16.mxu0 0
  %586 = vmatpush1.bf16.msra.mxu0 0
  %587 = vmatprep.subr.bf16.mxu0 0
  %588 = vmatpush1.bf16.msra.mxu0 0
  %589 = vmatprep.subr.bf16.mxu0 0
  %590 = vmatpush1.bf16.msra.mxu0 0
  %591 = vmatprep.subr.bf16.mxu0 0
  %592 = vmatpush1.bf16.msra.mxu0 0
  %593 = vmatprep.subr.bf16.mxu0 0
  %594 = vmatpush1.bf16.msra.mxu0 0
  %595 = vmatprep.subr.bf16.mxu0 0
  %596 = vmatpush1.bf16.msra.mxu0 0
  %597 = vmatprep.subr.bf16.mxu0 0
  %598 = vmatpush1.bf16.msra.mxu0 0
  %599 = vmatprep.subr.bf16.mxu0 0
  %600 = vmatpush1.bf16.msra.mxu0 0
  %601 = vmatprep.subr.bf16.mxu0 0
  %602 = vmatpush1.bf16.msra.mxu0 0
  %603 = vmatprep.subr.bf16.mxu0 0
  %604 = vmatpush1.bf16.msra.mxu0 0
  %605 = vmatprep.mubr.bf16.mxu0 0
  %606 = vmatmul.mubr.bf16.gmra.mrb[0].mxu0 %v432
  %v607 = vpop.f32.mrb[0].mxu0
  %v608 = vadd.f32 %v543, %v607
  %v609 = vpop.f32.mrb[0].mxu0
  %v610 = vpop.f32.mrb[0].mxu0
  %v611 = vadd.f32 %v546, %v610
  %v612 = vpop.f32.mrb[0].mxu0
  %613 = vmatprep.mubr.bf16.mxu0 0
  %614 = vmatmul.mubr.bf16.gmra.mrb[0].mxu0 %v435
  %v615 = vpop.f32.mrb[0].mxu0
  %v616 = vadd.f32 %v551, %v615
  %v617 = vpop.f32.mrb[0].mxu0
  %v618 = vpop.f32.mrb[0].mxu0
  %v619 = vadd.f32 %v554, %v618
  %v620 = vpop.f32.mrb[0].mxu0
  %621 = vmatprep.mubr.bf16.mxu0 0
  %622 = vmatmul.mubr.bf16.gmra.mrb[0].mxu0 %v438
  %v623 = vpop.f32.mrb[0].mxu0
  %v624 = vadd.f32 %v559, %v623
  %v625 = vpop.f32.mrb[0].mxu0
  %v626 = vpop.f32.mrb[0].mxu0
  %v627 = vadd.f32 %v562, %v626
  %v628 = vpop.f32.mrb[0].mxu0
  %629 = vmatprep.mubr.bf16.mxu0 0
  %630 = vmatmul.mubr.bf16.gmra.mrb[0].mxu0 %v441
  %v631 = vpop.f32.mrb[0].mxu0
  %v632 = vadd.f32 %v567, %v631
  %v633 = vpop.f32.mrb[0].mxu0
  %v634 = vpop.f32.mrb[0].mxu0
  %v635 = vadd.f32 %v570, %v634
  %v636 = vpop.f32.mrb[0].mxu0
  %637 = vdwg.mxu0
  %v638 = vld [vmem:[%s2] sm:$0xff]
  %v639 = vld [vmem:[%s2 + $0x8] sm:$0xff]
  %v640 = vld [vmem:[%s2 + $0x10] sm:$0xff]
  %v641 = vld [vmem:[%s2 + $0x18] sm:$0xff]
  %v642 = vld [vmem:[%s2 + $0x20] sm:$0xff]
  %v643 = vld [vmem:[%s2 + $0x28] sm:$0xff]
  %v644 = vld [vmem:[%s2 + $0x30] sm:$0xff]
  %v645 = vld [vmem:[%s2 + $0x38] sm:$0xff]
  %647 = vset.pattern.permute.xlu0 0
  %648 = vperm.xlu0 %647, %v638
  %v649 = vpop.permute.xlu0 %648
  %652 = vset.pattern.permute.xlu0 0
  %653 = vperm.xlu0 %652, %v639
  %v654 = vpop.permute.xlu0 %653
  %657 = vset.pattern.permute.xlu0 0
  %658 = vperm.xlu0 %657, %v640
  %v659 = vpop.permute.xlu0 %658
  %662 = vset.pattern.permute.xlu0 0
  %663 = vperm.xlu0 %662, %v641
  %v664 = vpop.permute.xlu0 %663
  %667 = vset.pattern.permute.xlu0 0
  %668 = vperm.xlu0 %667, %v642
  %v669 = vpop.permute.xlu0 %668
  %672 = vset.pattern.permute.xlu0 0
  %673 = vperm.xlu0 %672, %v643
  %v674 = vpop.permute.xlu0 %673
  %677 = vset.pattern.permute.xlu0 0
  %678 = vperm.xlu0 %677, %v644
  %v679 = vpop.permute.xlu0 %678
  %682 = vset.pattern.permute.xlu0 0
  %683 = vperm.xlu0 %682, %v645
  %v684 = vpop.permute.xlu0 %683
  %v686 = vmul.f32 %v608, %v649
  %v687 = vmul.f32 %v611, %v654
  %v688 = vmul.f32 %v616, %v659
  %v689 = vmul.f32 %v619, %v664
  %v690 = vmul.f32 %v624, %v669
  %v691 = vmul.f32 %v627, %v674
  %v692 = vmul.f32 %v632, %v679
  %v693 = vmul.f32 %v635, %v684
  %v694 = vld [vmem:[%s3] sm:$0xff]
  %v695 = vld [vmem:[%s3 + $0x8] sm:$0xff]
  %v696 = vld [vmem:[%s3 + $0x10] sm:$0xff]
  %v697 = vld [vmem:[%s3 + $0x18] sm:$0xff]
  %v698 = vld [vmem:[%s3 + $0x20] sm:$0xff]
  %v699 = vld [vmem:[%s3 + $0x28] sm:$0xff]
  %v700 = vld [vmem:[%s3 + $0x30] sm:$0xff]
  %v701 = vld [vmem:[%s3 + $0x38] sm:$0xff]
  %703 = vset.pattern.permute.xlu0 0
  %704 = vperm.xlu0 %703, %v694
  %v705 = vpop.permute.xlu0 %704
  %708 = vset.pattern.permute.xlu0 0
  %709 = vperm.xlu0 %708, %v695
  %v710 = vpop.permute.xlu0 %709
  %713 = vset.pattern.permute.xlu0 0
  %714 = vperm.xlu0 %713, %v696
  %v715 = vpop.permute.xlu0 %714
  %718 = vset.pattern.permute.xlu0 0
  %719 = vperm.xlu0 %718, %v697
  %v720 = vpop.permute.xlu0 %719
  %723 = vset.pattern.permute.xlu0 0
  %724 = vperm.xlu0 %723, %v698
  %v725 = vpop.permute.xlu0 %724
  %728 = vset.pattern.permute.xlu0 0
  %729 = vperm.xlu0 %728, %v699
  %v730 = vpop.permute.xlu0 %729
  %733 = vset.pattern.permute.xlu0 0
  %734 = vperm.xlu0 %733, %v700
  %v735 = vpop.permute.xlu0 %734
  %738 = vset.pattern.permute.xlu0 0
  %739 = vperm.xlu0 %738, %v701
  %v740 = vpop.permute.xlu0 %739
  %v742 = vadd.f32 %v686, %v705
  %v743 = vadd.f32 %v687, %v710
  %v744 = vadd.f32 %v688, %v715
  %v745 = vadd.f32 %v689, %v720
  %v746 = vadd.f32 %v690, %v725
  %v747 = vadd.f32 %v691, %v730
  %v748 = vadd.f32 %v692, %v735
  %v749 = vadd.f32 %v693, %v740
  %v750 = vmax.f32 %v742, 0.0
  %v751 = vmax.f32 %v743, 0.0
  %v752 = vmax.f32 %v744, 0.0
  %v753 = vmax.f32 %v745, 0.0
  %v754 = vmax.f32 %v746, 0.0
  %v755 = vmax.f32 %v747, 0.0
  %v756 = vmax.f32 %v748, 0.0
  %v757 = vmax.f32 %v749, 0.0
  %v758 = vpack.c.bf16 %v751, %v750
  %v759 = vpack.c.bf16 %v753, %v752
  %v760 = vpack.c.bf16 %v755, %v754
  %v761 = vpack.c.bf16 %v757, %v756
  %v766 = vunpack.c.l.b16 %v758
  %v767 = vunpack.c.h.b16 %v758
  %v768 = vunpack.c.l.b16 %v759
  %v769 = vunpack.c.h.b16 %v759
  %v770 = vunpack.c.l.b16 %v760
  %v771 = vunpack.c.h.b16 %v760
  %v772 = vunpack.c.l.b16 %v761
  %v773 = vunpack.c.h.b16 %v761
  %v774 = vpack.c.b16 %v766, %v766
  %v775 = vpack.c.b16 %v767, %v767
  %v776 = vpack.c.b16 %v768, %v768
  %v777 = vpack.c.b16 %v769, %v769
  %v778 = vpack.c.b16 %v770, %v770
  %v779 = vpack.c.b16 %v771, %v771
  %v780 = vpack.c.b16 %v772, %v772
  %v781 = vpack.c.b16 %v773, %v773
  %vm790 = vcmask 797696
  %791 = vst.msk [vmem:[%s4] sm:$0xf] %vm790, %v774
  %792 = vst.msk [vmem:[%s4 + $0x4] sm:$0xf] %vm790, %v775
  %793 = vst.msk [vmem:[%s4 + $0x8] sm:$0xf] %vm790, %v776
  %794 = vst.msk [vmem:[%s4 + $0xc] sm:$0xf] %vm790, %v777
  %795 = vst.msk [vmem:[%s4 + $0x10] sm:$0xf] %vm790, %v778
  %796 = vst.msk [vmem:[%s4 + $0x14] sm:$0xf] %vm790, %v779
  %797 = vst.msk [vmem:[%s4 + $0x18] sm:$0xf] %vm790, %v780
  %798 = vst.msk [vmem:[%s4 + $0x1c] sm:$0xf] %vm790, %v781
  // Predicated region
  $region18: #{model_forward.6} parent=0 // pred_check
    _
  $region19: #{model_forward.6} parent=0 // pred_check_branch
    %800 = sbr.rel (0) target = $region21
  $region20: #{model_forward.6} parent=0 // pred_region
    _
  $region21: #{model_forward.6} parent=0 // pred_fallthru
    _
  // Predicated region
  $region22: #{model_forward.6} parent=0 // pred_check
    _
  $region23: #{model_forward.6} parent=0 // pred_check_branch
    %802 = sbr.rel (0) target = $region25
  $region24: #{model_forward.6} parent=0 // pred_region
    _
  $region25: #{model_forward.6} parent=0 // pred_fallthru
    _

// kernel: model_forward.7
$region0: #{model_forward.7}
  #allocation0 [shape = 'u32[]', space=smem, size = 0x4, offset = 0x4, fixed_abs, tag = 'smem constant byte address 0x4 - core index']
  #allocation1 [shape = 'u32[144,128]{1,0:T(1,128)}', space=vmem, size = 0x12000, scoped, tag = 'internal scratch']
  #allocation2 [shape = 'f32[2,1024]{1,0:T(2,128)}', space=vmem, size = 0x2000, scoped, tag = 'scratch operand']
  %s0 = inlined_call_operand.vmem [shape: bf16[2,3584], index: 0, kind: input, shape index: {}]
  %s1 = inlined_call_operand.vmem [shape: bf16[3584,1024], index: 1, kind: input, shape index: {}]
  %s2 = inlined_call_operand.vmem [shape: f32[1,1024], index: 2, kind: input, shape index: {}]
  %s3 = inlined_call_operand.vmem [shape: bf16[1024,7], index: 3, kind: input, shape index: {}]
  %s4 = inlined_call_operand.vmem [shape: f32[1,7], index: 4, kind: input, shape index: {}]
  %s5 = inlined_call_operand.hbm [shape: f32[2,6], index: 5, kind: output, shape index: {}]
  %s6 = sld [smem:[#allocation0]]
  $region61: #{model_forward.7} parent=0
    _
  %s8 = ssub.s32 1, %s6
  %s9 = scalar_select 0, %s8, %s6
  $region1: #{model_forward.7} parent=0
    #allocation3 [shape = 'u8[1024]{0}', space=vmem, size = 0x400, scoped, tag = 'output window, operand 0, single buffered']
    #allocation4 [shape = 's32[2]{0}', space=sflag, size = 0x8, scoped, tag = 'scoped memory for model_forward.7']
    %10 = vsyncpa [#allocation4], 0
    loop: start=0, step=1, limit=9
    $region2: #{model_forward.7} parent=1 // loop_pre_header
      _
    $region3: #{model_forward.7} parent=1 // loop_header
      %s12 = sphi 0, %s16
      %p13 = scmp.ge.s32.totalorder %s12, 9
      %s22 = sphi 0, %s24
      %s25 = sphi 0, %s22
      %s26 = sphi 0, %s25
      %s42 = sphi 0, %s26
      %s48 = sphi 0, %s50
      %s51 = sphi 0, %s48
      %s52 = sphi 0, %s51
      %s68 = sphi 0, %s52
      %s72 = sphi 0, %s72
      %s74 = sphi 0, %s72
      %s75 = sphi 0, %s74
      %s89 = sphi 0, %s75
      %s93 = sphi 0, %s93
      %s95 = sphi 0, %s93
      %s96 = sphi 0, %s95
      %s110 = sphi 0, %s96
      %s114 = sphi 0, %s114
      %s116 = sphi 0, %s114
      %s117 = sphi 0, %s116
      %s131 = sphi 0, %s117
      %s135 = sphi 0, %s135
      %s137 = sphi 0, %s135
      %s138 = sphi 0, %s137
      %s152 = sphi 0, %s138
    $region4: #{model_forward.7} parent=1 // loop_header_branch
      %15 = sbr.rel (%p13) target = $region8
    $region5: #{model_forward.7} parent=1 // loop_body
      %s17 = ssub.s32 %s12, 1
      %s18 = ssub.s32 %s12, 2
      %s19 = sadd.s32 %s12, 1
      %s20 = ssub.s32 %s12, %s19
      %p21 = scmp.eq.s32.totalorder %s20, 0
      %s23 = sadd.s32 %s22, 1
      %s24 = scalar_select %p21, %s22, %s23
      %p27 = pneg %p21
      %p28 = scmp.eq.s32.totalorder %s12, 6
      %p29 = por %p27, %p28
      %p30 = scmp.ne.s32.totalorder %s22, %s25
      %p31 = scmp.eq.s32.totalorder %s12, 0
      %p32 = por %p30, %p31
      %p33 = scmp.ne.s32.totalorder %s22, %s25
      %p34 = scmp.eq.s32.totalorder %s17, 6
      %p35 = por %p33, %p34
      %p36 = scmp.ne.s32.totalorder %s25, %s26
      %p37 = scmp.eq.s32.totalorder %s17, 0
      %p38 = por %p36, %p37
      %p39 = scmp.ne.s32.totalorder %s25, %s26
      %p40 = scmp.eq.s32.totalorder %s18, 6
      %p41 = por %p39, %p40
      %p43 = scmp.ne.s32.totalorder %s26, %s42
      %p44 = scmp.eq.s32.totalorder %s18, 0
      %p45 = por %p43, %p44
      %s46 = ssub.s32 %s12, %s19
      %p47 = scmp.eq.s32.totalorder %s46, 0
      %s49 = sadd.s32 %s48, 1
      %s50 = scalar_select %p47, %s48, %s49
      %p53 = pneg %p47
      %p54 = scmp.eq.s32.totalorder %s12, 6
      %p55 = por %p53, %p54
      %p56 = scmp.ne.s32.totalorder %s48, %s51
      %p57 = scmp.eq.s32.totalorder %s12, 0
      %p58 = por %p56, %p57
      %p59 = scmp.ne.s32.totalorder %s48, %s51
      %p60 = scmp.eq.s32.totalorder %s17, 6
      %p61 = por %p59, %p60
      %p62 = scmp.ne.s32.totalorder %s51, %s52
      %p63 = scmp.eq.s32.totalorder %s17, 0
      %p64 = por %p62, %p63
      %p65 = scmp.ne.s32.totalorder %s51, %s52
      %p66 = scmp.eq.s32.totalorder %s18, 6
      %p67 = por %p65, %p66
      %p69 = scmp.ne.s32.totalorder %s52, %s68
      %p70 = scmp.eq.s32.totalorder %s18, 0
      %p71 = por %p69, %p70
      %s73 = sadd.s32 %s72, 1
      %p76 = scmp.eq.s32.totalorder %s12, 6
      %p77 = scmp.ne.s32.totalorder %s72, %s74
      %p78 = scmp.eq.s32.totalorder %s12, 0
      %p79 = por %p77, %p78
      %p80 = scmp.ne.s32.totalorder %s72, %s74
      %p81 = scmp.eq.s32.totalorder %s17, 6
      %p82 = por %p80, %p81
      %p83 = scmp.ne.s32.totalorder %s74, %s75
      %p84 = scmp.eq.s32.totalorder %s17, 0
      %p85 = por %p83, %p84
      %p86 = scmp.ne.s32.totalorder %s74, %s75
      %p87 = scmp.eq.s32.totalorder %s18, 6
      %p88 = por %p86, %p87
      %p90 = scmp.ne.s32.totalorder %s75, %s89
      %p91 = scmp.eq.s32.totalorder %s18, 0
      %p92 = por %p90, %p91
      %s94 = sadd.s32 %s93, 1
      %p97 = scmp.eq.s32.totalorder %s12, 6
      %p98 = scmp.ne.s32.totalorder %s93, %s95
      %p99 = scmp.eq.s32.totalorder %s12, 0
      %p100 = por %p98, %p99
      %p101 = scmp.ne.s32.totalorder %s93, %s95
      %p102 = scmp.eq.s32.totalorder %s17, 6
      %p103 = por %p101, %p102
      %p104 = scmp.ne.s32.totalorder %s95, %s96
      %p105 = scmp.eq.s32.totalorder %s17, 0
      %p106 = por %p104, %p105
      %p107 = scmp.ne.s32.totalorder %s95, %s96
      %p108 = scmp.eq.s32.totalorder %s18, 6
      %p109 = por %p107, %p108
      %p111 = scmp.ne.s32.totalorder %s96, %s110
      %p112 = scmp.eq.s32.totalorder %s18, 0
      %p113 = por %p111, %p112
      %s115 = sadd.s32 %s114, 1
      %p118 = scmp.eq.s32.totalorder %s12, 6
      %p119 = scmp.ne.s32.totalorder %s114, %s116
      %p120 = scmp.eq.s32.totalorder %s12, 0
      %p121 = por %p119, %p120
      %p122 = scmp.ne.s32.totalorder %s114, %s116
      %p123 = scmp.eq.s32.totalorder %s17, 6
      %p124 = por %p122, %p123
      %p125 = scmp.ne.s32.totalorder %s116, %s117
      %p126 = scmp.eq.s32.totalorder %s17, 0
      %p127 = por %p125, %p126
      %p128 = scmp.ne.s32.totalorder %s116, %s117
      %p129 = scmp.eq.s32.totalorder %s18, 6
      %p130 = por %p128, %p129
      %p132 = scmp.ne.s32.totalorder %s117, %s131
      %p133 = scmp.eq.s32.totalorder %s18, 0
      %p134 = por %p132, %p133
      %s136 = sadd.s32 %s135, 1
      %p139 = scmp.eq.s32.totalorder %s12, 6
      %p140 = scmp.ne.s32.totalorder %s135, %s137
      %p141 = scmp.eq.s32.totalorder %s12, 0
      %p142 = por %p140, %p141
      %p143 = scmp.ne.s32.totalorder %s135, %s137
      %p144 = scmp.eq.s32.totalorder %s17, 6
      %p145 = por %p143, %p144
      %p146 = scmp.ne.s32.totalorder %s137, %s138
      %p147 = scmp.eq.s32.totalorder %s17, 0
      %p148 = por %p146, %p147
      %p149 = scmp.ne.s32.totalorder %s137, %s138
      %p150 = scmp.eq.s32.totalorder %s18, 6
      %p151 = por %p149, %p150
      %p153 = scmp.ne.s32.totalorder %s138, %s152
      %p154 = scmp.eq.s32.totalorder %s18, 0
      %p155 = por %p153, %p154
      %p156 = scmp.le.s32.totalorder 1, %s12
      %p157 = scmp.lt.s32.totalorder %s12, 8
      %p158 = pnand %p156, %p157
      %p159 = pneg %p158
      // Predicated region
      $region9: #{model_forward.7} parent=5 // pred_check
        _
      $region10: #{model_forward.7} parent=5 // pred_check_branch
        %161 = sbr.rel (%p158) target = $region12
      $region11: #{model_forward.7} parent=5 // pred_region
        %s162 = ssub.s32 %s12, 1
        // Predicated region
        $region13: #{model_forward.7} parent=11 // pred_check
          %p163 = pneg %p85
        $region14: #{model_forward.7} parent=11 // pred_check_branch
          %165 = sbr.rel (%p163) target = $region16
        $region15: #{model_forward.7} parent=11 // pred_region
          _
        $region16: #{model_forward.7} parent=11 // pred_fallthru
          _
        // Predicated region
        $region17: #{model_forward.7} parent=11 // pred_check
          %p166 = pneg %p106
        $region18: #{model_forward.7} parent=11 // pred_check_branch
          %168 = sbr.rel (%p166) target = $region20
        $region19: #{model_forward.7} parent=11 // pred_region
          _
        $region20: #{model_forward.7} parent=11 // pred_fallthru
          _
        // Predicated region
        $region21: #{model_forward.7} parent=11 // pred_check
          %p169 = pneg %p127
        $region22: #{model_forward.7} parent=11 // pred_check_branch
          %171 = sbr.rel (%p169) target = $region24
        $region23: #{model_forward.7} parent=11 // pred_region
          _
        $region24: #{model_forward.7} parent=11 // pred_fallthru
          _
      $region12: #{model_forward.7} parent=5 // pred_fallthru
        _
      %p172 = scmp.lt.s32.totalorder %s12, 7
      // Predicated region
      $region25: #{model_forward.7} parent=5 // pred_check
        %p173 = pneg %p172
      $region26: #{model_forward.7} parent=5 // pred_check_branch
        %175 = sbr.rel (%p173) target = $region28
      $region27: #{model_forward.7} parent=5 // pred_region
        // Predicated region
        $region29: #{model_forward.7} parent=27 // pred_check
          %p176 = pneg %p32
        $region30: #{model_forward.7} parent=27 // pred_check_branch
          %178 = sbr.rel (%p176) target = $region32
        $region31: #{model_forward.7} parent=27 // pred_region
          %s179 = smul.u32 4, %s12
          %p180 = scmp.lt.s32.totalorder %s179, 27
          %s181 = scalar_select %p180, %s179, 27
          %s182 = scalar_lea.vmem %s0, %s181
          %s183 = smul.u32 4, %s12
        $region32: #{model_forward.7} parent=27 // pred_fallthru
          _
        // Predicated region
        $region33: #{model_forward.7} parent=27 // pred_check
          %p184 = pneg %p58
        $region34: #{model_forward.7} parent=27 // pred_check_branch
          %186 = sbr.rel (%p184) target = $region36
        $region35: #{model_forward.7} parent=27 // pred_region
          %s187 = smul.u32 64, %s12
          %p188 = scmp.lt.s32.totalorder %s187, 447
          %s189 = scalar_select %p188, %s187, 447
          %s190 = smul.addr %s189, 8
          %s191 = smul.addr %s190, 4
          %s192 = scalar_lea.vmem %s1, %s191
          %s193 = smul.u32 64, %s12
        $region36: #{model_forward.7} parent=27 // pred_fallthru
          _
      $region28: #{model_forward.7} parent=5 // pred_fallthru
        _
      %p194 = scmp.le.s32.totalorder 1, %s12
      %p195 = scmp.lt.s32.totalorder %s12, 8
      %p196 = pnand %p194, %p195
      %p197 = pneg %p196
      // Predicated region
      $region37: #{model_forward.7} parent=5 // pred_check
        _
      $region38: #{model_forward.7} parent=5 // pred_check_branch
        %199 = sbr.rel (%p196) target = $region40
      $region39: #{model_forward.7} parent=5 // pred_region
        %s200 = ssub.s32 %s12, 1
        %s201 = smul.u32 4, %s17
        %p202 = scmp.lt.s32.totalorder %s201, 27
        %s203 = scalar_select %p202, %s201, 27
        %s204 = scalar_lea.vmem %s0, %s203
        %p205 = pneg %p38
        %p206 = pneg %p35
        %s207 = smul.u32 64, %s17
        %p208 = scmp.lt.s32.totalorder %s207, 447
        %s209 = scalar_select %p208, %s207, 447
        %s210 = smul.addr %s209, 8
        %s211 = smul.addr %s210, 4
        %s212 = scalar_lea.vmem %s1, %s211
        %p213 = pneg %p64
        %p214 = pneg %p61
        %p215 = pneg %p85
        %p216 = pneg %p82
        %p217 = pneg %p106
        %p218 = pneg %p103
        %p219 = pneg %p127
        %p220 = pneg %p124
        %p221 = pneg %p148
        %p222 = pneg %p145
        %s223 = smul.u32 4, %s17
        %p224 = scmp.lt.s32.totalorder %s223, 27
        %s225 = scalar_select %p224, %s223, 27
        %s226 = scalar_lea.vmem %s0, %s225
        %s227 = smul.u32 4, %s17
        %s228 = smul.u32 64, %s17
        %p229 = scmp.lt.s32.totalorder %s228, 447
        %s230 = scalar_select %p229, %s228, 447
        %s231 = smul.addr %s230, 8
        %s232 = smul.addr %s231, 4
        %s233 = scalar_lea.vmem %s1, %s232
        %s234 = smul.u32 64, %s17
        %p236 = scmp.eq.s32.totalorder %s17, 0
        // Predicated region
        $region41: #{model_forward.7} parent=39 // pred_check
          %p237 = pneg %p236
        $region42: #{model_forward.7} parent=39 // pred_check_branch
          %239 = sbr.rel (%p237) target = $region44
        $region43: #{model_forward.7} parent=39 // pred_region
          %240 = vst [vmem:[#allocation2] sm:$0xff] 0.0
          %241 = vst [vmem:[#allocation2 + $0x8] sm:$0xff] 0.0
        $region44: #{model_forward.7} parent=39 // pred_fallthru
          _
        %v242 = vld [vmem:[#allocation2] sm:$0xff]
        %v243 = vld [vmem:[#allocation2 + $0x8] sm:$0xff]
        %v244 = vld [vmem:[%s226] sm:$0xf]
        %v245 = vld [vmem:[%s233] sm:$0xff]
        %v246 = vld [vmem:[%s233 + $0x8] sm:$0xff]
        %v247 = vld [vmem:[%s233 + $0x10] sm:$0xff]
        %v248 = vld [vmem:[%s233 + $0x18] sm:$0xff]
        %v249 = vld [vmem:[%s233 + $0x20] sm:$0xff]
        %v250 = vld [vmem:[%s233 + $0x28] sm:$0xff]
        %v251 = vld [vmem:[%s233 + $0x30] sm:$0xff]
        %v252 = vld [vmem:[%s233 + $0x38] sm:$0xff]
        %v253 = vld [vmem:[%s233 + $0x40] sm:$0xff]
        %v254 = vld [vmem:[%s233 + $0x48] sm:$0xff]
        %v255 = vld [vmem:[%s233 + $0x50] sm:$0xff]
        %v256 = vld [vmem:[%s233 + $0x58] sm:$0xff]
        %v257 = vld [vmem:[%s233 + $0x60] sm:$0xff]
        %v258 = vld [vmem:[%s233 + $0x68] sm:$0xff]
        %v259 = vld [vmem:[%s233 + $0x70] sm:$0xff]
        %v260 = vld [vmem:[%s233 + $0x78] sm:$0xff]
        %v261 = vld [vmem:[%s233 + $0x80] sm:$0xff]
        %v262 = vld [vmem:[%s233 + $0x88] sm:$0xff]
        %v263 = vld [vmem:[%s233 + $0x90] sm:$0xff]
        %v264 = vld [vmem:[%s233 + $0x98] sm:$0xff]
        %v265 = vld [vmem:[%s233 + $0xa0] sm:$0xff]
        %v266 = vld [vmem:[%s233 + $0xa8] sm:$0xff]
        %v267 = vld [vmem:[%s233 + $0xb0] sm:$0xff]
        %v268 = vld [vmem:[%s233 + $0xb8] sm:$0xff]
        %v269 = vld [vmem:[%s233 + $0xc0] sm:$0xff]
        %v270 = vld [vmem:[%s233 + $0xc8] sm:$0xff]
        %v271 = vld [vmem:[%s233 + $0xd0] sm:$0xff]
        %v272 = vld [vmem:[%s233 + $0xd8] sm:$0xff]
        %v273 = vld [vmem:[%s233 + $0xe0] sm:$0xff]
        %v274 = vld [vmem:[%s233 + $0xe8] sm:$0xff]
        %v275 = vld [vmem:[%s233 + $0xf0] sm:$0xff]
        %v276 = vld [vmem:[%s233 + $0xf8] sm:$0xff]
        %v277 = vld [vmem:[%s233 + $0x100] sm:$0xff]
        %v278 = vld [vmem:[%s233 + $0x108] sm:$0xff]
        %v279 = vld [vmem:[%s233 + $0x110] sm:$0xff]
        %v280 = vld [vmem:[%s233 + $0x118] sm:$0xff]
        %v281 = vld [vmem:[%s233 + $0x120] sm:$0xff]
        %v282 = vld [vmem:[%s233 + $0x128] sm:$0xff]
        %v283 = vld [vmem:[%s233 + $0x130] sm:$0xff]
        %v284 = vld [vmem:[%s233 + $0x138] sm:$0xff]
        %v285 = vld [vmem:[%s233 + $0x140] sm:$0xff]
        %v286 = vld [vmem:[%s233 + $0x148] sm:$0xff]
        %v287 = vld [vmem:[%s233 + $0x150] sm:$0xff]
        %v288 = vld [vmem:[%s233 + $0x158] sm:$0xff]
        %v289 = vld [vmem:[%s233 + $0x160] sm:$0xff]
        %v290 = vld [vmem:[%s233 + $0x168] sm:$0xff]
        %v291 = vld [vmem:[%s233 + $0x170] sm:$0xff]
        %v292 = vld [vmem:[%s233 + $0x178] sm:$0xff]
        %v293 = vld [vmem:[%s233 + $0x180] sm:$0xff]
        %v294 = vld [vmem:[%s233 + $0x188] sm:$0xff]
        %v295 = vld [vmem:[%s233 + $0x190] sm:$0xff]
        %v296 = vld [vmem:[%s233 + $0x198] sm:$0xff]
        %v297 = vld [vmem:[%s233 + $0x1a0] sm:$0xff]
        %v298 = vld [vmem:[%s233 + $0x1a8] sm:$0xff]
        %v299 = vld [vmem:[%s233 + $0x1b0] sm:$0xff]
        %v300 = vld [vmem:[%s233 + $0x1b8] sm:$0xff]
        %v301 = vld [vmem:[%s233 + $0x1c0] sm:$0xff]
        %v302 = vld [vmem:[%s233 + $0x1c8] sm:$0xff]
        %v303 = vld [vmem:[%s233 + $0x1d0] sm:$0xff]
        %v304 = vld [vmem:[%s233 + $0x1d8] sm:$0xff]
        %v305 = vld [vmem:[%s233 + $0x1e0] sm:$0xff]
        %v306 = vld [vmem:[%s233 + $0x1e8] sm:$0xff]
        %v307 = vld [vmem:[%s233 + $0x1f0] sm:$0xff]
        %v308 = vld [vmem:[%s233 + $0x1f8] sm:$0xff]
        %v309 = vld [vmem:[%s233 + $0x200] sm:$0xff]
        %v310 = vld [vmem:[%s233 + $0x208] sm:$0xff]
        %v311 = vld [vmem:[%s233 + $0x210] sm:$0xff]
        %v312 = vld [vmem:[%s233 + $0x218] sm:$0xff]
        %v313 = vld [vmem:[%s233 + $0x220] sm:$0xff]
        %v314 = vld [vmem:[%s233 + $0x228] sm:$0xff]
        %v315 = vld [vmem:[%s233 + $0x230] sm:$0xff]
        %v316 = vld [vmem:[%s233 + $0x238] sm:$0xff]
        %v317 = vld [vmem:[%s233 + $0x240] sm:$0xff]
        %v318 = vld [vmem:[%s233 + $0x248] sm:$0xff]
        %v319 = vld [vmem:[%s233 + $0x250] sm:$0xff]
        %v320 = vld [vmem:[%s233 + $0x258] sm:$0xff]
        %v321 = vld [vmem:[%s233 + $0x260] sm:$0xff]
        %v322 = vld [vmem:[%s233 + $0x268] sm:$0xff]
        %v323 = vld [vmem:[%s233 + $0x270] sm:$0xff]
        %v324 = vld [vmem:[%s233 + $0x278] sm:$0xff]
        %v325 = vld [vmem:[%s233 + $0x280] sm:$0xff]
        %v326 = vld [vmem:[%s233 + $0x288] sm:$0xff]
        %v327 = vld [vmem:[%s233 + $0x290] sm:$0xff]
        %v328 = vld [vmem:[%s233 + $0x298] sm:$0xff]
        %v329 = vld [vmem:[%s233 + $0x2a0] sm:$0xff]
        %v330 = vld [vmem:[%s233 + $0x2a8] sm:$0xff]
        %v331 = vld [vmem:[%s233 + $0x2b0] sm:$0xff]
        %v332 = vld [vmem:[%s233 + $0x2b8] sm:$0xff]
        %v333 = vld [vmem:[%s233 + $0x2c0] sm:$0xff]
        %v334 = vld [vmem:[%s233 + $0x2c8] sm:$0xff]
        %v335 = vld [vmem:[%s233 + $0x2d0] sm:$0xff]
        %v336 = vld [vmem:[%s233 + $0x2d8] sm:$0xff]
        %v337 = vld [vmem:[%s233 + $0x2e0] sm:$0xff]
        %v338 = vld [vmem:[%s233 + $0x2e8] sm:$0xff]
        %v339 = vld [vmem:[%s233 + $0x2f0] sm:$0xff]
        %v340 = vld [vmem:[%s233 + $0x2f8] sm:$0xff]
        %v341 = vld [vmem:[%s233 + $0x300] sm:$0xff]
        %v342 = vld [vmem:[%s233 + $0x308] sm:$0xff]
        %v343 = vld [vmem:[%s233 + $0x310] sm:$0xff]
        %v344 = vld [vmem:[%s233 + $0x318] sm:$0xff]
        %v345 = vld [vmem:[%s233 + $0x320] sm:$0xff]
        %v346 = vld [vmem:[%s233 + $0x328] sm:$0xff]
        %v347 = vld [vmem:[%s233 + $0x330] sm:$0xff]
        %v348 = vld [vmem:[%s233 + $0x338] sm:$0xff]
        %v349 = vld [vmem:[%s233 + $0x340] sm:$0xff]
        %v350 = vld [vmem:[%s233 + $0x348] sm:$0xff]
        %v351 = vld [vmem:[%s233 + $0x350] sm:$0xff]
        %v352 = vld [vmem:[%s233 + $0x358] sm:$0xff]
        %v353 = vld [vmem:[%s233 + $0x360] sm:$0xff]
        %v354 = vld [vmem:[%s233 + $0x368] sm:$0xff]
        %v355 = vld [vmem:[%s233 + $0x370] sm:$0xff]
        %v356 = vld [vmem:[%s233 + $0x378] sm:$0xff]
        %v357 = vld [vmem:[%s233 + $0x380] sm:$0xff]
        %v358 = vld [vmem:[%s233 + $0x388] sm:$0xff]
        %v359 = vld [vmem:[%s233 + $0x390] sm:$0xff]
        %v360 = vld [vmem:[%s233 + $0x398] sm:$0xff]
        %v361 = vld [vmem:[%s233 + $0x3a0] sm:$0xff]
        %v362 = vld [vmem:[%s233 + $0x3a8] sm:$0xff]
        %v363 = vld [vmem:[%s233 + $0x3b0] sm:$0xff]
        %v364 = vld [vmem:[%s233 + $0x3b8] sm:$0xff]
        %v365 = vld [vmem:[%s233 + $0x3c0] sm:$0xff]
        %v366 = vld [vmem:[%s233 + $0x3c8] sm:$0xff]
        %v367 = vld [vmem:[%s233 + $0x3d0] sm:$0xff]
        %v368 = vld [vmem:[%s233 + $0x3d8] sm:$0xff]
        %v369 = vld [vmem:[%s233 + $0x3e0] sm:$0xff]
        %v370 = vld [vmem:[%s233 + $0x3e8] sm:$0xff]
        %v371 = vld [vmem:[%s233 + $0x3f0] sm:$0xff]
        %v372 = vld [vmem:[%s233 + $0x3f8] sm:$0xff]
        %v373 = vld [vmem:[%s233 + $0x400] sm:$0xff]
        %v374 = vld [vmem:[%s233 + $0x408] sm:$0xff]
        %v375 = vld [vmem:[%s233 + $0x410] sm:$0xff]
        %v376 = vld [vmem:[%s233 + $0x418] sm:$0xff]
        %v377 = vld [vmem:[%s233 + $0x420] sm:$0xff]
        %v378 = vld [vmem:[%s233 + $0x428] sm:$0xff]
        %v379 = vld [vmem:[%s233 + $0x430] sm:$0xff]
        %v380 = vld [vmem:[%s233 + $0x438] sm:$0xff]
        %v381 = vld [vmem:[%s233 + $0x440] sm:$0xff]
        %v382 = vld [vmem:[%s233 + $0x448] sm:$0xff]
        %v383 = vld [vmem:[%s233 + $0x450] sm:$0xff]
        %v384 = vld [vmem:[%s233 + $0x458] sm:$0xff]
        %v385 = vld [vmem:[%s233 + $0x460] sm:$0xff]
        %v386 = vld [vmem:[%s233 + $0x468] sm:$0xff]
        %v387 = vld [vmem:[%s233 + $0x470] sm:$0xff]
        %v388 = vld [vmem:[%s233 + $0x478] sm:$0xff]
        %v389 = vld [vmem:[%s233 + $0x480] sm:$0xff]
        %v390 = vld [vmem:[%s233 + $0x488] sm:$0xff]
        %v391 = vld [vmem:[%s233 + $0x490] sm:$0xff]
        %v392 = vld [vmem:[%s233 + $0x498] sm:$0xff]
        %v393 = vld [vmem:[%s233 + $0x4a0] sm:$0xff]
        %v394 = vld [vmem:[%s233 + $0x4a8] sm:$0xff]
        %v395 = vld [vmem:[%s233 + $0x4b0] sm:$0xff]
        %v396 = vld [vmem:[%s233 + $0x4b8] sm:$0xff]
        %v397 = vld [vmem:[%s233 + $0x4c0] sm:$0xff]
        %v398 = vld [vmem:[%s233 + $0x4c8] sm:$0xff]
        %v399 = vld [vmem:[%s233 + $0x4d0] sm:$0xff]
        %v400 = vld [vmem:[%s233 + $0x4d8] sm:$0xff]
        %v401 = vld [vmem:[%s233 + $0x4e0] sm:$0xff]
        %v402 = vld [vmem:[%s233 + $0x4e8] sm:$0xff]
        %v403 = vld [vmem:[%s233 + $0x4f0] sm:$0xff]
        %v404 = vld [vmem:[%s233 + $0x4f8] sm:$0xff]
        %v405 = vld [vmem:[%s233 + $0x500] sm:$0xff]
        %v406 = vld [vmem:[%s233 + $0x508] sm:$0xff]
        %v407 = vld [vmem:[%s233 + $0x510] sm:$0xff]
        %v408 = vld [vmem:[%s233 + $0x518] sm:$0xff]
        %v409 = vld [vmem:[%s233 + $0x520] sm:$0xff]
        %v410 = vld [vmem:[%s233 + $0x528] sm:$0xff]
        %v411 = vld [vmem:[%s233 + $0x530] sm:$0xff]
        %v412 = vld [vmem:[%s233 + $0x538] sm:$0xff]
        %v413 = vld [vmem:[%s233 + $0x540] sm:$0xff]
        %v414 = vld [vmem:[%s233 + $0x548] sm:$0xff]
        %v415 = vld [vmem:[%s233 + $0x550] sm:$0xff]
        %v416 = vld [vmem:[%s233 + $0x558] sm:$0xff]
        %v417 = vld [vmem:[%s233 + $0x560] sm:$0xff]
        %v418 = vld [vmem:[%s233 + $0x568] sm:$0xff]
        %v419 = vld [vmem:[%s233 + $0x570] sm:$0xff]
        %v420 = vld [vmem:[%s233 + $0x578] sm:$0xff]
        %v421 = vld [vmem:[%s233 + $0x580] sm:$0xff]
        %v422 = vld [vmem:[%s233 + $0x588] sm:$0xff]
        %v423 = vld [vmem:[%s233 + $0x590] sm:$0xff]
        %v424 = vld [vmem:[%s233 + $0x598] sm:$0xff]
        %v425 = vld [vmem:[%s233 + $0x5a0] sm:$0xff]
        %v426 = vld [vmem:[%s233 + $0x5a8] sm:$0xff]
        %v427 = vld [vmem:[%s233 + $0x5b0] sm:$0xff]
        %v428 = vld [vmem:[%s233 + $0x5b8] sm:$0xff]
        %v429 = vld [vmem:[%s233 + $0x5c0] sm:$0xff]
        %v430 = vld [vmem:[%s233 + $0x5c8] sm:$0xff]
        %v431 = vld [vmem:[%s233 + $0x5d0] sm:$0xff]
        %v432 = vld [vmem:[%s233 + $0x5d8] sm:$0xff]
        %v433 = vld [vmem:[%s233 + $0x5e0] sm:$0xff]
        %v434 = vld [vmem:[%s233 + $0x5e8] sm:$0xff]
        %v435 = vld [vmem:[%s233 + $0x5f0] sm:$0xff]
        %v436 = vld [vmem:[%s233 + $0x5f8] sm:$0xff]
        %v437 = vld [vmem:[%s233 + $0x600] sm:$0xff]
        %v438 = vld [vmem:[%s233 + $0x608] sm:$0xff]
        %v439 = vld [vmem:[%s233 + $0x610] sm:$0xff]
        %v440 = vld [vmem:[%s233 + $0x618] sm:$0xff]
        %v441 = vld [vmem:[%s233 + $0x620] sm:$0xff]
        %v442 = vld [vmem:[%s233 + $0x628] sm:$0xff]
        %v443 = vld [vmem:[%s233 + $0x630] sm:$0xff]
        %v444 = vld [vmem:[%s233 + $0x638] sm:$0xff]
        %v445 = vld [vmem:[%s233 + $0x640] sm:$0xff]
        %v446 = vld [vmem:[%s233 + $0x648] sm:$0xff]
        %v447 = vld [vmem:[%s233 + $0x650] sm:$0xff]
        %v448 = vld [vmem:[%s233 + $0x658] sm:$0xff]
        %v449 = vld [vmem:[%s233 + $0x660] sm:$0xff]
        %v450 = vld [vmem:[%s233 + $0x668] sm:$0xff]
        %v451 = vld [vmem:[%s233 + $0x670] sm:$0xff]
        %v452 = vld [vmem:[%s233 + $0x678] sm:$0xff]
        %v453 = vld [vmem:[%s233 + $0x680] sm:$0xff]
        %v454 = vld [vmem:[%s233 + $0x688] sm:$0xff]
        %v455 = vld [vmem:[%s233 + $0x690] sm:$0xff]
        %v456 = vld [vmem:[%s233 + $0x698] sm:$0xff]
        %v457 = vld [vmem:[%s233 + $0x6a0] sm:$0xff]
        %v458 = vld [vmem:[%s233 + $0x6a8] sm:$0xff]
        %v459 = vld [vmem:[%s233 + $0x6b0] sm:$0xff]
        %v460 = vld [vmem:[%s233 + $0x6b8] sm:$0xff]
        %v461 = vld [vmem:[%s233 + $0x6c0] sm:$0xff]
        %v462 = vld [vmem:[%s233 + $0x6c8] sm:$0xff]
        %v463 = vld [vmem:[%s233 + $0x6d0] sm:$0xff]
        %v464 = vld [vmem:[%s233 + $0x6d8] sm:$0xff]
        %v465 = vld [vmem:[%s233 + $0x6e0] sm:$0xff]
        %v466 = vld [vmem:[%s233 + $0x6e8] sm:$0xff]
        %v467 = vld [vmem:[%s233 + $0x6f0] sm:$0xff]
        %v468 = vld [vmem:[%s233 + $0x6f8] sm:$0xff]
        %v469 = vld [vmem:[%s233 + $0x700] sm:$0xff]
        %v470 = vld [vmem:[%s233 + $0x708] sm:$0xff]
        %v471 = vld [vmem:[%s233 + $0x710] sm:$0xff]
        %v472 = vld [vmem:[%s233 + $0x718] sm:$0xff]
        %v473 = vld [vmem:[%s233 + $0x720] sm:$0xff]
        %v474 = vld [vmem:[%s233 + $0x728] sm:$0xff]
        %v475 = vld [vmem:[%s233 + $0x730] sm:$0xff]
        %v476 = vld [vmem:[%s233 + $0x738] sm:$0xff]
        %v477 = vld [vmem:[%s233 + $0x740] sm:$0xff]
        %v478 = vld [vmem:[%s233 + $0x748] sm:$0xff]
        %v479 = vld [vmem:[%s233 + $0x750] sm:$0xff]
        %v480 = vld [vmem:[%s233 + $0x758] sm:$0xff]
        %v481 = vld [vmem:[%s233 + $0x760] sm:$0xff]
        %v482 = vld [vmem:[%s233 + $0x768] sm:$0xff]
        %v483 = vld [vmem:[%s233 + $0x770] sm:$0xff]
        %v484 = vld [vmem:[%s233 + $0x778] sm:$0xff]
        %v485 = vld [vmem:[%s233 + $0x780] sm:$0xff]
        %v486 = vld [vmem:[%s233 + $0x788] sm:$0xff]
        %v487 = vld [vmem:[%s233 + $0x790] sm:$0xff]
        %v488 = vld [vmem:[%s233 + $0x798] sm:$0xff]
        %v489 = vld [vmem:[%s233 + $0x7a0] sm:$0xff]
        %v490 = vld [vmem:[%s233 + $0x7a8] sm:$0xff]
        %v491 = vld [vmem:[%s233 + $0x7b0] sm:$0xff]
        %v492 = vld [vmem:[%s233 + $0x7b8] sm:$0xff]
        %v493 = vld [vmem:[%s233 + $0x7c0] sm:$0xff]
        %v494 = vld [vmem:[%s233 + $0x7c8] sm:$0xff]
        %v495 = vld [vmem:[%s233 + $0x7d0] sm:$0xff]
        %v496 = vld [vmem:[%s233 + $0x7d8] sm:$0xff]
        %v497 = vld [vmem:[%s233 + $0x7e0] sm:$0xff]
        %v498 = vld [vmem:[%s233 + $0x7e8] sm:$0xff]
        %v499 = vld [vmem:[%s233 + $0x7f0] sm:$0xff]
        %v500 = vld [vmem:[%s233 + $0x7f8] sm:$0xff]
        %v503 = vunpack.c.l.s4 1966171168
        %v504 = vunpack.c.0.s8 %v503
        %v505 = vlaneseq
        %v506 = vshrl.u32 %v505, 7
        %v507 = vsub.s32 %v504, %v506
        %v508 = vrot.slane %v244, %v507
        %v509 = vcombine.high %v508, %v508
        %v511 = vunpack.c.l.s4 1966171168
        %v512 = vunpack.c.0.s8 %v511
        %v513 = vlaneseq
        %v514 = vshrl.u32 %v513, 7
        %v515 = vsub.s32 %v512, %v514
        %v516 = vrot.slane %v508, %v515
        %v518 = vunpack.c.l.s4 1966171168
        %v519 = vunpack.c.0.s8 %v518
        %v520 = vlaneseq
        %v521 = vshrl.u32 %v520, 7
        %v522 = vsub.s32 %v519, %v521
        %v523 = vrot.slane %v509, %v522
        %v524 = vcombine.high %v516, %v516
        %v525 = vcombine.high %v523, %v523
        %v786 = vunpack.c.l.b16 %v245
        %v787 = vunpack.c.h.b16 %v245
        %v788 = vunpack.c.l.b16 %v246
        %v789 = vunpack.c.h.b16 %v246
        %v790 = vunpack.c.l.b16 %v247
        %v791 = vunpack.c.h.b16 %v247
        %v792 = vunpack.c.l.b16 %v248
        %v793 = vunpack.c.h.b16 %v248
        %v794 = vunpack.c.l.b16 %v249
        %v795 = vunpack.c.h.b16 %v249
        %v796 = vunpack.c.l.b16 %v250
        %v797 = vunpack.c.h.b16 %v250
        %v798 = vunpack.c.l.b16 %v251
        %v799 = vunpack.c.h.b16 %v251
        %v800 = vunpack.c.l.b16 %v252
        %v801 = vunpack.c.h.b16 %v252
        %v802 = vunpack.c.l.b16 %v253
        %v803 = vunpack.c.h.b16 %v253
        %v804 = vunpack.c.l.b16 %v254
        %v805 = vunpack.c.h.b16 %v254
        %v806 = vunpack.c.l.b16 %v255
        %v807 = vunpack.c.h.b16 %v255
        %v808 = vunpack.c.l.b16 %v256
        %v809 = vunpack.c.h.b16 %v256
        %v810 = vunpack.c.l.b16 %v257
        %v811 = vunpack.c.h.b16 %v257
        %v812 = vunpack.c.l.b16 %v258
        %v813 = vunpack.c.h.b16 %v258
        %v814 = vunpack.c.l.b16 %v259
        %v815 = vunpack.c.h.b16 %v259
        %v816 = vunpack.c.l.b16 %v260
        %v817 = vunpack.c.h.b16 %v260
        %v818 = vunpack.c.l.b16 %v261
        %v819 = vunpack.c.h.b16 %v261
        %v820 = vunpack.c.l.b16 %v262
        %v821 = vunpack.c.h.b16 %v262
        %v822 = vunpack.c.l.b16 %v263
        %v823 = vunpack.c.h.b16 %v263
        %v824 = vunpack.c.l.b16 %v264
        %v825 = vunpack.c.h.b16 %v264
        %v826 = vunpack.c.l.b16 %v265
        %v827 = vunpack.c.h.b16 %v265
        %v828 = vunpack.c.l.b16 %v266
        %v829 = vunpack.c.h.b16 %v266
        %v830 = vunpack.c.l.b16 %v267
        %v831 = vunpack.c.h.b16 %v267
        %v832 = vunpack.c.l.b16 %v268
        %v833 = vunpack.c.h.b16 %v268
        %v834 = vunpack.c.l.b16 %v269
        %v835 = vunpack.c.h.b16 %v269
        %v836 = vunpack.c.l.b16 %v270
        %v837 = vunpack.c.h.b16 %v270
        %v838 = vunpack.c.l.b16 %v271
        %v839 = vunpack.c.h.b16 %v271
        %v840 = vunpack.c.l.b16 %v272
        %v841 = vunpack.c.h.b16 %v272
        %v842 = vunpack.c.l.b16 %v273
        %v843 = vunpack.c.h.b16 %v273
        %v844 = vunpack.c.l.b16 %v274
        %v845 = vunpack.c.h.b16 %v274
        %v846 = vunpack.c.l.b16 %v275
        %v847 = vunpack.c.h.b16 %v275
        %v848 = vunpack.c.l.b16 %v276
        %v849 = vunpack.c.h.b16 %v276
        %v850 = vunpack.c.l.b16 %v277
        %v851 = vunpack.c.h.b16 %v277
        %v852 = vunpack.c.l.b16 %v278
        %v853 = vunpack.c.h.b16 %v278
        %v854 = vunpack.c.l.b16 %v279
        %v855 = vunpack.c.h.b16 %v279
        %v856 = vunpack.c.l.b16 %v280
        %v857 = vunpack.c.h.b16 %v280
        %v858 = vunpack.c.l.b16 %v281
        %v859 = vunpack.c.h.b16 %v281
        %v860 = vunpack.c.l.b16 %v282
        %v861 = vunpack.c.h.b16 %v282
        %v862 = vunpack.c.l.b16 %v283
        %v863 = vunpack.c.h.b16 %v283
        %v864 = vunpack.c.l.b16 %v284
        %v865 = vunpack.c.h.b16 %v284
        %v866 = vunpack.c.l.b16 %v285
        %v867 = vunpack.c.h.b16 %v285
        %v868 = vunpack.c.l.b16 %v286
        %v869 = vunpack.c.h.b16 %v286
        %v870 = vunpack.c.l.b16 %v287
        %v871 = vunpack.c.h.b16 %v287
        %v872 = vunpack.c.l.b16 %v288
        %v873 = vunpack.c.h.b16 %v288
        %v874 = vunpack.c.l.b16 %v289
        %v875 = vunpack.c.h.b16 %v289
        %v876 = vunpack.c.l.b16 %v290
        %v877 = vunpack.c.h.b16 %v290
        %v878 = vunpack.c.l.b16 %v291
        %v879 = vunpack.c.h.b16 %v291
        %v880 = vunpack.c.l.b16 %v292
        %v881 = vunpack.c.h.b16 %v292
        %v882 = vunpack.c.l.b16 %v293
        %v883 = vunpack.c.h.b16 %v293
        %v884 = vunpack.c.l.b16 %v294
        %v885 = vunpack.c.h.b16 %v294
        %v886 = vunpack.c.l.b16 %v295
        %v887 = vunpack.c.h.b16 %v295
        %v888 = vunpack.c.l.b16 %v296
        %v889 = vunpack.c.h.b16 %v296
        %v890 = vunpack.c.l.b16 %v297
        %v891 = vunpack.c.h.b16 %v297
        %v892 = vunpack.c.l.b16 %v298
        %v893 = vunpack.c.h.b16 %v298
        %v894 = vunpack.c.l.b16 %v299
        %v895 = vunpack.c.h.b16 %v299
        %v896 = vunpack.c.l.b16 %v300
        %v897 = vunpack.c.h.b16 %v300
        %v898 = vunpack.c.l.b16 %v301
        %v899 = vunpack.c.h.b16 %v301
        %v900 = vunpack.c.l.b16 %v302
        %v901 = vunpack.c.h.b16 %v302
        %v902 = vunpack.c.l.b16 %v303
        %v903 = vunpack.c.h.b16 %v303
        %v904 = vunpack.c.l.b16 %v304
        %v905 = vunpack.c.h.b16 %v304
        %v906 = vunpack.c.l.b16 %v305
        %v907 = vunpack.c.h.b16 %v305
        %v908 = vunpack.c.l.b16 %v306
        %v909 = vunpack.c.h.b16 %v306
        %v910 = vunpack.c.l.b16 %v307
        %v911 = vunpack.c.h.b16 %v307
        %v912 = vunpack.c.l.b16 %v308
        %v913 = vunpack.c.h.b16 %v308
        %v914 = vunpack.c.l.b16 %v309
        %v915 = vunpack.c.h.b16 %v309
        %v916 = vunpack.c.l.b16 %v310
        %v917 = vunpack.c.h.b16 %v310
        %v918 = vunpack.c.l.b16 %v311
        %v919 = vunpack.c.h.b16 %v311
        %v920 = vunpack.c.l.b16 %v312
        %v921 = vunpack.c.h.b16 %v312
        %v922 = vunpack.c.l.b16 %v313
        %v923 = vunpack.c.h.b16 %v313
        %v924 = vunpack.c.l.b16 %v314
        %v925 = vunpack.c.h.b16 %v314
        %v926 = vunpack.c.l.b16 %v315
        %v927 = vunpack.c.h.b16 %v315
        %v928 = vunpack.c.l.b16 %v316
        %v929 = vunpack.c.h.b16 %v316
        %v930 = vunpack.c.l.b16 %v317
        %v931 = vunpack.c.h.b16 %v317
        %v932 = vunpack.c.l.b16 %v318
        %v933 = vunpack.c.h.b16 %v318
        %v934 = vunpack.c.l.b16 %v319
        %v935 = vunpack.c.h.b16 %v319
        %v936 = vunpack.c.l.b16 %v320
        %v937 = vunpack.c.h.b16 %v320
        %v938 = vunpack.c.l.b16 %v321
        %v939 = vunpack.c.h.b16 %v321
        %v940 = vunpack.c.l.b16 %v322
        %v941 = vunpack.c.h.b16 %v322
        %v942 = vunpack.c.l.b16 %v323
        %v943 = vunpack.c.h.b16 %v323
        %v944 = vunpack.c.l.b16 %v324
        %v945 = vunpack.c.h.b16 %v324
        %v946 = vunpack.c.l.b16 %v325
        %v947 = vunpack.c.h.b16 %v325
        %v948 = vunpack.c.l.b16 %v326
        %v949 = vunpack.c.h.b16 %v326
        %v950 = vunpack.c.l.b16 %v327
        %v951 = vunpack.c.h.b16 %v327
        %v952 = vunpack.c.l.b16 %v328
        %v953 = vunpack.c.h.b16 %v328
        %v954 = vunpack.c.l.b16 %v329
        %v955 = vunpack.c.h.b16 %v329
        %v956 = vunpack.c.l.b16 %v330
        %v957 = vunpack.c.h.b16 %v330
        %v958 = vunpack.c.l.b16 %v331
        %v959 = vunpack.c.h.b16 %v331
        %v960 = vunpack.c.l.b16 %v332
        %v961 = vunpack.c.h.b16 %v332
        %v962 = vunpack.c.l.b16 %v333
        %v963 = vunpack.c.h.b16 %v333
        %v964 = vunpack.c.l.b16 %v334
        %v965 = vunpack.c.h.b16 %v334
        %v966 = vunpack.c.l.b16 %v335
        %v967 = vunpack.c.h.b16 %v335
        %v968 = vunpack.c.l.b16 %v336
        %v969 = vunpack.c.h.b16 %v336
        %v970 = vunpack.c.l.b16 %v337
        %v971 = vunpack.c.h.b16 %v337
        %v972 = vunpack.c.l.b16 %v338
        %v973 = vunpack.c.h.b16 %v338
        %v974 = vunpack.c.l.b16 %v339
        %v975 = vunpack.c.h.b16 %v339
        %v976 = vunpack.c.l.b16 %v340
        %v977 = vunpack.c.h.b16 %v340
        %v978 = vunpack.c.l.b16 %v341
        %v979 = vunpack.c.h.b16 %v341
        %v980 = vunpack.c.l.b16 %v342
        %v981 = vunpack.c.h.b16 %v342
        %v982 = vunpack.c.l.b16 %v343
        %v983 = vunpack.c.h.b16 %v343
        %v984 = vunpack.c.l.b16 %v344
        %v985 = vunpack.c.h.b16 %v344
        %v986 = vunpack.c.l.b16 %v345
        %v987 = vunpack.c.h.b16 %v345
        %v988 = vunpack.c.l.b16 %v346
        %v989 = vunpack.c.h.b16 %v346
        %v990 = vunpack.c.l.b16 %v347
        %v991 = vunpack.c.h.b16 %v347
        %v992 = vunpack.c.l.b16 %v348
        %v993 = vunpack.c.h.b16 %v348
        %v994 = vunpack.c.l.b16 %v349
        %v995 = vunpack.c.h.b16 %v349
        %v996 = vunpack.c.l.b16 %v350
        %v997 = vunpack.c.h.b16 %v350
        %v998 = vunpack.c.l.b16 %v351
        %v999 = vunpack.c.h.b16 %v351
        %v1000 = vunpack.c.l.b16 %v352
        %v1001 = vunpack.c.h.b16 %v352
        %v1002 = vunpack.c.l.b16 %v353
        %v1003 = vunpack.c.h.b16 %v353
        %v1004 = vunpack.c.l.b16 %v354
        %v1005 = vunpack.c.h.b16 %v354
        %v1006 = vunpack.c.l.b16 %v355
        %v1007 = vunpack.c.h.b16 %v355
        %v1008 = vunpack.c.l.b16 %v356
        %v1009 = vunpack.c.h.b16 %v356
        %v1010 = vunpack.c.l.b16 %v357
        %v1011 = vunpack.c.h.b16 %v357
        %v1012 = vunpack.c.l.b16 %v358
        %v1013 = vunpack.c.h.b16 %v358
        %v1014 = vunpack.c.l.b16 %v359
        %v1015 = vunpack.c.h.b16 %v359
        %v1016 = vunpack.c.l.b16 %v360
        %v1017 = vunpack.c.h.b16 %v360
        %v1018 = vunpack.c.l.b16 %v361
        %v1019 = vunpack.c.h.b16 %v361
        %v1020 = vunpack.c.l.b16 %v362
        %v1021 = vunpack.c.h.b16 %v362
        %v1022 = vunpack.c.l.b16 %v363
        %v1023 = vunpack.c.h.b16 %v363
        %v1024 = vunpack.c.l.b16 %v364
        %v1025 = vunpack.c.h.b16 %v364
        %v1026 = vunpack.c.l.b16 %v365
        %v1027 = vunpack.c.h.b16 %v365
        %v1028 = vunpack.c.l.b16 %v366
        %v1029 = vunpack.c.h.b16 %v366
        %v1030 = vunpack.c.l.b16 %v367
        %v1031 = vunpack.c.h.b16 %v367
        %v1032 = vunpack.c.l.b16 %v368
        %v1033 = vunpack.c.h.b16 %v368
        %v1034 = vunpack.c.l.b16 %v369
        %v1035 = vunpack.c.h.b16 %v369
        %v1036 = vunpack.c.l.b16 %v370
        %v1037 = vunpack.c.h.b16 %v370
        %v1038 = vunpack.c.l.b16 %v371
        %v1039 = vunpack.c.h.b16 %v371
        %v1040 = vunpack.c.l.b16 %v372
        %v1041 = vunpack.c.h.b16 %v372
        %v1042 = vunpack.c.l.b16 %v373
        %v1043 = vunpack.c.h.b16 %v373
        %v1044 = vunpack.c.l.b16 %v374
        %v1045 = vunpack.c.h.b16 %v374
        %v1046 = vunpack.c.l.b16 %v375
        %v1047 = vunpack.c.h.b16 %v375
        %v1048 = vunpack.c.l.b16 %v376
        %v1049 = vunpack.c.h.b16 %v376
        %v1050 = vunpack.c.l.b16 %v377
        %v1051 = vunpack.c.h.b16 %v377
        %v1052 = vunpack.c.l.b16 %v378
        %v1053 = vunpack.c.h.b16 %v378
        %v1054 = vunpack.c.l.b16 %v379
        %v1055 = vunpack.c.h.b16 %v379
        %v1056 = vunpack.c.l.b16 %v380
        %v1057 = vunpack.c.h.b16 %v380
        %v1058 = vunpack.c.l.b16 %v381
        %v1059 = vunpack.c.h.b16 %v381
        %v1060 = vunpack.c.l.b16 %v382
        %v1061 = vunpack.c.h.b16 %v382
        %v1062 = vunpack.c.l.b16 %v383
        %v1063 = vunpack.c.h.b16 %v383
        %v1064 = vunpack.c.l.b16 %v384
        %v1065 = vunpack.c.h.b16 %v384
        %v1066 = vunpack.c.l.b16 %v385
        %v1067 = vunpack.c.h.b16 %v385
        %v1068 = vunpack.c.l.b16 %v386
        %v1069 = vunpack.c.h.b16 %v386
        %v1070 = vunpack.c.l.b16 %v387
        %v1071 = vunpack.c.h.b16 %v387
        %v1072 = vunpack.c.l.b16 %v388
        %v1073 = vunpack.c.h.b16 %v388
        %v1074 = vunpack.c.l.b16 %v389
        %v1075 = vunpack.c.h.b16 %v389
        %v1076 = vunpack.c.l.b16 %v390
        %v1077 = vunpack.c.h.b16 %v390
        %v1078 = vunpack.c.l.b16 %v391
        %v1079 = vunpack.c.h.b16 %v391
        %v1080 = vunpack.c.l.b16 %v392
        %v1081 = vunpack.c.h.b16 %v392
        %v1082 = vunpack.c.l.b16 %v393
        %v1083 = vunpack.c.h.b16 %v393
        %v1084 = vunpack.c.l.b16 %v394
        %v1085 = vunpack.c.h.b16 %v394
        %v1086 = vunpack.c.l.b16 %v395
        %v1087 = vunpack.c.h.b16 %v395
        %v1088 = vunpack.c.l.b16 %v396
        %v1089 = vunpack.c.h.b16 %v396
        %v1090 = vunpack.c.l.b16 %v397
        %v1091 = vunpack.c.h.b16 %v397
        %v1092 = vunpack.c.l.b16 %v398
        %v1093 = vunpack.c.h.b16 %v398
        %v1094 = vunpack.c.l.b16 %v399
        %v1095 = vunpack.c.h.b16 %v399
        %v1096 = vunpack.c.l.b16 %v400
        %v1097 = vunpack.c.h.b16 %v400
        %v1098 = vunpack.c.l.b16 %v401
        %v1099 = vunpack.c.h.b16 %v401
        %v1100 = vunpack.c.l.b16 %v402
        %v1101 = vunpack.c.h.b16 %v402
        %v1102 = vunpack.c.l.b16 %v403
        %v1103 = vunpack.c.h.b16 %v403
        %v1104 = vunpack.c.l.b16 %v404
        %v1105 = vunpack.c.h.b16 %v404
        %v1106 = vunpack.c.l.b16 %v405
        %v1107 = vunpack.c.h.b16 %v405
        %v1108 = vunpack.c.l.b16 %v406
        %v1109 = vunpack.c.h.b16 %v406
        %v1110 = vunpack.c.l.b16 %v407
        %v1111 = vunpack.c.h.b16 %v407
        %v1112 = vunpack.c.l.b16 %v408
        %v1113 = vunpack.c.h.b16 %v408
        %v1114 = vunpack.c.l.b16 %v409
        %v1115 = vunpack.c.h.b16 %v409
        %v1116 = vunpack.c.l.b16 %v410
        %v1117 = vunpack.c.h.b16 %v410
        %v1118 = vunpack.c.l.b16 %v411
        %v1119 = vunpack.c.h.b16 %v411
        %v1120 = vunpack.c.l.b16 %v412
        %v1121 = vunpack.c.h.b16 %v412
        %v1122 = vunpack.c.l.b16 %v413
        %v1123 = vunpack.c.h.b16 %v413
        %v1124 = vunpack.c.l.b16 %v414
        %v1125 = vunpack.c.h.b16 %v414
        %v1126 = vunpack.c.l.b16 %v415
        %v1127 = vunpack.c.h.b16 %v415
        %v1128 = vunpack.c.l.b16 %v416
        %v1129 = vunpack.c.h.b16 %v416
        %v1130 = vunpack.c.l.b16 %v417
        %v1131 = vunpack.c.h.b16 %v417
        %v1132 = vunpack.c.l.b16 %v418
        %v1133 = vunpack.c.h.b16 %v418
        %v1134 = vunpack.c.l.b16 %v419
        %v1135 = vunpack.c.h.b16 %v419
        %v1136 = vunpack.c.l.b16 %v420
        %v1137 = vunpack.c.h.b16 %v420
        %v1138 = vunpack.c.l.b16 %v421
        %v1139 = vunpack.c.h.b16 %v421
        %v1140 = vunpack.c.l.b16 %v422
        %v1141 = vunpack.c.h.b16 %v422
        %v1142 = vunpack.c.l.b16 %v423
        %v1143 = vunpack.c.h.b16 %v423
        %v1144 = vunpack.c.l.b16 %v424
        %v1145 = vunpack.c.h.b16 %v424
        %v1146 = vunpack.c.l.b16 %v425
        %v1147 = vunpack.c.h.b16 %v425
        %v1148 = vunpack.c.l.b16 %v426
        %v1149 = vunpack.c.h.b16 %v426
        %v1150 = vunpack.c.l.b16 %v427
        %v1151 = vunpack.c.h.b16 %v427
        %v1152 = vunpack.c.l.b16 %v428
        %v1153 = vunpack.c.h.b16 %v428
        %v1154 = vunpack.c.l.b16 %v429
        %v1155 = vunpack.c.h.b16 %v429
        %v1156 = vunpack.c.l.b16 %v430
        %v1157 = vunpack.c.h.b16 %v430
        %v1158 = vunpack.c.l.b16 %v431
        %v1159 = vunpack.c.h.b16 %v431
        %v1160 = vunpack.c.l.b16 %v432
        %v1161 = vunpack.c.h.b16 %v432
        %v1162 = vunpack.c.l.b16 %v433
        %v1163 = vunpack.c.h.b16 %v433
        %v1164 = vunpack.c.l.b16 %v434
        %v1165 = vunpack.c.h.b16 %v434
        %v1166 = vunpack.c.l.b16 %v435
        %v1167 = vunpack.c.h.b16 %v435
        %v1168 = vunpack.c.l.b16 %v436
        %v1169 = vunpack.c.h.b16 %v436
        %v1170 = vunpack.c.l.b16 %v437
        %v1171 = vunpack.c.h.b16 %v437
        %v1172 = vunpack.c.l.b16 %v438
        %v1173 = vunpack.c.h.b16 %v438
        %v1174 = vunpack.c.l.b16 %v439
        %v1175 = vunpack.c.h.b16 %v439
        %v1176 = vunpack.c.l.b16 %v440
        %v1177 = vunpack.c.h.b16 %v440
        %v1178 = vunpack.c.l.b16 %v441
        %v1179 = vunpack.c.h.b16 %v441
        %v1180 = vunpack.c.l.b16 %v442
        %v1181 = vunpack.c.h.b16 %v442
        %v1182 = vunpack.c.l.b16 %v443
        %v1183 = vunpack.c.h.b16 %v443
        %v1184 = vunpack.c.l.b16 %v444
        %v1185 = vunpack.c.h.b16 %v444
        %v1186 = vunpack.c.l.b16 %v445
        %v1187 = vunpack.c.h.b16 %v445
        %v1188 = vunpack.c.l.b16 %v446
        %v1189 = vunpack.c.h.b16 %v446
        %v1190 = vunpack.c.l.b16 %v447
        %v1191 = vunpack.c.h.b16 %v447
        %v1192 = vunpack.c.l.b16 %v448
        %v1193 = vunpack.c.h.b16 %v448
        %v1194 = vunpack.c.l.b16 %v449
        %v1195 = vunpack.c.h.b16 %v449
        %v1196 = vunpack.c.l.b16 %v450
        %v1197 = vunpack.c.h.b16 %v450
        %v1198 = vunpack.c.l.b16 %v451
        %v1199 = vunpack.c.h.b16 %v451
        %v1200 = vunpack.c.l.b16 %v452
        %v1201 = vunpack.c.h.b16 %v452
        %v1202 = vunpack.c.l.b16 %v453
        %v1203 = vunpack.c.h.b16 %v453
        %v1204 = vunpack.c.l.b16 %v454
        %v1205 = vunpack.c.h.b16 %v454
        %v1206 = vunpack.c.l.b16 %v455
        %v1207 = vunpack.c.h.b16 %v455
        %v1208 = vunpack.c.l.b16 %v456
        %v1209 = vunpack.c.h.b16 %v456
        %v1210 = vunpack.c.l.b16 %v457
        %v1211 = vunpack.c.h.b16 %v457
        %v1212 = vunpack.c.l.b16 %v458
        %v1213 = vunpack.c.h.b16 %v458
        %v1214 = vunpack.c.l.b16 %v459
        %v1215 = vunpack.c.h.b16 %v459
        %v1216 = vunpack.c.l.b16 %v460
        %v1217 = vunpack.c.h.b16 %v460
        %v1218 = vunpack.c.l.b16 %v461
        %v1219 = vunpack.c.h.b16 %v461
        %v1220 = vunpack.c.l.b16 %v462
        %v1221 = vunpack.c.h.b16 %v462
        %v1222 = vunpack.c.l.b16 %v463
        %v1223 = vunpack.c.h.b16 %v463
        %v1224 = vunpack.c.l.b16 %v464
        %v1225 = vunpack.c.h.b16 %v464
        %v1226 = vunpack.c.l.b16 %v465
        %v1227 = vunpack.c.h.b16 %v465
        %v1228 = vunpack.c.l.b16 %v466
        %v1229 = vunpack.c.h.b16 %v466
        %v1230 = vunpack.c.l.b16 %v467
        %v1231 = vunpack.c.h.b16 %v467
        %v1232 = vunpack.c.l.b16 %v468
        %v1233 = vunpack.c.h.b16 %v468
        %v1234 = vunpack.c.l.b16 %v469
        %v1235 = vunpack.c.h.b16 %v469
        %v1236 = vunpack.c.l.b16 %v470
        %v1237 = vunpack.c.h.b16 %v470
        %v1238 = vunpack.c.l.b16 %v471
        %v1239 = vunpack.c.h.b16 %v471
        %v1240 = vunpack.c.l.b16 %v472
        %v1241 = vunpack.c.h.b16 %v472
        %v1242 = vunpack.c.l.b16 %v473
        %v1243 = vunpack.c.h.b16 %v473
        %v1244 = vunpack.c.l.b16 %v474
        %v1245 = vunpack.c.h.b16 %v474
        %v1246 = vunpack.c.l.b16 %v475
        %v1247 = vunpack.c.h.b16 %v475
        %v1248 = vunpack.c.l.b16 %v476
        %v1249 = vunpack.c.h.b16 %v476
        %v1250 = vunpack.c.l.b16 %v477
        %v1251 = vunpack.c.h.b16 %v477
        %v1252 = vunpack.c.l.b16 %v478
        %v1253 = vunpack.c.h.b16 %v478
        %v1254 = vunpack.c.l.b16 %v479
        %v1255 = vunpack.c.h.b16 %v479
        %v1256 = vunpack.c.l.b16 %v480
        %v1257 = vunpack.c.h.b16 %v480
        %v1258 = vunpack.c.l.b16 %v481
        %v1259 = vunpack.c.h.b16 %v481
        %v1260 = vunpack.c.l.b16 %v482
        %v1261 = vunpack.c.h.b16 %v482
        %v1262 = vunpack.c.l.b16 %v483
        %v1263 = vunpack.c.h.b16 %v483
        %v1264 = vunpack.c.l.b16 %v484
        %v1265 = vunpack.c.h.b16 %v484
        %v1266 = vunpack.c.l.b16 %v485
        %v1267 = vunpack.c.h.b16 %v485
        %v1268 = vunpack.c.l.b16 %v486
        %v1269 = vunpack.c.h.b16 %v486
        %v1270 = vunpack.c.l.b16 %v487
        %v1271 = vunpack.c.h.b16 %v487
        %v1272 = vunpack.c.l.b16 %v488
        %v1273 = vunpack.c.h.b16 %v488
        %v1274 = vunpack.c.l.b16 %v489
        %v1275 = vunpack.c.h.b16 %v489
        %v1276 = vunpack.c.l.b16 %v490
        %v1277 = vunpack.c.h.b16 %v490
        %v1278 = vunpack.c.l.b16 %v491
        %v1279 = vunpack.c.h.b16 %v491
        %v1280 = vunpack.c.l.b16 %v492
        %v1281 = vunpack.c.h.b16 %v492
        %v1282 = vunpack.c.l.b16 %v493
        %v1283 = vunpack.c.h.b16 %v493
        %v1284 = vunpack.c.l.b16 %v494
        %v1285 = vunpack.c.h.b16 %v494
        %v1286 = vunpack.c.l.b16 %v495
        %v1287 = vunpack.c.h.b16 %v495
        %v1288 = vunpack.c.l.b16 %v496
        %v1289 = vunpack.c.h.b16 %v496
        %v1290 = vunpack.c.l.b16 %v497
        %v1291 = vunpack.c.h.b16 %v497
        %v1292 = vunpack.c.l.b16 %v498
        %v1293 = vunpack.c.h.b16 %v498
        %v1294 = vunpack.c.l.b16 %v499
        %v1295 = vunpack.c.h.b16 %v499
        %v1296 = vunpack.c.l.b16 %v500
        %v1297 = vunpack.c.h.b16 %v500
        %v1298 = vpack.c.b16 %v794, %v786
        %v1299 = vpack.c.b16 %v795, %v787
        %v1300 = vpack.c.b16 %v796, %v788
        %v1301 = vpack.c.b16 %v797, %v789
        %v1302 = vpack.c.b16 %v798, %v790
        %v1303 = vpack.c.b16 %v799, %v791
        %v1304 = vpack.c.b16 %v800, %v792
        %v1305 = vpack.c.b16 %v801, %v793
        %v1306 = vpack.c.b16 %v810, %v802
        %v1307 = vpack.c.b16 %v811, %v803
        %v1308 = vpack.c.b16 %v812, %v804
        %v1309 = vpack.c.b16 %v813, %v805
        %v1310 = vpack.c.b16 %v814, %v806
        %v1311 = vpack.c.b16 %v815, %v807
        %v1312 = vpack.c.b16 %v816, %v808
        %v1313 = vpack.c.b16 %v817, %v809
        %v1314 = vpack.c.b16 %v826, %v818
        %v1315 = vpack.c.b16 %v827, %v819
        %v1316 = vpack.c.b16 %v828, %v820
        %v1317 = vpack.c.b16 %v829, %v821
        %v1318 = vpack.c.b16 %v830, %v822
        %v1319 = vpack.c.b16 %v831, %v823
        %v1320 = vpack.c.b16 %v832, %v824
        %v1321 = vpack.c.b16 %v833, %v825
        %v1322 = vpack.c.b16 %v842, %v834
        %v1323 = vpack.c.b16 %v843, %v835
        %v1324 = vpack.c.b16 %v844, %v836
        %v1325 = vpack.c.b16 %v845, %v837
        %v1326 = vpack.c.b16 %v846, %v838
        %v1327 = vpack.c.b16 %v847, %v839
        %v1328 = vpack.c.b16 %v848, %v840
        %v1329 = vpack.c.b16 %v849, %v841
        %v1330 = vpack.c.b16 %v858, %v850
        %v1331 = vpack.c.b16 %v859, %v851
        %v1332 = vpack.c.b16 %v860, %v852
        %v1333 = vpack.c.b16 %v861, %v853
        %v1334 = vpack.c.b16 %v862, %v854
        %v1335 = vpack.c.b16 %v863, %v855
        %v1336 = vpack.c.b16 %v864, %v856
        %v1337 = vpack.c.b16 %v865, %v857
        %v1338 = vpack.c.b16 %v874, %v866
        %v1339 = vpack.c.b16 %v875, %v867
        %v1340 = vpack.c.b16 %v876, %v868
        %v1341 = vpack.c.b16 %v877, %v869
        %v1342 = vpack.c.b16 %v878, %v870
        %v1343 = vpack.c.b16 %v879, %v871
        %v1344 = vpack.c.b16 %v880, %v872
        %v1345 = vpack.c.b16 %v881, %v873
        %v1346 = vpack.c.b16 %v890, %v882
        %v1347 = vpack.c.b16 %v891, %v883
        %v1348 = vpack.c.b16 %v892, %v884
        %v1349 = vpack.c.b16 %v893, %v885
        %v1350 = vpack.c.b16 %v894, %v886
        %v1351 = vpack.c.b16 %v895, %v887
        %v1352 = vpack.c.b16 %v896, %v888
        %v1353 = vpack.c.b16 %v897, %v889
        %v1354 = vpack.c.b16 %v906, %v898
        %v1355 = vpack.c.b16 %v907, %v899
        %v1356 = vpack.c.b16 %v908, %v900
        %v1357 = vpack.c.b16 %v909, %v901
        %v1358 = vpack.c.b16 %v910, %v902
        %v1359 = vpack.c.b16 %v911, %v903
        %v1360 = vpack.c.b16 %v912, %v904
        %v1361 = vpack.c.b16 %v913, %v905
        %v1362 = vpack.c.b16 %v922, %v914
        %v1363 = vpack.c.b16 %v923, %v915
        %v1364 = vpack.c.b16 %v924, %v916
        %v1365 = vpack.c.b16 %v925, %v917
        %v1366 = vpack.c.b16 %v926, %v918
        %v1367 = vpack.c.b16 %v927, %v919
        %v1368 = vpack.c.b16 %v928, %v920
        %v1369 = vpack.c.b16 %v929, %v921
        %v1370 = vpack.c.b16 %v938, %v930
        %v1371 = vpack.c.b16 %v939, %v931
        %v1372 = vpack.c.b16 %v940, %v932
        %v1373 = vpack.c.b16 %v941, %v933
        %v1374 = vpack.c.b16 %v942, %v934
        %v1375 = vpack.c.b16 %v943, %v935
        %v1376 = vpack.c.b16 %v944, %v936
        %v1377 = vpack.c.b16 %v945, %v937
        %v1378 = vpack.c.b16 %v954, %v946
        %v1379 = vpack.c.b16 %v955, %v947
        %v1380 = vpack.c.b16 %v956, %v948
        %v1381 = vpack.c.b16 %v957, %v949
        %v1382 = vpack.c.b16 %v958, %v950
        %v1383 = vpack.c.b16 %v959, %v951
        %v1384 = vpack.c.b16 %v960, %v952
        %v1385 = vpack.c.b16 %v961, %v953
        %v1386 = vpack.c.b16 %v970, %v962
        %v1387 = vpack.c.b16 %v971, %v963
        %v1388 = vpack.c.b16 %v972, %v964
        %v1389 = vpack.c.b16 %v973, %v965
        %v1390 = vpack.c.b16 %v974, %v966
        %v1391 = vpack.c.b16 %v975, %v967
        %v1392 = vpack.c.b16 %v976, %v968
        %v1393 = vpack.c.b16 %v977, %v969
        %v1394 = vpack.c.b16 %v986, %v978
        %v1395 = vpack.c.b16 %v987, %v979
        %v1396 = vpack.c.b16 %v988, %v980
        %v1397 = vpack.c.b16 %v989, %v981
        %v1398 = vpack.c.b16 %v990, %v982
        %v1399 = vpack.c.b16 %v991, %v983
        %v1400 = vpack.c.b16 %v992, %v984
        %v1401 = vpack.c.b16 %v993, %v985
        %v1402 = vpack.c.b16 %v1002, %v994
        %v1403 = vpack.c.b16 %v1003, %v995
        %v1404 = vpack.c.b16 %v1004, %v996
        %v1405 = vpack.c.b16 %v1005, %v997
        %v1406 = vpack.c.b16 %v1006, %v998
        %v1407 = vpack.c.b16 %v1007, %v999
        %v1408 = vpack.c.b16 %v1008, %v1000
        %v1409 = vpack.c.b16 %v1009, %v1001
        %v1410 = vpack.c.b16 %v1018, %v1010
        %v1411 = vpack.c.b16 %v1019, %v1011
        %v1412 = vpack.c.b16 %v1020, %v1012
        %v1413 = vpack.c.b16 %v1021, %v1013
        %v1414 = vpack.c.b16 %v1022, %v1014
        %v1415 = vpack.c.b16 %v1023, %v1015
        %v1416 = vpack.c.b16 %v1024, %v1016
        %v1417 = vpack.c.b16 %v1025, %v1017
        %v1418 = vpack.c.b16 %v1034, %v1026
        %v1419 = vpack.c.b16 %v1035, %v1027
        %v1420 = vpack.c.b16 %v1036, %v1028
        %v1421 = vpack.c.b16 %v1037, %v1029
        %v1422 = vpack.c.b16 %v1038, %v1030
        %v1423 = vpack.c.b16 %v1039, %v1031
        %v1424 = vpack.c.b16 %v1040, %v1032
        %v1425 = vpack.c.b16 %v1041, %v1033
        %v1426 = vpack.c.b16 %v1050, %v1042
        %v1427 = vpack.c.b16 %v1051, %v1043
        %v1428 = vpack.c.b16 %v1052, %v1044
        %v1429 = vpack.c.b16 %v1053, %v1045
        %v1430 = vpack.c.b16 %v1054, %v1046
        %v1431 = vpack.c.b16 %v1055, %v1047
        %v1432 = vpack.c.b16 %v1056, %v1048
        %v1433 = vpack.c.b16 %v1057, %v1049
        %v1434 = vpack.c.b16 %v1066, %v1058
        %v1435 = vpack.c.b16 %v1067, %v1059
        %v1436 = vpack.c.b16 %v1068, %v1060
        %v1437 = vpack.c.b16 %v1069, %v1061
        %v1438 = vpack.c.b16 %v1070, %v1062
        %v1439 = vpack.c.b16 %v1071, %v1063
        %v1440 = vpack.c.b16 %v1072, %v1064
        %v1441 = vpack.c.b16 %v1073, %v1065
        %v1442 = vpack.c.b16 %v1082, %v1074
        %v1443 = vpack.c.b16 %v1083, %v1075
        %v1444 = vpack.c.b16 %v1084, %v1076
        %v1445 = vpack.c.b16 %v1085, %v1077
        %v1446 = vpack.c.b16 %v1086, %v1078
        %v1447 = vpack.c.b16 %v1087, %v1079
        %v1448 = vpack.c.b16 %v1088, %v1080
        %v1449 = vpack.c.b16 %v1089, %v1081
        %v1450 = vpack.c.b16 %v1098, %v1090
        %v1451 = vpack.c.b16 %v1099, %v1091
        %v1452 = vpack.c.b16 %v1100, %v1092
        %v1453 = vpack.c.b16 %v1101, %v1093
        %v1454 = vpack.c.b16 %v1102, %v1094
        %v1455 = vpack.c.b16 %v1103, %v1095
        %v1456 = vpack.c.b16 %v1104, %v1096
        %v1457 = vpack.c.b16 %v1105, %v1097
        %v1458 = vpack.c.b16 %v1114, %v1106
        %v1459 = vpack.c.b16 %v1115, %v1107
        %v1460 = vpack.c.b16 %v1116, %v1108
        %v1461 = vpack.c.b16 %v1117, %v1109
        %v1462 = vpack.c.b16 %v1118, %v1110
        %v1463 = vpack.c.b16 %v1119, %v1111
        %v1464 = vpack.c.b16 %v1120, %v1112
        %v1465 = vpack.c.b16 %v1121, %v1113
        %v1466 = vpack.c.b16 %v1130, %v1122
        %v1467 = vpack.c.b16 %v1131, %v1123
        %v1468 = vpack.c.b16 %v1132, %v1124
        %v1469 = vpack.c.b16 %v1133, %v1125
        %v1470 = vpack.c.b16 %v1134, %v1126
        %v1471 = vpack.c.b16 %v1135, %v1127
        %v1472 = vpack.c.b16 %v1136, %v1128
        %v1473 = vpack.c.b16 %v1137, %v1129
        %v1474 = vpack.c.b16 %v1146, %v1138
        %v1475 = vpack.c.b16 %v1147, %v1139
        %v1476 = vpack.c.b16 %v1148, %v1140
        %v1477 = vpack.c.b16 %v1149, %v1141
        %v1478 = vpack.c.b16 %v1150, %v1142
        %v1479 = vpack.c.b16 %v1151, %v1143
        %v1480 = vpack.c.b16 %v1152, %v1144
        %v1481 = vpack.c.b16 %v1153, %v1145
        %v1482 = vpack.c.b16 %v1162, %v1154
        %v1483 = vpack.c.b16 %v1163, %v1155
        %v1484 = vpack.c.b16 %v1164, %v1156
        %v1485 = vpack.c.b16 %v1165, %v1157
        %v1486 = vpack.c.b16 %v1166, %v1158
        %v1487 = vpack.c.b16 %v1167, %v1159
        %v1488 = vpack.c.b16 %v1168, %v1160
        %v1489 = vpack.c.b16 %v1169, %v1161
        %v1490 = vpack.c.b16 %v1178, %v1170
        %v1491 = vpack.c.b16 %v1179, %v1171
        %v1492 = vpack.c.b16 %v1180, %v1172
        %v1493 = vpack.c.b16 %v1181, %v1173
        %v1494 = vpack.c.b16 %v1182, %v1174
        %v1495 = vpack.c.b16 %v1183, %v1175
        %v1496 = vpack.c.b16 %v1184, %v1176
        %v1497 = vpack.c.b16 %v1185, %v1177
        %v1498 = vpack.c.b16 %v1194, %v1186
        %v1499 = vpack.c.b16 %v1195, %v1187
        %v1500 = vpack.c.b16 %v1196, %v1188
        %v1501 = vpack.c.b16 %v1197, %v1189
        %v1502 = vpack.c.b16 %v1198, %v1190
        %v1503 = vpack.c.b16 %v1199, %v1191
        %v1504 = vpack.c.b16 %v1200, %v1192
        %v1505 = vpack.c.b16 %v1201, %v1193
        %v1506 = vpack.c.b16 %v1210, %v1202
        %v1507 = vpack.c.b16 %v1211, %v1203
        %v1508 = vpack.c.b16 %v1212, %v1204
        %v1509 = vpack.c.b16 %v1213, %v1205
        %v1510 = vpack.c.b16 %v1214, %v1206
        %v1511 = vpack.c.b16 %v1215, %v1207
        %v1512 = vpack.c.b16 %v1216, %v1208
        %v1513 = vpack.c.b16 %v1217, %v1209
        %v1514 = vpack.c.b16 %v1226, %v1218
        %v1515 = vpack.c.b16 %v1227, %v1219
        %v1516 = vpack.c.b16 %v1228, %v1220
        %v1517 = vpack.c.b16 %v1229, %v1221
        %v1518 = vpack.c.b16 %v1230, %v1222
        %v1519 = vpack.c.b16 %v1231, %v1223
        %v1520 = vpack.c.b16 %v1232, %v1224
        %v1521 = vpack.c.b16 %v1233, %v1225
        %v1522 = vpack.c.b16 %v1242, %v1234
        %v1523 = vpack.c.b16 %v1243, %v1235
        %v1524 = vpack.c.b16 %v1244, %v1236
        %v1525 = vpack.c.b16 %v1245, %v1237
        %v1526 = vpack.c.b16 %v1246, %v1238
        %v1527 = vpack.c.b16 %v1247, %v1239
        %v1528 = vpack.c.b16 %v1248, %v1240
        %v1529 = vpack.c.b16 %v1249, %v1241
        %v1530 = vpack.c.b16 %v1258, %v1250
        %v1531 = vpack.c.b16 %v1259, %v1251
        %v1532 = vpack.c.b16 %v1260, %v1252
        %v1533 = vpack.c.b16 %v1261, %v1253
        %v1534 = vpack.c.b16 %v1262, %v1254
        %v1535 = vpack.c.b16 %v1263, %v1255
        %v1536 = vpack.c.b16 %v1264, %v1256
        %v1537 = vpack.c.b16 %v1265, %v1257
        %v1538 = vpack.c.b16 %v1274, %v1266
        %v1539 = vpack.c.b16 %v1275, %v1267
        %v1540 = vpack.c.b16 %v1276, %v1268
        %v1541 = vpack.c.b16 %v1277, %v1269
        %v1542 = vpack.c.b16 %v1278, %v1270
        %v1543 = vpack.c.b16 %v1279, %v1271
        %v1544 = vpack.c.b16 %v1280, %v1272
        %v1545 = vpack.c.b16 %v1281, %v1273
        %v1546 = vpack.c.b16 %v1290, %v1282
        %v1547 = vpack.c.b16 %v1291, %v1283
        %v1548 = vpack.c.b16 %v1292, %v1284
        %v1549 = vpack.c.b16 %v1293, %v1285
        %v1550 = vpack.c.b16 %v1294, %v1286
        %v1551 = vpack.c.b16 %v1295, %v1287
        %v1552 = vpack.c.b16 %v1296, %v1288
        %v1553 = vpack.c.b16 %v1297, %v1289
        %1810 = vmatprep.subr.bf16.mxu0 %v1299
        %1811 = vmatpush1.bf16.msra.mxu0 %v1298
        %1812 = vmatprep.subr.bf16.mxu0 %v1307
        %1813 = vmatpush1.bf16.msra.mxu0 %v1306
        %1814 = vmatprep.subr.bf16.mxu0 %v1315
        %1815 = vmatpush1.bf16.msra.mxu0 %v1314
        %1816 = vmatprep.subr.bf16.mxu0 %v1323
        %1817 = vmatpush1.bf16.msra.mxu0 %v1322
        %1818 = vmatprep.subr.bf16.mxu0 %v1331
        %1819 = vmatpush1.bf16.msra.mxu0 %v1330
        %1820 = vmatprep.subr.bf16.mxu0 %v1339
        %1821 = vmatpush1.bf16.msra.mxu0 %v1338
        %1822 = vmatprep.subr.bf16.mxu0 %v1347
        %1823 = vmatpush1.bf16.msra.mxu0 %v1346
        %1824 = vmatprep.subr.bf16.mxu0 %v1355
        %1825 = vmatpush1.bf16.msra.mxu0 %v1354
        %1826 = vmatprep.subr.bf16.mxu0 %v1363
        %1827 = vmatpush1.bf16.msra.mxu0 %v1362
        %1828 = vmatprep.subr.bf16.mxu0 %v1371
        %1829 = vmatpush1.bf16.msra.mxu0 %v1370
        %1830 = vmatprep.subr.bf16.mxu0 %v1379
        %1831 = vmatpush1.bf16.msra.mxu0 %v1378
        %1832 = vmatprep.subr.bf16.mxu0 %v1387
        %1833 = vmatpush1.bf16.msra.mxu0 %v1386
        %1834 = vmatprep.subr.bf16.mxu0 %v1395
        %1835 = vmatpush1.bf16.msra.mxu0 %v1394
        %1836 = vmatprep.subr.bf16.mxu0 %v1403
        %1837 = vmatpush1.bf16.msra.mxu0 %v1402
        %1838 = vmatprep.subr.bf16.mxu0 %v1411
        %1839 = vmatpush1.bf16.msra.mxu0 %v1410
        %1840 = vmatprep.subr.bf16.mxu0 %v1419
        %1841 = vmatpush1.bf16.msra.mxu0 %v1418
        %1842 = vmatprep.mubr.bf16.mxu0 %v523
        %1843 = vmatmul.mubr.bf16.gmra.mrb[0].mxu0 %v516
        %v1844 = vpop.f32.mrb[0].mxu0
        %v1845 = vadd.f32 0.0, %v1844
        %v1846 = vpop.f32.mrb[0].mxu0
        %v1847 = vadd.f32 0.0, %v1846
        %v1848 = vpop.f32.mrb[0].mxu0
        %v1849 = vpop.f32.mrb[0].mxu0
        %1850 = vdwg.mxu0
        %1851 = vmatprep.subr.bf16.mxu0 %v1427
        %1852 = vmatpush1.bf16.msra.mxu0 %v1426
        %1853 = vmatprep.subr.bf16.mxu0 %v1435
        %1854 = vmatpush1.bf16.msra.mxu0 %v1434
        %1855 = vmatprep.subr.bf16.mxu0 %v1443
        %1856 = vmatpush1.bf16.msra.mxu0 %v1442
        %1857 = vmatprep.subr.bf16.mxu0 %v1451
        %1858 = vmatpush1.bf16.msra.mxu0 %v1450
        %1859 = vmatprep.subr.bf16.mxu0 %v1459
        %1860 = vmatpush1.bf16.msra.mxu0 %v1458
        %1861 = vmatprep.subr.bf16.mxu0 %v1467
        %1862 = vmatpush1.bf16.msra.mxu0 %v1466
        %1863 = vmatprep.subr.bf16.mxu0 %v1475
        %1864 = vmatpush1.bf16.msra.mxu0 %v1474
        %1865 = vmatprep.subr.bf16.mxu0 %v1483
        %1866 = vmatpush1.bf16.msra.mxu0 %v1482
        %1867 = vmatprep.subr.bf16.mxu0 %v1491
        %1868 = vmatpush1.bf16.msra.mxu0 %v1490
        %1869 = vmatprep.subr.bf16.mxu0 %v1499
        %1870 = vmatpush1.bf16.msra.mxu0 %v1498
        %1871 = vmatprep.subr.bf16.mxu0 %v1507
        %1872 = vmatpush1.bf16.msra.mxu0 %v1506
        %1873 = vmatprep.subr.bf16.mxu0 %v1515
        %1874 = vmatpush1.bf16.msra.mxu0 %v1514
        %1875 = vmatprep.subr.bf16.mxu0 %v1523
        %1876 = vmatpush1.bf16.msra.mxu0 %v1522
        %1877 = vmatprep.subr.bf16.mxu0 %v1531
        %1878 = vmatpush1.bf16.msra.mxu0 %v1530
        %1879 = vmatprep.subr.bf16.mxu0 %v1539
        %1880 = vmatpush1.bf16.msra.mxu0 %v1538
        %1881 = vmatprep.subr.bf16.mxu0 %v1547
        %1882 = vmatpush1.bf16.msra.mxu0 %v1546
        %1883 = vmatprep.mubr.bf16.mxu0 %v525
        %1884 = vmatmul.mubr.bf16.gmra.mrb[0].mxu0 %v524
        %v1885 = vpop.f32.mrb[0].mxu0
        %v1886 = vadd.f32 %v1845, %v1885
        %v1887 = vpop.f32.mrb[0].mxu0
        %v1888 = vadd.f32 %v1847, %v1887
        %v1889 = vpop.f32.mrb[0].mxu0
        %v1890 = vpop.f32.mrb[0].mxu0
        %1891 = vdwg.mxu0
        %1892 = vmatprep.subr.bf16.mxu0 %v1301
        %1893 = vmatpush1.bf16.msra.mxu0 %v1300
        %1894 = vmatprep.subr.bf16.mxu0 %v1309
        %1895 = vmatpush1.bf16.msra.mxu0 %v1308
        %1896 = vmatprep.subr.bf16.mxu0 %v1317
        %1897 = vmatpush1.bf16.msra.mxu0 %v1316
        %1898 = vmatprep.subr.bf16.mxu0 %v1325
        %1899 = vmatpush1.bf16.msra.mxu0 %v1324
        %1900 = vmatprep.subr.bf16.mxu0 %v1333
        %1901 = vmatpush1.bf16.msra.mxu0 %v1332
        %1902 = vmatprep.subr.bf16.mxu0 %v1341
        %1903 = vmatpush1.bf16.msra.mxu0 %v1340
        %1904 = vmatprep.subr.bf16.mxu0 %v1349
        %1905 = vmatpush1.bf16.msra.mxu0 %v1348
        %1906 = vmatprep.subr.bf16.mxu0 %v1357
        %1907 = vmatpush1.bf16.msra.mxu0 %v1356
        %1908 = vmatprep.subr.bf16.mxu0 %v1365
        %1909 = vmatpush1.bf16.msra.mxu0 %v1364
        %1910 = vmatprep.subr.bf16.mxu0 %v1373
        %1911 = vmatpush1.bf16.msra.mxu0 %v1372
        %1912 = vmatprep.subr.bf16.mxu0 %v1381
        %1913 = vmatpush1.bf16.msra.mxu0 %v1380
        %1914 = vmatprep.subr.bf16.mxu0 %v1389
        %1915 = vmatpush1.bf16.msra.mxu0 %v1388
        %1916 = vmatprep.subr.bf16.mxu0 %v1397
        %1917 = vmatpush1.bf16.msra.mxu0 %v1396
        %1918 = vmatprep.subr.bf16.mxu0 %v1405
        %1919 = vmatpush1.bf16.msra.mxu0 %v1404
        %1920 = vmatprep.subr.bf16.mxu0 %v1413
        %1921 = vmatpush1.bf16.msra.mxu0 %v1412
        %1922 = vmatprep.subr.bf16.mxu0 %v1421
        %1923 = vmatpush1.bf16.msra.mxu0 %v1420
        %1924 = vmatprep.mubr.bf16.mxu0 %v523
        %1925 = vmatmul.mubr.bf16.gmra.mrb[0].mxu0 %v516
        %v1926 = vpop.f32.mrb[0].mxu0
        %v1927 = vadd.f32 0.0, %v1926
        %v1928 = vpop.f32.mrb[0].mxu0
        %v1929 = vadd.f32 0.0, %v1928
        %v1930 = vpop.f32.mrb[0].mxu0
        %v1931 = vpop.f32.mrb[0].mxu0
        %1932 = vdwg.mxu0
        %1933 = vmatprep.subr.bf16.mxu0 %v1429
        %1934 = vmatpush1.bf16.msra.mxu0 %v1428
        %1935 = vmatprep.subr.bf16.mxu0 %v1437
        %1936 = vmatpush1.bf16.msra.mxu0 %v1436
        %1937 = vmatprep.subr.bf16.mxu0 %v1445
        %1938 = vmatpush1.bf16.msra.mxu0 %v1444
        %1939 = vmatprep.subr.bf16.mxu0 %v1453
        %1940 = vmatpush1.bf16.msra.mxu0 %v1452
        %1941 = vmatprep.subr.bf16.mxu0 %v1461
        %1942 = vmatpush1.bf16.msra.mxu0 %v1460
        %1943 = vmatprep.subr.bf16.mxu0 %v1469
        %1944 = vmatpush1.bf16.msra.mxu0 %v1468
        %1945 = vmatprep.subr.bf16.mxu0 %v1477
        %1946 = vmatpush1.bf16.msra.mxu0 %v1476
        %1947 = vmatprep.subr.bf16.mxu0 %v1485
        %1948 = vmatpush1.bf16.msra.mxu0 %v1484
        %1949 = vmatprep.subr.bf16.mxu0 %v1493
        %1950 = vmatpush1.bf16.msra.mxu0 %v1492
        %1951 = vmatprep.subr.bf16.mxu0 %v1501
        %1952 = vmatpush1.bf16.msra.mxu0 %v1500
        %1953 = vmatprep.subr.bf16.mxu0 %v1509
        %1954 = vmatpush1.bf16.msra.mxu0 %v1508
        %1955 = vmatprep.subr.bf16.mxu0 %v1517
        %1956 = vmatpush1.bf16.msra.mxu0 %v1516
        %1957 = vmatprep.subr.bf16.mxu0 %v1525
        %1958 = vmatpush1.bf16.msra.mxu0 %v1524
        %1959 = vmatprep.subr.bf16.mxu0 %v1533
        %1960 = vmatpush1.bf16.msra.mxu0 %v1532
        %1961 = vmatprep.subr.bf16.mxu0 %v1541
        %1962 = vmatpush1.bf16.msra.mxu0 %v1540
        %1963 = vmatprep.subr.bf16.mxu0 %v1549
        %1964 = vmatpush1.bf16.msra.mxu0 %v1548
        %1965 = vmatprep.mubr.bf16.mxu0 %v525
        %1966 = vmatmul.mubr.bf16.gmra.mrb[0].mxu0 %v524
        %v1967 = vpop.f32.mrb[0].mxu0
        %v1968 = vadd.f32 %v1927, %v1967
        %v1969 = vpop.f32.mrb[0].mxu0
        %v1970 = vadd.f32 %v1929, %v1969
        %v1971 = vpop.f32.mrb[0].mxu0
        %v1972 = vpop.f32.mrb[0].mxu0
        %1973 = vdwg.mxu0
        %1974 = vmatprep.subr.bf16.mxu0 %v1303
        %1975 = vmatpush1.bf16.msra.mxu0 %v1302
        %1976 = vmatprep.subr.bf16.mxu0 %v1311
        %1977 = vmatpush1.bf16.msra.mxu0 %v1310
        %1978 = vmatprep.subr.bf16.mxu0 %v1319
        %1979 = vmatpush1.bf16.msra.mxu0 %v1318
        %1980 = vmatprep.subr.bf16.mxu0 %v1327
        %1981 = vmatpush1.bf16.msra.mxu0 %v1326
        %1982 = vmatprep.subr.bf16.mxu0 %v1335
        %1983 = vmatpush1.bf16.msra.mxu0 %v1334
        %1984 = vmatprep.subr.bf16.mxu0 %v1343
        %1985 = vmatpush1.bf16.msra.mxu0 %v1342
        %1986 = vmatprep.subr.bf16.mxu0 %v1351
        %1987 = vmatpush1.bf16.msra.mxu0 %v1350
        %1988 = vmatprep.subr.bf16.mxu0 %v1359
        %1989 = vmatpush1.bf16.msra.mxu0 %v1358
        %1990 = vmatprep.subr.bf16.mxu0 %v1367
        %1991 = vmatpush1.bf16.msra.mxu0 %v1366
        %1992 = vmatprep.subr.bf16.mxu0 %v1375
        %1993 = vmatpush1.bf16.msra.mxu0 %v1374
        %1994 = vmatprep.subr.bf16.mxu0 %v1383
        %1995 = vmatpush1.bf16.msra.mxu0 %v1382
        %1996 = vmatprep.subr.bf16.mxu0 %v1391
        %1997 = vmatpush1.bf16.msra.mxu0 %v1390
        %1998 = vmatprep.subr.bf16.mxu0 %v1399
        %1999 = vmatpush1.bf16.msra.mxu0 %v1398
        %2000 = vmatprep.subr.bf16.mxu0 %v1407
        %2001 = vmatpush1.bf16.msra.mxu0 %v1406
        %2002 = vmatprep.subr.bf16.mxu0 %v1415
        %2003 = vmatpush1.bf16.msra.mxu0 %v1414
        %2004 = vmatprep.subr.bf16.mxu0 %v1423
        %2005 = vmatpush1.bf16.msra.mxu0 %v1422
        %2006 = vmatprep.mubr.bf16.mxu0 %v523
        %2007 = vmatmul.mubr.bf16.gmra.mrb[0].mxu0 %v516
        %v2008 = vpop.f32.mrb[0].mxu0
        %v2009 = vadd.f32 0.0, %v2008
        %v2010 = vpop.f32.mrb[0].mxu0
        %v2011 = vadd.f32 0.0, %v2010
        %v2012 = vpop.f32.mrb[0].mxu0
        %v2013 = vpop.f32.mrb[0].mxu0
        %2014 = vdwg.mxu0
        %2015 = vmatprep.subr.bf16.mxu0 %v1431
        %2016 = vmatpush1.bf16.msra.mxu0 %v1430
        %2017 = vmatprep.subr.bf16.mxu0 %v1439
        %2018 = vmatpush1.bf16.msra.mxu0 %v1438
        %2019 = vmatprep.subr.bf16.mxu0 %v1447
        %2020 = vmatpush1.bf16.msra.mxu0 %v1446
        %2021 = vmatprep.subr.bf16.mxu0 %v1455
        %2022 = vmatpush1.bf16.msra.mxu0 %v1454
        %2023 = vmatprep.subr.bf16.mxu0 %v1463
        %2024 = vmatpush1.bf16.msra.mxu0 %v1462
        %2025 = vmatprep.subr.bf16.mxu0 %v1471
        %2026 = vmatpush1.bf16.msra.mxu0 %v1470
        %2027 = vmatprep.subr.bf16.mxu0 %v1479
        %2028 = vmatpush1.bf16.msra.mxu0 %v1478
        %2029 = vmatprep.subr.bf16.mxu0 %v1487
        %2030 = vmatpush1.bf16.msra.mxu0 %v1486
        %2031 = vmatprep.subr.bf16.mxu0 %v1495
        %2032 = vmatpush1.bf16.msra.mxu0 %v1494
        %2033 = vmatprep.subr.bf16.mxu0 %v1503
        %2034 = vmatpush1.bf16.msra.mxu0 %v1502
        %2035 = vmatprep.subr.bf16.mxu0 %v1511
        %2036 = vmatpush1.bf16.msra.mxu0 %v1510
        %2037 = vmatprep.subr.bf16.mxu0 %v1519
        %2038 = vmatpush1.bf16.msra.mxu0 %v1518
        %2039 = vmatprep.subr.bf16.mxu0 %v1527
        %2040 = vmatpush1.bf16.msra.mxu0 %v1526
        %2041 = vmatprep.subr.bf16.mxu0 %v1535
        %2042 = vmatpush1.bf16.msra.mxu0 %v1534
        %2043 = vmatprep.subr.bf16.mxu0 %v1543
        %2044 = vmatpush1.bf16.msra.mxu0 %v1542
        %2045 = vmatprep.subr.bf16.mxu0 %v1551
        %2046 = vmatpush1.bf16.msra.mxu0 %v1550
        %2047 = vmatprep.mubr.bf16.mxu0 %v525
        %2048 = vmatmul.mubr.bf16.gmra.mrb[0].mxu0 %v524
        %v2049 = vpop.f32.mrb[0].mxu0
        %v2050 = vadd.f32 %v2009, %v2049
        %v2051 = vpop.f32.mrb[0].mxu0
        %v2052 = vadd.f32 %v2011, %v2051
        %v2053 = vpop.f32.mrb[0].mxu0
        %v2054 = vpop.f32.mrb[0].mxu0
        %2055 = vdwg.mxu0
        %2056 = vmatprep.subr.bf16.mxu0 %v1305
        %2057 = vmatpush1.bf16.msra.mxu0 %v1304
        %2058 = vmatprep.subr.bf16.mxu0 %v1313
        %2059 = vmatpush1.bf16.msra.mxu0 %v1312
        %2060 = vmatprep.subr.bf16.mxu0 %v1321
        %2061 = vmatpush1.bf16.msra.mxu0 %v1320
        %2062 = vmatprep.subr.bf16.mxu0 %v1329
        %2063 = vmatpush1.bf16.msra.mxu0 %v1328
        %2064 = vmatprep.subr.bf16.mxu0 %v1337
        %2065 = vmatpush1.bf16.msra.mxu0 %v1336
        %2066 = vmatprep.subr.bf16.mxu0 %v1345
        %2067 = vmatpush1.bf16.msra.mxu0 %v1344
        %2068 = vmatprep.subr.bf16.mxu0 %v1353
        %2069 = vmatpush1.bf16.msra.mxu0 %v1352
        %2070 = vmatprep.subr.bf16.mxu0 %v1361
        %2071 = vmatpush1.bf16.msra.mxu0 %v1360
        %2072 = vmatprep.subr.bf16.mxu0 %v1369
        %2073 = vmatpush1.bf16.msra.mxu0 %v1368
        %2074 = vmatprep.subr.bf16.mxu0 %v1377
        %2075 = vmatpush1.bf16.msra.mxu0 %v1376
        %2076 = vmatprep.subr.bf16.mxu0 %v1385
        %2077 = vmatpush1.bf16.msra.mxu0 %v1384
        %2078 = vmatprep.subr.bf16.mxu0 %v1393
        %2079 = vmatpush1.bf16.msra.mxu0 %v1392
        %2080 = vmatprep.subr.bf16.mxu0 %v1401
        %2081 = vmatpush1.bf16.msra.mxu0 %v1400
        %2082 = vmatprep.subr.bf16.mxu0 %v1409
        %2083 = vmatpush1.bf16.msra.mxu0 %v1408
        %2084 = vmatprep.subr.bf16.mxu0 %v1417
        %2085 = vmatpush1.bf16.msra.mxu0 %v1416
        %2086 = vmatprep.subr.bf16.mxu0 %v1425
        %2087 = vmatpush1.bf16.msra.mxu0 %v1424
        %2088 = vmatprep.mubr.bf16.mxu0 %v523
        %2089 = vmatmul.mubr.bf16.gmra.mrb[0].mxu0 %v516
        %v2090 = vpop.f32.mrb[0].mxu0
        %v2091 = vadd.f32 0.0, %v2090
        %v2092 = vpop.f32.mrb[0].mxu0
        %v2093 = vadd.f32 0.0, %v2092
        %v2094 = vpop.f32.mrb[0].mxu0
        %v2095 = vpop.f32.mrb[0].mxu0
        %2096 = vdwg.mxu0
        %2097 = vmatprep.subr.bf16.mxu0 %v1433
        %2098 = vmatpush1.bf16.msra.mxu0 %v1432
        %2099 = vmatprep.subr.bf16.mxu0 %v1441
        %2100 = vmatpush1.bf16.msra.mxu0 %v1440
        %2101 = vmatprep.subr.bf16.mxu0 %v1449
        %2102 = vmatpush1.bf16.msra.mxu0 %v1448
        %2103 = vmatprep.subr.bf16.mxu0 %v1457
        %2104 = vmatpush1.bf16.msra.mxu0 %v1456
        %2105 = vmatprep.subr.bf16.mxu0 %v1465
        %2106 = vmatpush1.bf16.msra.mxu0 %v1464
        %2107 = vmatprep.subr.bf16.mxu0 %v1473
        %2108 = vmatpush1.bf16.msra.mxu0 %v1472
        %2109 = vmatprep.subr.bf16.mxu0 %v1481
        %2110 = vmatpush1.bf16.msra.mxu0 %v1480
        %2111 = vmatprep.subr.bf16.mxu0 %v1489
        %2112 = vmatpush1.bf16.msra.mxu0 %v1488
        %2113 = vmatprep.subr.bf16.mxu0 %v1497
        %2114 = vmatpush1.bf16.msra.mxu0 %v1496
        %2115 = vmatprep.subr.bf16.mxu0 %v1505
        %2116 = vmatpush1.bf16.msra.mxu0 %v1504
        %2117 = vmatprep.subr.bf16.mxu0 %v1513
        %2118 = vmatpush1.bf16.msra.mxu0 %v1512
        %2119 = vmatprep.subr.bf16.mxu0 %v1521
        %2120 = vmatpush1.bf16.msra.mxu0 %v1520
        %2121 = vmatprep.subr.bf16.mxu0 %v1529
        %2122 = vmatpush1.bf16.msra.mxu0 %v1528
        %2123 = vmatprep.subr.bf16.mxu0 %v1537
        %2124 = vmatpush1.bf16.msra.mxu0 %v1536
        %2125 = vmatprep.subr.bf16.mxu0 %v1545
        %2126 = vmatpush1.bf16.msra.mxu0 %v1544
        %2127 = vmatprep.subr.bf16.mxu0 %v1553
        %2128 = vmatpush1.bf16.msra.mxu0 %v1552
        %2129 = vmatprep.mubr.bf16.mxu0 %v525
        %2130 = vmatmul.mubr.bf16.gmra.mrb[0].mxu0 %v524
        %v2131 = vpop.f32.mrb[0].mxu0
        %v2132 = vadd.f32 %v2091, %v2131
        %v2133 = vpop.f32.mrb[0].mxu0
        %v2134 = vadd.f32 %v2093, %v2133
        %v2135 = vpop.f32.mrb[0].mxu0
        %v2136 = vpop.f32.mrb[0].mxu0
        %2137 = vdwg.mxu0
        %v2146 = vcombine.low %v1886, %v1888
        %v2147 = vcombine.low %v1968, %v1970
        %v2149 = vunpack.c.l.s4 1983009808
        %v2150 = vunpack.c.0.s8 %v2149
        %v2151 = vlaneseq
        %v2152 = vshrl.u32 %v2151, 7
        %v2153 = vsub.s32 %v2150, %v2152
        %v2154 = vrot.slane %v2146, %v2153
        %v2156 = vunpack.c.l.s4 1983009808
        %v2157 = vunpack.c.0.s8 %v2156
        %v2158 = vlaneseq
        %v2159 = vshrl.u32 %v2158, 7
        %v2160 = vsub.s32 %v2157, %v2159
        %v2161 = vrot.slane %v2147, %v2160
        %v2162 = vcombine.low %v2154, %v2161
        %v2163 = vcombine.low %v2050, %v2052
        %v2164 = vcombine.low %v2132, %v2134
        %v2166 = vunpack.c.l.s4 1983009808
        %v2167 = vunpack.c.0.s8 %v2166
        %v2168 = vlaneseq
        %v2169 = vshrl.u32 %v2168, 7
        %v2170 = vsub.s32 %v2167, %v2169
        %v2171 = vrot.slane %v2163, %v2170
        %v2173 = vunpack.c.l.s4 1983009808
        %v2174 = vunpack.c.0.s8 %v2173
        %v2175 = vlaneseq
        %v2176 = vshrl.u32 %v2175, 7
        %v2177 = vsub.s32 %v2174, %v2176
        %v2178 = vrot.slane %v2164, %v2177
        %v2179 = vcombine.low %v2171, %v2178
        %v2182 = vadd.f32 %v242, %v2162
        %v2183 = vadd.f32 %v243, %v2179
        %2184 = vst [vmem:[#allocation2] sm:$0xff] %v2182
        %2185 = vst [vmem:[#allocation2 + $0x8] sm:$0xff] %v2183
        %p2186 = scmp.eq.s32.totalorder %s17, 6
        // Predicated region
        $region45: #{model_forward.7} parent=39 // pred_check
          %p2187 = pneg %p2186
        $region46: #{model_forward.7} parent=39 // pred_check_branch
          %2189 = sbr.rel (%p2187) target = $region48
        $region47: #{model_forward.7} parent=39 // pred_region
          %v2190 = vld [vmem:[#allocation2] sm:$0xff]
          %v2191 = vld [vmem:[#allocation2 + $0x8] sm:$0xff]
          %v2192 = vld [vmem:[%s2] sm:$0xff]
          %v2194 = vlaneseq
          %v2195 = vshrl.u32 %v2194, 7
          %v2196 = vsub.s32 0, %v2195
          %v2197 = vrot.slane %v2192, %v2196
          %v2198 = vlaneseq
          %v2199 = vshrl.u32 %v2198, 7
          %v2200 = vsub.s32 1, %v2199
          %v2201 = vrot.slane %v2192, %v2200
          %v2202 = vlaneseq
          %v2203 = vshrl.u32 %v2202, 7
          %v2204 = vsub.s32 2, %v2203
          %v2205 = vrot.slane %v2192, %v2204
          %v2206 = vlaneseq
          %v2207 = vshrl.u32 %v2206, 7
          %v2208 = vsub.s32 3, %v2207
          %v2209 = vrot.slane %v2192, %v2208
          %v2210 = vlaneseq
          %v2211 = vshrl.u32 %v2210, 7
          %v2212 = vsub.s32 4, %v2211
          %v2213 = vrot.slane %v2192, %v2212
          %v2214 = vlaneseq
          %v2215 = vshrl.u32 %v2214, 7
          %v2216 = vsub.s32 5, %v2215
          %v2217 = vrot.slane %v2192, %v2216
          %v2218 = vlaneseq
          %v2219 = vshrl.u32 %v2218, 7
          %v2220 = vsub.s32 6, %v2219
          %v2221 = vrot.slane %v2192, %v2220
          %v2222 = vlaneseq
          %v2223 = vshrl.u32 %v2222, 7
          %v2224 = vsub.s32 7, %v2223
          %v2225 = vrot.slane %v2192, %v2224
          %v2226 = vcombine.low %v2197, %v2201
          %v2227 = vcombine.low %v2205, %v2209
          %v2229 = vunpack.c.l.s4 1983009808
          %v2230 = vunpack.c.0.s8 %v2229
          %v2231 = vlaneseq
          %v2232 = vshrl.u32 %v2231, 7
          %v2233 = vsub.s32 %v2230, %v2232
          %v2234 = vrot.slane %v2226, %v2233
          %v2236 = vunpack.c.l.s4 1983009808
          %v2237 = vunpack.c.0.s8 %v2236
          %v2238 = vlaneseq
          %v2239 = vshrl.u32 %v2238, 7
          %v2240 = vsub.s32 %v2237, %v2239
          %v2241 = vrot.slane %v2227, %v2240
          %v2242 = vcombine.low %v2234, %v2241
          %v2243 = vcombine.low %v2213, %v2217
          %v2244 = vcombine.low %v2221, %v2225
          %v2246 = vunpack.c.l.s4 1983009808
          %v2247 = vunpack.c.0.s8 %v2246
          %v2248 = vlaneseq
          %v2249 = vshrl.u32 %v2248, 7
          %v2250 = vsub.s32 %v2247, %v2249
          %v2251 = vrot.slane %v2243, %v2250
          %v2253 = vunpack.c.l.s4 1983009808
          %v2254 = vunpack.c.0.s8 %v2253
          %v2255 = vlaneseq
          %v2256 = vshrl.u32 %v2255, 7
          %v2257 = vsub.s32 %v2254, %v2256
          %v2258 = vrot.slane %v2244, %v2257
          %v2259 = vcombine.low %v2251, %v2258
          %v2262 = vadd.f32 %v2190, %v2242
          %v2263 = vadd.f32 %v2191, %v2259
          %v2264 = vmax.f32 %v2262, 0.0
          %v2265 = vmax.f32 %v2263, 0.0
          %v2268 = vcombine.high %v2264, %v2264
          %v2270 = vunpack.c.l.s4 1983009808
          %v2271 = vunpack.c.0.s8 %v2270
          %v2272 = vlaneseq
          %v2273 = vshrl.u32 %v2272, 7
          %v2274 = vsub.s32 %v2271, %v2273
          %v2275 = vrot.slane %v2264, %v2274
          %v2277 = vunpack.c.l.s4 1983009808
          %v2278 = vunpack.c.0.s8 %v2277
          %v2279 = vlaneseq
          %v2280 = vshrl.u32 %v2279, 7
          %v2281 = vsub.s32 %v2278, %v2280
          %v2282 = vrot.slane %v2268, %v2281
          %v2283 = vcombine.high %v2275, %v2275
          %v2284 = vcombine.high %v2282, %v2282
          %v2285 = vcombine.high %v2265, %v2265
          %v2287 = vunpack.c.l.s4 1983009808
          %v2288 = vunpack.c.0.s8 %v2287
          %v2289 = vlaneseq
          %v2290 = vshrl.u32 %v2289, 7
          %v2291 = vsub.s32 %v2288, %v2290
          %v2292 = vrot.slane %v2265, %v2291
          %v2294 = vunpack.c.l.s4 1983009808
          %v2295 = vunpack.c.0.s8 %v2294
          %v2296 = vlaneseq
          %v2297 = vshrl.u32 %v2296, 7
          %v2298 = vsub.s32 %v2295, %v2297
          %v2299 = vrot.slane %v2285, %v2298
          %v2300 = vcombine.high %v2292, %v2292
          %v2301 = vcombine.high %v2299, %v2299
          %v2310 = vpack.c.bf16 %v2275, %v2275
          %v2311 = vpack.c.bf16 %v2283, %v2283
          %v2312 = vpack.c.bf16 %v2282, %v2282
          %v2313 = vpack.c.bf16 %v2284, %v2284
          %v2314 = vpack.c.bf16 %v2292, %v2292
          %v2315 = vpack.c.bf16 %v2300, %v2300
          %v2316 = vpack.c.bf16 %v2299, %v2299
          %v2317 = vpack.c.bf16 %v2301, %v2301
          %v2318 = vld [vmem:[%s3] sm:$0xf]
          %v2319 = vld [vmem:[%s3 + $0x4] sm:$0xf]
          %v2320 = vld [vmem:[%s3 + $0x8] sm:$0xf]
          %v2321 = vld [vmem:[%s3 + $0xc] sm:$0xf]
          %v2322 = vld [vmem:[%s3 + $0x10] sm:$0xf]
          %v2323 = vld [vmem:[%s3 + $0x14] sm:$0xf]
          %v2324 = vld [vmem:[%s3 + $0x18] sm:$0xf]
          %v2325 = vld [vmem:[%s3 + $0x1c] sm:$0xf]
          %v2326 = vld [vmem:[%s3 + $0x20] sm:$0xf]
          %v2327 = vld [vmem:[%s3 + $0x24] sm:$0xf]
          %v2328 = vld [vmem:[%s3 + $0x28] sm:$0xf]
          %v2329 = vld [vmem:[%s3 + $0x2c] sm:$0xf]
          %v2330 = vld [vmem:[%s3 + $0x30] sm:$0xf]
          %v2331 = vld [vmem:[%s3 + $0x34] sm:$0xf]
          %v2332 = vld [vmem:[%s3 + $0x38] sm:$0xf]
          %v2333 = vld [vmem:[%s3 + $0x3c] sm:$0xf]
          %v2334 = vld [vmem:[%s3 + $0x40] sm:$0xf]
          %v2335 = vld [vmem:[%s3 + $0x44] sm:$0xf]
          %v2336 = vld [vmem:[%s3 + $0x48] sm:$0xf]
          %v2337 = vld [vmem:[%s3 + $0x4c] sm:$0xf]
          %v2338 = vld [vmem:[%s3 + $0x50] sm:$0xf]
          %v2339 = vld [vmem:[%s3 + $0x54] sm:$0xf]
          %v2340 = vld [vmem:[%s3 + $0x58] sm:$0xf]
          %v2341 = vld [vmem:[%s3 + $0x5c] sm:$0xf]
          %v2342 = vld [vmem:[%s3 + $0x60] sm:$0xf]
          %v2343 = vld [vmem:[%s3 + $0x64] sm:$0xf]
          %v2344 = vld [vmem:[%s3 + $0x68] sm:$0xf]
          %v2345 = vld [vmem:[%s3 + $0x6c] sm:$0xf]
          %v2346 = vld [vmem:[%s3 + $0x70] sm:$0xf]
          %v2347 = vld [vmem:[%s3 + $0x74] sm:$0xf]
          %v2348 = vld [vmem:[%s3 + $0x78] sm:$0xf]
          %v2349 = vld [vmem:[%s3 + $0x7c] sm:$0xf]
          %v2350 = vld [vmem:[%s3 + $0x80] sm:$0xf]
          %v2351 = vld [vmem:[%s3 + $0x84] sm:$0xf]
          %v2352 = vld [vmem:[%s3 + $0x88] sm:$0xf]
          %v2353 = vld [vmem:[%s3 + $0x8c] sm:$0xf]
          %v2354 = vld [vmem:[%s3 + $0x90] sm:$0xf]
          %v2355 = vld [vmem:[%s3 + $0x94] sm:$0xf]
          %v2356 = vld [vmem:[%s3 + $0x98] sm:$0xf]
          %v2357 = vld [vmem:[%s3 + $0x9c] sm:$0xf]
          %v2358 = vld [vmem:[%s3 + $0xa0] sm:$0xf]
          %v2359 = vld [vmem:[%s3 + $0xa4] sm:$0xf]
          %v2360 = vld [vmem:[%s3 + $0xa8] sm:$0xf]
          %v2361 = vld [vmem:[%s3 + $0xac] sm:$0xf]
          %v2362 = vld [vmem:[%s3 + $0xb0] sm:$0xf]
          %v2363 = vld [vmem:[%s3 + $0xb4] sm:$0xf]
          %v2364 = vld [vmem:[%s3 + $0xb8] sm:$0xf]
          %v2365 = vld [vmem:[%s3 + $0xbc] sm:$0xf]
          %v2366 = vld [vmem:[%s3 + $0xc0] sm:$0xf]
          %v2367 = vld [vmem:[%s3 + $0xc4] sm:$0xf]
          %v2368 = vld [vmem:[%s3 + $0xc8] sm:$0xf]
          %v2369 = vld [vmem:[%s3 + $0xcc] sm:$0xf]
          %v2370 = vld [vmem:[%s3 + $0xd0] sm:$0xf]
          %v2371 = vld [vmem:[%s3 + $0xd4] sm:$0xf]
          %v2372 = vld [vmem:[%s3 + $0xd8] sm:$0xf]
          %v2373 = vld [vmem:[%s3 + $0xdc] sm:$0xf]
          %v2374 = vld [vmem:[%s3 + $0xe0] sm:$0xf]
          %v2375 = vld [vmem:[%s3 + $0xe4] sm:$0xf]
          %v2376 = vld [vmem:[%s3 + $0xe8] sm:$0xf]
          %v2377 = vld [vmem:[%s3 + $0xec] sm:$0xf]
          %v2378 = vld [vmem:[%s3 + $0xf0] sm:$0xf]
          %v2379 = vld [vmem:[%s3 + $0xf4] sm:$0xf]
          %v2380 = vld [vmem:[%s3 + $0xf8] sm:$0xf]
          %v2381 = vld [vmem:[%s3 + $0xfc] sm:$0xf]
          %v2382 = vld [vmem:[%s3 + $0x100] sm:$0xf]
          %v2383 = vld [vmem:[%s3 + $0x104] sm:$0xf]
          %v2384 = vld [vmem:[%s3 + $0x108] sm:$0xf]
          %v2385 = vld [vmem:[%s3 + $0x10c] sm:$0xf]
          %v2386 = vld [vmem:[%s3 + $0x110] sm:$0xf]
          %v2387 = vld [vmem:[%s3 + $0x114] sm:$0xf]
          %v2388 = vld [vmem:[%s3 + $0x118] sm:$0xf]
          %v2389 = vld [vmem:[%s3 + $0x11c] sm:$0xf]
          %v2390 = vld [vmem:[%s3 + $0x120] sm:$0xf]
          %v2391 = vld [vmem:[%s3 + $0x124] sm:$0xf]
          %v2392 = vld [vmem:[%s3 + $0x128] sm:$0xf]
          %v2393 = vld [vmem:[%s3 + $0x12c] sm:$0xf]
          %v2394 = vld [vmem:[%s3 + $0x130] sm:$0xf]
          %v2395 = vld [vmem:[%s3 + $0x134] sm:$0xf]
          %v2396 = vld [vmem:[%s3 + $0x138] sm:$0xf]
          %v2397 = vld [vmem:[%s3 + $0x13c] sm:$0xf]
          %v2398 = vld [vmem:[%s3 + $0x140] sm:$0xf]
          %v2399 = vld [vmem:[%s3 + $0x144] sm:$0xf]
          %v2400 = vld [vmem:[%s3 + $0x148] sm:$0xf]
          %v2401 = vld [vmem:[%s3 + $0x14c] sm:$0xf]
          %v2402 = vld [vmem:[%s3 + $0x150] sm:$0xf]
          %v2403 = vld [vmem:[%s3 + $0x154] sm:$0xf]
          %v2404 = vld [vmem:[%s3 + $0x158] sm:$0xf]
          %v2405 = vld [vmem:[%s3 + $0x15c] sm:$0xf]
          %v2406 = vld [vmem:[%s3 + $0x160] sm:$0xf]
          %v2407 = vld [vmem:[%s3 + $0x164] sm:$0xf]
          %v2408 = vld [vmem:[%s3 + $0x168] sm:$0xf]
          %v2409 = vld [vmem:[%s3 + $0x16c] sm:$0xf]
          %v2410 = vld [vmem:[%s3 + $0x170] sm:$0xf]
          %v2411 = vld [vmem:[%s3 + $0x174] sm:$0xf]
          %v2412 = vld [vmem:[%s3 + $0x178] sm:$0xf]
          %v2413 = vld [vmem:[%s3 + $0x17c] sm:$0xf]
          %v2414 = vld [vmem:[%s3 + $0x180] sm:$0xf]
          %v2415 = vld [vmem:[%s3 + $0x184] sm:$0xf]
          %v2416 = vld [vmem:[%s3 + $0x188] sm:$0xf]
          %v2417 = vld [vmem:[%s3 + $0x18c] sm:$0xf]
          %v2418 = vld [vmem:[%s3 + $0x190] sm:$0xf]
          %v2419 = vld [vmem:[%s3 + $0x194] sm:$0xf]
          %v2420 = vld [vmem:[%s3 + $0x198] sm:$0xf]
          %v2421 = vld [vmem:[%s3 + $0x19c] sm:$0xf]
          %v2422 = vld [vmem:[%s3 + $0x1a0] sm:$0xf]
          %v2423 = vld [vmem:[%s3 + $0x1a4] sm:$0xf]
          %v2424 = vld [vmem:[%s3 + $0x1a8] sm:$0xf]
          %v2425 = vld [vmem:[%s3 + $0x1ac] sm:$0xf]
          %v2426 = vld [vmem:[%s3 + $0x1b0] sm:$0xf]
          %v2427 = vld [vmem:[%s3 + $0x1b4] sm:$0xf]
          %v2428 = vld [vmem:[%s3 + $0x1b8] sm:$0xf]
          %v2429 = vld [vmem:[%s3 + $0x1bc] sm:$0xf]
          %v2430 = vld [vmem:[%s3 + $0x1c0] sm:$0xf]
          %v2431 = vld [vmem:[%s3 + $0x1c4] sm:$0xf]
          %v2432 = vld [vmem:[%s3 + $0x1c8] sm:$0xf]
          %v2433 = vld [vmem:[%s3 + $0x1cc] sm:$0xf]
          %v2434 = vld [vmem:[%s3 + $0x1d0] sm:$0xf]
          %v2435 = vld [vmem:[%s3 + $0x1d4] sm:$0xf]
          %v2436 = vld [vmem:[%s3 + $0x1d8] sm:$0xf]
          %v2437 = vld [vmem:[%s3 + $0x1dc] sm:$0xf]
          %v2438 = vld [vmem:[%s3 + $0x1e0] sm:$0xf]
          %v2439 = vld [vmem:[%s3 + $0x1e4] sm:$0xf]
          %v2440 = vld [vmem:[%s3 + $0x1e8] sm:$0xf]
          %v2441 = vld [vmem:[%s3 + $0x1ec] sm:$0xf]
          %v2442 = vld [vmem:[%s3 + $0x1f0] sm:$0xf]
          %v2443 = vld [vmem:[%s3 + $0x1f4] sm:$0xf]
          %v2444 = vld [vmem:[%s3 + $0x1f8] sm:$0xf]
          %v2445 = vld [vmem:[%s3 + $0x1fc] sm:$0xf]
          %v2446 = vld [vmem:[%s4] sm:$0x1]
          %v2448 = vlaneseq
          %v2449 = vshrl.u32 %v2448, 7
          %v2450 = vsub.s32 0, %v2449
          %v2451 = vrot.slane %v2446, %v2450
          %v2581 = vunpack.c.l.b16 %v2318
          %v2582 = vunpack.c.l.b16 %v2319
          %v2583 = vunpack.c.l.b16 %v2320
          %v2584 = vunpack.c.l.b16 %v2321
          %v2585 = vunpack.c.l.b16 %v2322
          %v2586 = vunpack.c.l.b16 %v2323
          %v2587 = vunpack.c.l.b16 %v2324
          %v2588 = vunpack.c.l.b16 %v2325
          %v2589 = vunpack.c.l.b16 %v2326
          %v2590 = vunpack.c.l.b16 %v2327
          %v2591 = vunpack.c.l.b16 %v2328
          %v2592 = vunpack.c.l.b16 %v2329
          %v2593 = vunpack.c.l.b16 %v2330
          %v2594 = vunpack.c.l.b16 %v2331
          %v2595 = vunpack.c.l.b16 %v2332
          %v2596 = vunpack.c.l.b16 %v2333
          %v2597 = vunpack.c.l.b16 %v2334
          %v2598 = vunpack.c.l.b16 %v2335
          %v2599 = vunpack.c.l.b16 %v2336
          %v2600 = vunpack.c.l.b16 %v2337
          %v2601 = vunpack.c.l.b16 %v2338
          %v2602 = vunpack.c.l.b16 %v2339
          %v2603 = vunpack.c.l.b16 %v2340
          %v2604 = vunpack.c.l.b16 %v2341
          %v2605 = vunpack.c.l.b16 %v2342
          %v2606 = vunpack.c.l.b16 %v2343
          %v2607 = vunpack.c.l.b16 %v2344
          %v2608 = vunpack.c.l.b16 %v2345
          %v2609 = vunpack.c.l.b16 %v2346
          %v2610 = vunpack.c.l.b16 %v2347
          %v2611 = vunpack.c.l.b16 %v2348
          %v2612 = vunpack.c.l.b16 %v2349
          %v2613 = vunpack.c.l.b16 %v2350
          %v2614 = vunpack.c.l.b16 %v2351
          %v2615 = vunpack.c.l.b16 %v2352
          %v2616 = vunpack.c.l.b16 %v2353
          %v2617 = vunpack.c.l.b16 %v2354
          %v2618 = vunpack.c.l.b16 %v2355
          %v2619 = vunpack.c.l.b16 %v2356
          %v2620 = vunpack.c.l.b16 %v2357
          %v2621 = vunpack.c.l.b16 %v2358
          %v2622 = vunpack.c.l.b16 %v2359
          %v2623 = vunpack.c.l.b16 %v2360
          %v2624 = vunpack.c.l.b16 %v2361
          %v2625 = vunpack.c.l.b16 %v2362
          %v2626 = vunpack.c.l.b16 %v2363
          %v2627 = vunpack.c.l.b16 %v2364
          %v2628 = vunpack.c.l.b16 %v2365
          %v2629 = vunpack.c.l.b16 %v2366
          %v2630 = vunpack.c.l.b16 %v2367
          %v2631 = vunpack.c.l.b16 %v2368
          %v2632 = vunpack.c.l.b16 %v2369
          %v2633 = vunpack.c.l.b16 %v2370
          %v2634 = vunpack.c.l.b16 %v2371
          %v2635 = vunpack.c.l.b16 %v2372
          %v2636 = vunpack.c.l.b16 %v2373
          %v2637 = vunpack.c.l.b16 %v2374
          %v2638 = vunpack.c.l.b16 %v2375
          %v2639 = vunpack.c.l.b16 %v2376
          %v2640 = vunpack.c.l.b16 %v2377
          %v2641 = vunpack.c.l.b16 %v2378
          %v2642 = vunpack.c.l.b16 %v2379
          %v2643 = vunpack.c.l.b16 %v2380
          %v2644 = vunpack.c.l.b16 %v2381
          %v2645 = vunpack.c.l.b16 %v2382
          %v2646 = vunpack.c.l.b16 %v2383
          %v2647 = vunpack.c.l.b16 %v2384
          %v2648 = vunpack.c.l.b16 %v2385
          %v2649 = vunpack.c.l.b16 %v2386
          %v2650 = vunpack.c.l.b16 %v2387
          %v2651 = vunpack.c.l.b16 %v2388
          %v2652 = vunpack.c.l.b16 %v2389
          %v2653 = vunpack.c.l.b16 %v2390
          %v2654 = vunpack.c.l.b16 %v2391
          %v2655 = vunpack.c.l.b16 %v2392
          %v2656 = vunpack.c.l.b16 %v2393
          %v2657 = vunpack.c.l.b16 %v2394
          %v2658 = vunpack.c.l.b16 %v2395
          %v2659 = vunpack.c.l.b16 %v2396
          %v2660 = vunpack.c.l.b16 %v2397
          %v2661 = vunpack.c.l.b16 %v2398
          %v2662 = vunpack.c.l.b16 %v2399
          %v2663 = vunpack.c.l.b16 %v2400
          %v2664 = vunpack.c.l.b16 %v2401
          %v2665 = vunpack.c.l.b16 %v2402
          %v2666 = vunpack.c.l.b16 %v2403
          %v2667 = vunpack.c.l.b16 %v2404
          %v2668 = vunpack.c.l.b16 %v2405
          %v2669 = vunpack.c.l.b16 %v2406
          %v2670 = vunpack.c.l.b16 %v2407
          %v2671 = vunpack.c.l.b16 %v2408
          %v2672 = vunpack.c.l.b16 %v2409
          %v2673 = vunpack.c.l.b16 %v2410
          %v2674 = vunpack.c.l.b16 %v2411
          %v2675 = vunpack.c.l.b16 %v2412
          %v2676 = vunpack.c.l.b16 %v2413
          %v2677 = vunpack.c.l.b16 %v2414
          %v2678 = vunpack.c.l.b16 %v2415
          %v2679 = vunpack.c.l.b16 %v2416
          %v2680 = vunpack.c.l.b16 %v2417
          %v2681 = vunpack.c.l.b16 %v2418
          %v2682 = vunpack.c.l.b16 %v2419
          %v2683 = vunpack.c.l.b16 %v2420
          %v2684 = vunpack.c.l.b16 %v2421
          %v2685 = vunpack.c.l.b16 %v2422
          %v2686 = vunpack.c.l.b16 %v2423
          %v2687 = vunpack.c.l.b16 %v2424
          %v2688 = vunpack.c.l.b16 %v2425
          %v2689 = vunpack.c.l.b16 %v2426
          %v2690 = vunpack.c.l.b16 %v2427
          %v2691 = vunpack.c.l.b16 %v2428
          %v2692 = vunpack.c.l.b16 %v2429
          %v2693 = vunpack.c.l.b16 %v2430
          %v2694 = vunpack.c.l.b16 %v2431
          %v2695 = vunpack.c.l.b16 %v2432
          %v2696 = vunpack.c.l.b16 %v2433
          %v2697 = vunpack.c.l.b16 %v2434
          %v2698 = vunpack.c.l.b16 %v2435
          %v2699 = vunpack.c.l.b16 %v2436
          %v2700 = vunpack.c.l.b16 %v2437
          %v2701 = vunpack.c.l.b16 %v2438
          %v2702 = vunpack.c.l.b16 %v2439
          %v2703 = vunpack.c.l.b16 %v2440
          %v2704 = vunpack.c.l.b16 %v2441
          %v2705 = vunpack.c.l.b16 %v2442
          %v2706 = vunpack.c.l.b16 %v2443
          %v2707 = vunpack.c.l.b16 %v2444
          %v2708 = vunpack.c.l.b16 %v2445
          %v2709 = vpack.c.b16 %v2582, %v2581
          %v2710 = vpack.c.b16 %v2584, %v2583
          %v2711 = vpack.c.b16 %v2586, %v2585
          %v2712 = vpack.c.b16 %v2588, %v2587
          %v2713 = vpack.c.b16 %v2590, %v2589
          %v2714 = vpack.c.b16 %v2592, %v2591
          %v2715 = vpack.c.b16 %v2594, %v2593
          %v2716 = vpack.c.b16 %v2596, %v2595
          %v2717 = vpack.c.b16 %v2598, %v2597
          %v2718 = vpack.c.b16 %v2600, %v2599
          %v2719 = vpack.c.b16 %v2602, %v2601
          %v2720 = vpack.c.b16 %v2604, %v2603
          %v2721 = vpack.c.b16 %v2606, %v2605
          %v2722 = vpack.c.b16 %v2608, %v2607
          %v2723 = vpack.c.b16 %v2610, %v2609
          %v2724 = vpack.c.b16 %v2612, %v2611
          %v2725 = vpack.c.b16 %v2614, %v2613
          %v2726 = vpack.c.b16 %v2616, %v2615
          %v2727 = vpack.c.b16 %v2618, %v2617
          %v2728 = vpack.c.b16 %v2620, %v2619
          %v2729 = vpack.c.b16 %v2622, %v2621
          %v2730 = vpack.c.b16 %v2624, %v2623
          %v2731 = vpack.c.b16 %v2626, %v2625
          %v2732 = vpack.c.b16 %v2628, %v2627
          %v2733 = vpack.c.b16 %v2630, %v2629
          %v2734 = vpack.c.b16 %v2632, %v2631
          %v2735 = vpack.c.b16 %v2634, %v2633
          %v2736 = vpack.c.b16 %v2636, %v2635
          %v2737 = vpack.c.b16 %v2638, %v2637
          %v2738 = vpack.c.b16 %v2640, %v2639
          %v2739 = vpack.c.b16 %v2642, %v2641
          %v2740 = vpack.c.b16 %v2644, %v2643
          %v2741 = vpack.c.b16 %v2646, %v2645
          %v2742 = vpack.c.b16 %v2648, %v2647
          %v2743 = vpack.c.b16 %v2650, %v2649
          %v2744 = vpack.c.b16 %v2652, %v2651
          %v2745 = vpack.c.b16 %v2654, %v2653
          %v2746 = vpack.c.b16 %v2656, %v2655
          %v2747 = vpack.c.b16 %v2658, %v2657
          %v2748 = vpack.c.b16 %v2660, %v2659
          %v2749 = vpack.c.b16 %v2662, %v2661
          %v2750 = vpack.c.b16 %v2664, %v2663
          %v2751 = vpack.c.b16 %v2666, %v2665
          %v2752 = vpack.c.b16 %v2668, %v2667
          %v2753 = vpack.c.b16 %v2670, %v2669
          %v2754 = vpack.c.b16 %v2672, %v2671
          %v2755 = vpack.c.b16 %v2674, %v2673
          %v2756 = vpack.c.b16 %v2676, %v2675
          %v2757 = vpack.c.b16 %v2678, %v2677
          %v2758 = vpack.c.b16 %v2680, %v2679
          %v2759 = vpack.c.b16 %v2682, %v2681
          %v2760 = vpack.c.b16 %v2684, %v2683
          %v2761 = vpack.c.b16 %v2686, %v2685
          %v2762 = vpack.c.b16 %v2688, %v2687
          %v2763 = vpack.c.b16 %v2690, %v2689
          %v2764 = vpack.c.b16 %v2692, %v2691
          %v2765 = vpack.c.b16 %v2694, %v2693
          %v2766 = vpack.c.b16 %v2696, %v2695
          %v2767 = vpack.c.b16 %v2698, %v2697
          %v2768 = vpack.c.b16 %v2700, %v2699
          %v2769 = vpack.c.b16 %v2702, %v2701
          %v2770 = vpack.c.b16 %v2704, %v2703
          %v2771 = vpack.c.b16 %v2706, %v2705
          %v2772 = vpack.c.b16 %v2708, %v2707
          %2837 = vmatprep.subr.bf16.mxu0 0
          %2838 = vmatpush1.bf16.msra.mxu0 %v2709
          %2839 = vmatprep.subr.bf16.mxu0 0
          %2840 = vmatpush1.bf16.msra.mxu0 %v2710
          %2841 = vmatprep.subr.bf16.mxu0 0
          %2842 = vmatpush1.bf16.msra.mxu0 %v2711
          %2843 = vmatprep.subr.bf16.mxu0 0
          %2844 = vmatpush1.bf16.msra.mxu0 %v2712
          %2845 = vmatprep.subr.bf16.mxu0 0
          %2846 = vmatpush1.bf16.msra.mxu0 %v2713
          %2847 = vmatprep.subr.bf16.mxu0 0
          %2848 = vmatpush1.bf16.msra.mxu0 %v2714
          %2849 = vmatprep.subr.bf16.mxu0 0
          %2850 = vmatpush1.bf16.msra.mxu0 %v2715
          %2851 = vmatprep.subr.bf16.mxu0 0
          %2852 = vmatpush1.bf16.msra.mxu0 %v2716
          %2853 = vmatprep.subr.bf16.mxu0 0
          %2854 = vmatpush1.bf16.msra.mxu0 %v2717
          %2855 = vmatprep.subr.bf16.mxu0 0
          %2856 = vmatpush1.bf16.msra.mxu0 %v2718
          %2857 = vmatprep.subr.bf16.mxu0 0
          %2858 = vmatpush1.bf16.msra.mxu0 %v2719
          %2859 = vmatprep.subr.bf16.mxu0 0
          %2860 = vmatpush1.bf16.msra.mxu0 %v2720
          %2861 = vmatprep.subr.bf16.mxu0 0
          %2862 = vmatpush1.bf16.msra.mxu0 %v2721
          %2863 = vmatprep.subr.bf16.mxu0 0
          %2864 = vmatpush1.bf16.msra.mxu0 %v2722
          %2865 = vmatprep.subr.bf16.mxu0 0
          %2866 = vmatpush1.bf16.msra.mxu0 %v2723
          %2867 = vmatprep.subr.bf16.mxu0 0
          %2868 = vmatpush1.bf16.msra.mxu0 %v2724
          %2869 = vmatprep.mubr.bf16.mxu0 %v2311
          %2870 = vmatmul.mubr.bf16.gmra.mrb[0].mxu0 %v2310
          %v2871 = vpop.f32.mrb[0].mxu0
          %v2872 = vadd.f32 %v2451, %v2871
          %v2873 = vpop.f32.mrb[0].mxu0
          %v2874 = vpop.f32.mrb[0].mxu0
          %v2875 = vpop.f32.mrb[0].mxu0
          %2876 = vdwg.mxu0
          %2877 = vmatprep.subr.bf16.mxu0 0
          %2878 = vmatpush1.bf16.msra.mxu0 %v2725
          %2879 = vmatprep.subr.bf16.mxu0 0
          %2880 = vmatpush1.bf16.msra.mxu0 %v2726
          %2881 = vmatprep.subr.bf16.mxu0 0
          %2882 = vmatpush1.bf16.msra.mxu0 %v2727
          %2883 = vmatprep.subr.bf16.mxu0 0
          %2884 = vmatpush1.bf16.msra.mxu0 %v2728
          %2885 = vmatprep.subr.bf16.mxu0 0
          %2886 = vmatpush1.bf16.msra.mxu0 %v2729
          %2887 = vmatprep.subr.bf16.mxu0 0
          %2888 = vmatpush1.bf16.msra.mxu0 %v2730
          %2889 = vmatprep.subr.bf16.mxu0 0
          %2890 = vmatpush1.bf16.msra.mxu0 %v2731
          %2891 = vmatprep.subr.bf16.mxu0 0
          %2892 = vmatpush1.bf16.msra.mxu0 %v2732
          %2893 = vmatprep.subr.bf16.mxu0 0
          %2894 = vmatpush1.bf16.msra.mxu0 %v2733
          %2895 = vmatprep.subr.bf16.mxu0 0
          %2896 = vmatpush1.bf16.msra.mxu0 %v2734
          %2897 = vmatprep.subr.bf16.mxu0 0
          %2898 = vmatpush1.bf16.msra.mxu0 %v2735
          %2899 = vmatprep.subr.bf16.mxu0 0
          %2900 = vmatpush1.bf16.msra.mxu0 %v2736
          %2901 = vmatprep.subr.bf16.mxu0 0
          %2902 = vmatpush1.bf16.msra.mxu0 %v2737
          %2903 = vmatprep.subr.bf16.mxu0 0
          %2904 = vmatpush1.bf16.msra.mxu0 %v2738
          %2905 = vmatprep.subr.bf16.mxu0 0
          %2906 = vmatpush1.bf16.msra.mxu0 %v2739
          %2907 = vmatprep.subr.bf16.mxu0 0
          %2908 = vmatpush1.bf16.msra.mxu0 %v2740
          %2909 = vmatprep.mubr.bf16.mxu0 %v2313
          %2910 = vmatmul.mubr.bf16.gmra.mrb[0].mxu0 %v2312
          %v2911 = vpop.f32.mrb[0].mxu0
          %v2912 = vadd.f32 %v2872, %v2911
          %v2913 = vpop.f32.mrb[0].mxu0
          %v2914 = vpop.f32.mrb[0].mxu0
          %v2915 = vpop.f32.mrb[0].mxu0
          %2916 = vdwg.mxu0
          %2917 = vmatprep.subr.bf16.mxu0 0
          %2918 = vmatpush1.bf16.msra.mxu0 %v2741
          %2919 = vmatprep.subr.bf16.mxu0 0
          %2920 = vmatpush1.bf16.msra.mxu0 %v2742
          %2921 = vmatprep.subr.bf16.mxu0 0
          %2922 = vmatpush1.bf16.msra.mxu0 %v2743
          %2923 = vmatprep.subr.bf16.mxu0 0
          %2924 = vmatpush1.bf16.msra.mxu0 %v2744
          %2925 = vmatprep.subr.bf16.mxu0 0
          %2926 = vmatpush1.bf16.msra.mxu0 %v2745
          %2927 = vmatprep.subr.bf16.mxu0 0
          %2928 = vmatpush1.bf16.msra.mxu0 %v2746
          %2929 = vmatprep.subr.bf16.mxu0 0
          %2930 = vmatpush1.bf16.msra.mxu0 %v2747
          %2931 = vmatprep.subr.bf16.mxu0 0
          %2932 = vmatpush1.bf16.msra.mxu0 %v2748
          %2933 = vmatprep.subr.bf16.mxu0 0
          %2934 = vmatpush1.bf16.msra.mxu0 %v2749
          %2935 = vmatprep.subr.bf16.mxu0 0
          %2936 = vmatpush1.bf16.msra.mxu0 %v2750
          %2937 = vmatprep.subr.bf16.mxu0 0
          %2938 = vmatpush1.bf16.msra.mxu0 %v2751
          %2939 = vmatprep.subr.bf16.mxu0 0
          %2940 = vmatpush1.bf16.msra.mxu0 %v2752
          %2941 = vmatprep.subr.bf16.mxu0 0
          %2942 = vmatpush1.bf16.msra.mxu0 %v2753
          %2943 = vmatprep.subr.bf16.mxu0 0
          %2944 = vmatpush1.bf16.msra.mxu0 %v2754
          %2945 = vmatprep.subr.bf16.mxu0 0
          %2946 = vmatpush1.bf16.msra.mxu0 %v2755
          %2947 = vmatprep.subr.bf16.mxu0 0
          %2948 = vmatpush1.bf16.msra.mxu0 %v2756
          %2949 = vmatprep.mubr.bf16.mxu0 %v2315
          %2950 = vmatmul.mubr.bf16.gmra.mrb[0].mxu0 %v2314
          %v2951 = vpop.f32.mrb[0].mxu0
          %v2952 = vadd.f32 %v2912, %v2951
          %v2953 = vpop.f32.mrb[0].mxu0
          %v2954 = vpop.f32.mrb[0].mxu0
          %v2955 = vpop.f32.mrb[0].mxu0
          %2956 = vdwg.mxu0
          %2957 = vmatprep.subr.bf16.mxu0 0
          %2958 = vmatpush1.bf16.msra.mxu0 %v2757
          %2959 = vmatprep.subr.bf16.mxu0 0
          %2960 = vmatpush1.bf16.msra.mxu0 %v2758
          %2961 = vmatprep.subr.bf16.mxu0 0
          %2962 = vmatpush1.bf16.msra.mxu0 %v2759
          %2963 = vmatprep.subr.bf16.mxu0 0
          %2964 = vmatpush1.bf16.msra.mxu0 %v2760
          %2965 = vmatprep.subr.bf16.mxu0 0
          %2966 = vmatpush1.bf16.msra.mxu0 %v2761
          %2967 = vmatprep.subr.bf16.mxu0 0
          %2968 = vmatpush1.bf16.msra.mxu0 %v2762
          %2969 = vmatprep.subr.bf16.mxu0 0
          %2970 = vmatpush1.bf16.msra.mxu0 %v2763
          %2971 = vmatprep.subr.bf16.mxu0 0
          %2972 = vmatpush1.bf16.msra.mxu0 %v2764
          %2973 = vmatprep.subr.bf16.mxu0 0
          %2974 = vmatpush1.bf16.msra.mxu0 %v2765
          %2975 = vmatprep.subr.bf16.mxu0 0
          %2976 = vmatpush1.bf16.msra.mxu0 %v2766
          %2977 = vmatprep.subr.bf16.mxu0 0
          %2978 = vmatpush1.bf16.msra.mxu0 %v2767
          %2979 = vmatprep.subr.bf16.mxu0 0
          %2980 = vmatpush1.bf16.msra.mxu0 %v2768
          %2981 = vmatprep.subr.bf16.mxu0 0
          %2982 = vmatpush1.bf16.msra.mxu0 %v2769
          %2983 = vmatprep.subr.bf16.mxu0 0
          %2984 = vmatpush1.bf16.msra.mxu0 %v2770
          %2985 = vmatprep.subr.bf16.mxu0 0
          %2986 = vmatpush1.bf16.msra.mxu0 %v2771
          %2987 = vmatprep.subr.bf16.mxu0 0
          %2988 = vmatpush1.bf16.msra.mxu0 %v2772
          %2989 = vmatprep.mubr.bf16.mxu0 %v2317
          %2990 = vmatmul.mubr.bf16.gmra.mrb[0].mxu0 %v2316
          %v2991 = vpop.f32.mrb[0].mxu0
          %v2992 = vadd.f32 %v2952, %v2991
          %v2993 = vpop.f32.mrb[0].mxu0
          %v2994 = vpop.f32.mrb[0].mxu0
          %v2995 = vpop.f32.mrb[0].mxu0
          %2996 = vdwg.mxu0
          %2998 = vrot.lane.b32.xlu0 %v2992, 127
          %v2999 = vpop.permute.xlu0 %2998
          %vm3001 = vcmask 41984
          %v3002 = vsel %vm3001, %v2999, 0.0
          %3003 = vadd.xlane.f32.xlu0 %v3002
          %v3004 = vpop.xlane.xlu0 %3003
          %v3005 = vrot.slane %v3004, 4
          %v3006 = vadd.f32 %v3004, %v3005
          %v3007 = vrot.slane %v3006, 2
          %v3008 = vadd.f32 %v3006, %v3007
          %v3009 = vrot.slane %v3008, 1
          %v3010 = vadd.f32 %v3008, %v3009
          %s3011 = vtos %v3010
          %v3012 = vrcp.pop 12.0
          %s3013 = vtos %v3012
          %s3014 = smul.f32 %s3011, %s3013
          %v3015 = vstv %s3014
          %v3016 = vsub.f32 %v2992, %v3015
          %3017 = vset.pattern.permute.xlu0 0
          %3018 = vperm.xlu0 %3017, %v2992
          %v3019 = vpop.permute.xlu0 %3018
          %v3021 = vadd.f32 %v3019, %v3016
          %3023 = vrot.lane.b32.xlu0 %v3021, 127
          %v3024 = vpop.permute.xlu0 %3023
          %3026 = vst.msk [vmem:[#allocation3] sm:$0x3] %vm3001, %v3024
        $region48: #{model_forward.7} parent=39 // pred_fallthru
          _
        // Predicated region
        $region49: #{model_forward.7} parent=39 // pred_check
          %p3027 = pneg %p145
        $region50: #{model_forward.7} parent=39 // pred_check_branch
          %3029 = sbr.rel (%p3027) target = $region52
        $region51: #{model_forward.7} parent=39 // pred_region
          %s3031 = ssub.s32 32, 32
          %3032 = vsyncadd [#allocation4], %s3031
          %s3034 = sshll.u32 [#allocation3], 4
          %s3035 = int_to_ptr.vmem [resolvable:$true] %s3034
          %3037 = dma.vmem_to_hbm [thread:$0]  %s3035, 32, %s5, [#allocation4]
        $region52: #{model_forward.7} parent=39 // pred_fallthru
          _
        // Predicated region
        $region53: #{model_forward.7} parent=39 // pred_check
          %p3038 = pneg %p145
        $region54: #{model_forward.7} parent=39 // pred_check_branch
          %3040 = sbr.rel (%p3038) target = $region56
        $region55: #{model_forward.7} parent=39 // pred_region
          %3041 = dma.done [#allocation4], 32
        $region56: #{model_forward.7} parent=39 // pred_fallthru
          _
      $region40: #{model_forward.7} parent=5 // pred_fallthru
        _
      %p3042 = scmp.le.s32.totalorder 2, %s12
      // Predicated region
      $region57: #{model_forward.7} parent=5 // pred_check
        %p3043 = pneg %p3042
      $region58: #{model_forward.7} parent=5 // pred_check_branch
        %3045 = sbr.rel (%p3043) target = $region60
      $region59: #{model_forward.7} parent=5 // pred_region
        %s3046 = ssub.s32 %s12, 2
      $region60: #{model_forward.7} parent=5 // pred_fallthru
        _
    $region6: #{model_forward.7} parent=1 // loop_footer
      %s16 = sadd.s32 1, %s12
    $region7: #{model_forward.7} parent=1 // loop_footer_branch
      %11 = sbr.rel target = $region3
    $region8: #{model_forward.7} parent=1 // loop_exit
      _
    %3047 = vsyncpa [#allocation4], 1
    %s3048 = scalar_lea.sflag [#allocation4], 1
    %3049 = vsyncpa %s3048, 1

</llo_original>
